<compile_context>
chip_gen: v7x
topology: tpu7x:2x2x1
jax: 0.10.0
libtpu: 0.0.40
codegen_flags: <defaults>
</compile_context>

<pallas_src>
import functools
import math

import jax
import jax.numpy as jnp
from jax import lax
from jax.experimental import pallas as pl

CPAD = 128              # lane-dense channel padding (score lives in col CPAD-1)
NPAD = 128              # lane-dense node padding
IMPROVED_FILL = 2.0     # GCNConv(improved=True) self-loop weight


# ----------------------------------------------------------------------------
# in-kernel helpers (operate on values, not refs)
# ----------------------------------------------------------------------------

def _gcn(a_f32, a_bf, x, w_bf, b):
    """GCNConv(improved=True) without materializing A_hat / A_norm.

    out = D^{-1/2} (A + 2I) D^{-1/2} (X W) + b
        = dinv * (A @ (dinv * XW)) + 2 * dinv * (dinv * XW) + b
    with deg = rowsum(A) + 2 (>= 2 -> rsqrt finite, also for zero padded rows).
    bf16 MXU operands, f32 accumulation.
    """
    deg = jnp.sum(a_f32, axis=1, keepdims=True) + IMPROVED_FILL
    dinv = lax.rsqrt(deg)
    xw = jnp.dot(x.astype(jnp.bfloat16), w_bf, preferred_element_type=jnp.float32)
    y = dinv * xw
    ay = jnp.dot(a_bf, y.astype(jnp.bfloat16), preferred_element_type=jnp.float32)
    return dinv * ay + IMPROVED_FILL * (dinv * y) + b


def _augment(a_f32, a_bf):
    """augment_adj: A@A + 2A with zero diagonal == (A+I)^2, self loops removed.

    bf16 inputs / f32 accumulation.
    # TODO(synk): exact only while augmented edge weights stay <= 256 (true at
    # this depth/size); deeper/denser graphs need an f32 (or bf16x3) fallback.
    """
    n = a_f32.shape[0]
    aug = (jnp.dot(a_bf, a_bf, preferred_element_type=jnp.float32)
           + 2.0 * a_f32)
    row = lax.broadcasted_iota(jnp.int32, (n, n), 0)
    col = lax.broadcasted_iota(jnp.int32, (n, n), 1)
    return jnp.where(row == col, 0.0, aug)


def _pack_score(out, p):
    """tanh(out . p) packed into the last (zero) lane of the feature slab."""
    s = jnp.tanh(jnp.sum(out * p, axis=1, keepdims=True))      # (n, 1)
    col = lax.broadcasted_iota(jnp.int32, out.shape, 1)
    return jnp.where(col == out.shape[1] - 1, s, out)


def _perm_matrix(perm_col, n):
    """P[i, j] = 1 if perm[i] == j else 0 (row-gather matrix), bf16-exact."""
    cols = lax.broadcasted_iota(jnp.int32, (n, n), 1)
    return (perm_col == cols).astype(jnp.float32).astype(jnp.bfloat16)


def _pool_gather(a_aug, x, perm_col):
    """TopKPooling gather fused as permutation matmuls (all MXU work).

    x_p = P @ (x * score)      (score = packed last column of x)
    a_p = P @ a_aug @ P^T
    """
    n = a_aug.shape[0]
    p_mat = _perm_matrix(perm_col, n)
    s = x[:, -1:]                                   # packed tanh score
    x_s = (x * s).astype(jnp.bfloat16)
    x_p = jnp.dot(p_mat, x_s, preferred_element_type=jnp.float32)
    t = jnp.dot(p_mat, a_aug.astype(jnp.bfloat16),
                preferred_element_type=jnp.float32)
    a_p = lax.dot_general(t.astype(jnp.bfloat16), p_mat,
                          (((1,), (1,)), ((), ())),           # t @ P^T
                          preferred_element_type=jnp.float32)
    return x_p, a_p


# ----------------------------------------------------------------------------
# Pallas kernels
# ----------------------------------------------------------------------------

def _enc_first_kernel(a_ref, x_ref, w_ref, b_ref, p_ref, x_out_ref, aug_ref):
    """Level 0: conv+relu, pool-0 score packed into the last lane, augment(A)."""
    a = a_ref[...]
    a_bf = a.astype(jnp.bfloat16)
    out = jnp.maximum(_gcn(a, a_bf, x_ref[...], w_ref[...], b_ref[...]), 0.0)
    x_out_ref[...] = _pack_score(out, p_ref[...])
    aug_ref[...] = _augment(a, a_bf)


def _enc_pool_conv_kernel(a_aug_ref, x_ref, perm_ref, w_ref, b_ref, p_ref,
                          x_out_ref, a_p_ref, aug_ref):
    """Mid encoder level: pool gather + conv+relu + next score + augment."""
    x_p, a_p = _pool_gather(a_aug_ref[...], x_ref[...], perm_ref[...])
    a_p_ref[...] = a_p
    a_p_bf = a_p.astype(jnp.bfloat16)
    out = jnp.maximum(_gcn(a_p, a_p_bf, x_p, w_ref[...], b_ref[...]), 0.0)
    x_out_ref[...] = _pack_score(out, p_ref[...])
    aug_ref[...] = _augment(a_p, a_p_bf)


def _enc_pool_conv_last_kernel(a_aug_ref, x_ref, perm_ref, w_ref, b_ref,
                               x_out_ref):
    """Deepest encoder level: pool gather + conv+relu (no score / no augment)."""
    x_p, a_p = _pool_gather(a_aug_ref[...], x_ref[...], perm_ref[...])
    out = _gcn(a_p, a_p.astype(jnp.bfloat16), x_p, w_ref[...], b_ref[...])
    x_out_ref[...] = jnp.maximum(out, 0.0)


def _dec_unpool_conv_kernel(a_ref, res_ref, x_ref, perm_row_ref, w_ref, b_ref,
                            x_out_ref, *, apply_relu):
    """Decoder level: unpool scatter-add (P^T @ x) + sum_res skip + conv."""
    a = a_ref[...]
    n = a.shape[0]
    rows = lax.broadcasted_iota(jnp.int32, (n, n), 0)
    p_t = (rows == perm_row_ref[...]).astype(jnp.float32).astype(jnp.bfloat16)
    up = jnp.dot(p_t, x_ref[...].astype(jnp.bfloat16),
                 preferred_element_type=jnp.float32)
    x_in = res_ref[...] + up
    out = _gcn(a, a.astype(jnp.bfloat16), x_in, w_ref[...], b_ref[...])
    if apply_relu:
        out = jnp.maximum(out, 0.0)
    x_out_ref[...] = out


# ----------------------------------------------------------------------------
# pallas_call wrappers (single whole-array VMEM invocation; graphs are tiny)
# ----------------------------------------------------------------------------

def _nbytes(*xs):
    return int(sum(math.prod(x.shape) * jnp.dtype(x.dtype).itemsize for x in xs))


def enc_first(a, x, w, b, p):
    n, c = x.shape
    outs = (jax.ShapeDtypeStruct((n, c), jnp.float32),
            jax.ShapeDtypeStruct((n, n), jnp.float32))
    cost = pl.CostEstimate(flops=2 * (n * c * c + n * n * c + n ** 3),
                           transcendentals=2 * n,
                           bytes_accessed=_nbytes(a, x, w, b, p, *outs))
    return pl.pallas_call(_enc_first_kernel, out_shape=outs,
                          cost_estimate=cost)(a, x, w, b, p)


def enc_pool_conv(a_aug, x, perm_col, w, b, p):
    n, c = x.shape
    outs = (jax.ShapeDtypeStruct((n, c), jnp.float32),
            jax.ShapeDtypeStruct((n, n), jnp.float32),
            jax.ShapeDtypeStruct((n, n), jnp.float32))
    cost = pl.CostEstimate(flops=2 * (3 * n ** 3 + 3 * n * n * c + n * c * c),
                           transcendentals=2 * n,
                           bytes_accessed=_nbytes(a_aug, x, perm_col, w, b, p, *outs))
    return pl.pallas_call(_enc_pool_conv_kernel, out_shape=outs,
                          cost_estimate=cost)(a_aug, x, perm_col, w, b, p)


def enc_pool_conv_last(a_aug, x, perm_col, w, b):
    n, c = x.shape
    outs = jax.ShapeDtypeStruct((n, c), jnp.float32)
    cost = pl.CostEstimate(flops=2 * (2 * n ** 3 + 3 * n * n * c + n * c * c),
                           transcendentals=n,
                           bytes_accessed=_nbytes(a_aug, x, perm_col, w, b, outs))
    return pl.pallas_call(_enc_pool_conv_last_kernel, out_shape=outs,
                          cost_estimate=cost)(a_aug, x, perm_col, w, b)


def dec_unpool_conv(a, res, x, perm_row, w, b, *, apply_relu):
    n, c = x.shape
    outs = jax.ShapeDtypeStruct((n, c), jnp.float32)
    kernel = functools.partial(_dec_unpool_conv_kernel, apply_relu=apply_relu)
    cost = pl.CostEstimate(flops=2 * (2 * n * n * c + n * c * c),
                           transcendentals=n,
                           bytes_accessed=_nbytes(a, res, x, perm_row, w, b, outs))
    return pl.pallas_call(kernel, out_shape=outs,
                          cost_estimate=cost)(a, res, x, perm_row, w, b)


# ----------------------------------------------------------------------------
# Parameters (glorot weights in bf16, zero bias, normalized pool vectors),
# zero-padded to CPAD so every kernel tile is lane-dense.
# ----------------------------------------------------------------------------

def _pad_to(arr, shape):
    out = jnp.zeros(shape, jnp.float32)
    return out.at[tuple(slice(0, s) for s in arr.shape)].set(arr)


def init_params(key, in_channels, hidden, out_channels, depth, cpad=CPAD):
    def glorot(k, cin, cout):
        lim = math.sqrt(6.0 / (cin + cout))
        return jax.random.uniform(k, (cin, cout), jnp.float32, -lim, lim)

    n_keys = (depth + 1) + depth + depth
    keys = list(jax.random.split(key, n_keys))
    params = {"down_w": [], "down_b": [], "pool_p": [], "up_w": [], "up_b": []}

    # down convs: in->H, then depth x (H->H); bias = 0 per reset_parameters
    dims = [(in_channels, hidden)] + [(hidden, hidden)] * depth
    for (ci, co) in dims:
        w = _pad_to(glorot(keys.pop(), ci, co), (cpad, cpad)).astype(jnp.bfloat16)
        params["down_w"].append(w)
        params["down_b"].append(jnp.zeros((1, cpad), jnp.float32))

    # pools: weight (1, H) ~ U(-1/sqrt(H), 1/sqrt(H)); store p/||p|| once.
    bound = 1.0 / math.sqrt(hidden)
    for _ in range(depth):
        p = jax.random.uniform(keys.pop(), (1, hidden), jnp.float32, -bound, bound)
        p = p / jnp.sqrt(jnp.sum(p * p))
        params["pool_p"].append(_pad_to(p, (1, cpad)))

    # up convs (sum_res=True): (depth-1) x (H->H), last H->out
    dims = [(hidden, hidden)] * (depth - 1) + [(hidden, out_channels)]
    for (ci, co) in dims:
        w = _pad_to(glorot(keys.pop(), ci, co), (cpad, cpad)).astype(jnp.bfloat16)
        params["up_w"].append(w)
        params["up_b"].append(jnp.zeros((1, cpad), jnp.float32))

    return params


# ----------------------------------------------------------------------------
# GraphUNet forward (glue: per-level top-k selection only)
# ----------------------------------------------------------------------------

def graph_unet_forward(params, x_pad, a, *, depth, pool_ratio, out_channels,
                       num_nodes):
    npad = a.shape[0]

    # level 0: conv(+relu) fused with pool-0 score and augment of the original A
    x, a_aug = enc_first(a, x_pad, params["down_w"][0], params["down_b"][0],
                         params["pool_p"][0])
    xs, adjs, perms = [x], [a], []

    # encoder
    n_real = num_nodes
    for i in range(1, depth + 1):
        k = int(math.ceil(pool_ratio * n_real))
        # TODO(synk): top-k selection (sort) has no clean Pallas equivalent; it
        # stays in JAX glue.  Padded nodes are excluded by the static slice.
        _, perm_k = jax.lax.top_k(x[:n_real, -1], k)
        perm_flat = jnp.full((npad,), npad - 1, jnp.int32).at[:k].set(perm_k)
        perms.append(perm_flat)
        perm_col = perm_flat.reshape(npad, 1)
        if i < depth:
            x, a_p, a_aug = enc_pool_conv(a_aug, x, perm_col,
                                          params["down_w"][i],
                                          params["down_b"][i],
                                          params["pool_p"][i])
            xs.append(x)
            adjs.append(a_p)
        else:
            x = enc_pool_conv_last(a_aug, x, perm_col,
                                   params["down_w"][i], params["down_b"][i])
        n_real = k

    # decoder (unpool scatter-add + sum_res skip fused into the up conv)
    for i in range(depth):
        j = depth - 1 - i
        x = dec_unpool_conv(adjs[j], xs[j], x, perms[j].reshape(1, npad),
                            params["up_w"][i], params["up_b"][i],
                            apply_relu=(i < depth - 1))

    return x[:num_nodes, :out_channels]


# ----------------------------------------------------------------------------
# main
# ----------------------------------------------------------------------------

if __name__ == "__main__":
    N, C_IN, HIDDEN, C_OUT, DEPTH, RATIO = 32, 8, 16, 8, 2, 0.5

    key = jax.random.PRNGKey(0)
    k_x, k_a, k_p = jax.random.split(key, 3)

    # node features, zero-padded to the lane-dense (NPAD, CPAD) slab
    x0 = jax.random.normal(k_x, (N, C_IN), jnp.float32)
    x_pad = jnp.zeros((NPAD, CPAD), jnp.float32).at[:N, :C_IN].set(x0)

    # random undirected graph as dense adjacency, zero-padded to (NPAD, NPAD)
    upper = (jax.random.uniform(k_a, (N, N)) < 0.2).astype(jnp.float32)
    upper = jnp.triu(upper, k=1)
    a_real = upper + upper.T
    a0 = jnp.zeros((NPAD, NPAD), jnp.float32).at[:N, :N].set(a_real)

    params = init_params(k_p, C_IN, HIDDEN, C_OUT, DEPTH)

    fwd = jax.jit(functools.partial(graph_unet_forward, depth=DEPTH,
                                    pool_ratio=RATIO, out_channels=C_OUT,
                                    num_nodes=N))
    out = jax.block_until_ready(fwd(params, x_pad, a0))

    assert out.shape == (N, C_OUT), out.shape
    assert out.dtype == jnp.float32
    assert bool(jnp.all(jnp.isfinite(out)))
    print("KERNEL_OK")
</pallas_src>

<mosaic_0001>
module attributes {stable_mosaic.version = 11 : i64} {
  func.func @_enc_first_kernel(%arg0: memref<128x128xf32, #tpu.memory_space<vmem>>, %arg1: memref<128x128xf32, #tpu.memory_space<vmem>>, %arg2: memref<128x128xbf16, #tpu.memory_space<vmem>>, %arg3: memref<1x128xf32, #tpu.memory_space<vmem>>, %arg4: memref<1x128xf32, #tpu.memory_space<vmem>>, %arg5: memref<128x128xf32, #tpu.memory_space<vmem>>, %arg6: memref<128x128xf32, #tpu.memory_space<vmem>>) attributes {dimension_semantics = [], scalar_prefetch = 0 : i64, scratch_operands = 0 : i64, tpu.core_type = #tpu.core_type<tc>} {
    %c0 = arith.constant 0 : index
    %c0_0 = arith.constant 0 : index
    %0 = vector.load %arg0[%c0, %c0_0] : memref<128x128xf32, #tpu.memory_space<vmem>>, vector<128x128xf32>
    %1 = arith.truncf %0 : vector<128x128xf32> to vector<128x128xbf16>
    %c0_1 = arith.constant 0 : index
    %c0_2 = arith.constant 0 : index
    %2 = vector.load %arg1[%c0_1, %c0_2] : memref<128x128xf32, #tpu.memory_space<vmem>>, vector<128x128xf32>
    %c0_3 = arith.constant 0 : index
    %c0_4 = arith.constant 0 : index
    %3 = vector.load %arg2[%c0_3, %c0_4] : memref<128x128xbf16, #tpu.memory_space<vmem>>, vector<128x128xbf16>
    %c0_5 = arith.constant 0 : index
    %c0_6 = arith.constant 0 : index
    %4 = vector.load %arg3[%c0_5, %c0_6] : memref<1x128xf32, #tpu.memory_space<vmem>>, vector<1x128xf32>
    %cst = arith.constant dense<0.000000e+00> : vector<128xf32>
    %5 = vector.multi_reduction <add>, %0, %cst [1] : vector<128x128xf32> to vector<128xf32>
    %6 = vector.shape_cast %5 : vector<128xf32> to vector<128x1xf32>
    %cst_7 = arith.constant 2.000000e+00 : f32
    %7 = vector.broadcast %cst_7 : f32 to vector<128x1xf32>
    %8 = arith.addf %6, %7 : vector<128x1xf32>
    %9 = math.rsqrt %8 : vector<128x1xf32>
    %10 = arith.truncf %2 : vector<128x128xf32> to vector<128x128xbf16>
    %cst_8 = arith.constant dense<0.000000e+00> : vector<128x128xf32>
    %11 = tpu.matmul %10, %3, %cst_8 {dimension_numbers = #tpu.dot_dimension_numbers<[1], [0], [0], [1], [0, 0, 1, 1], [], []>} : vector<128x128xbf16>, vector<128x128xbf16>, vector<128x128xf32> -> vector<128x128xf32>
    %12 = vector.broadcast %9 : vector<128x1xf32> to vector<128x128xf32>
    %13 = arith.mulf %12, %11 : vector<128x128xf32>
    %14 = arith.truncf %13 : vector<128x128xf32> to vector<128x128xbf16>
    %cst_9 = arith.constant dense<0.000000e+00> : vector<128x128xf32>
    %15 = tpu.matmul %1, %14, %cst_9 {dimension_numbers = #tpu.dot_dimension_numbers<[1], [0], [0], [1], [0, 0, 1, 1], [], []>} : vector<128x128xbf16>, vector<128x128xbf16>, vector<128x128xf32> -> vector<128x128xf32>
    %16 = vector.broadcast %9 : vector<128x1xf32> to vector<128x128xf32>
    %17 = arith.mulf %16, %15 : vector<128x128xf32>
    %18 = vector.broadcast %9 : vector<128x1xf32> to vector<128x128xf32>
    %19 = arith.mulf %18, %13 : vector<128x128xf32>
    %cst_10 = arith.constant 2.000000e+00 : f32
    %20 = vector.broadcast %cst_10 : f32 to vector<128x128xf32>
    %21 = arith.mulf %20, %19 : vector<128x128xf32>
    %22 = arith.addf %17, %21 : vector<128x128xf32>
    %23 = vector.broadcast %4 : vector<1x128xf32> to vector<128x128xf32>
    %24 = arith.addf %22, %23 : vector<128x128xf32>
    %cst_11 = arith.constant 0.000000e+00 : f32
    %25 = vector.broadcast %cst_11 : f32 to vector<128x128xf32>
    %26 = arith.maximumf %24, %25 : vector<128x128xf32>
    %c0_12 = arith.constant 0 : index
    %c0_13 = arith.constant 0 : index
    %27 = vector.load %arg4[%c0_12, %c0_13] : memref<1x128xf32, #tpu.memory_space<vmem>>, vector<1x128xf32>
    %28 = vector.broadcast %27 : vector<1x128xf32> to vector<128x128xf32>
    %29 = arith.mulf %26, %28 : vector<128x128xf32>
    %cst_14 = arith.constant dense<0.000000e+00> : vector<128xf32>
    %30 = vector.multi_reduction <add>, %29, %cst_14 [1] : vector<128x128xf32> to vector<128xf32>
    %31 = vector.shape_cast %30 : vector<128xf32> to vector<128x1xf32>
    %32 = math.tanh %31 : vector<128x1xf32>
    %33 = tpu.iota {dimensions = array<i32: 1>} : vector<128x128xi32>
    %c127_i32 = arith.constant 127 : i32
    %34 = vector.broadcast %c127_i32 : i32 to vector<128x128xi32>
    %35 = arith.cmpi eq, %33, %34 : vector<128x128xi32>
    %36 = vector.shape_cast %32 : vector<128x1xf32> to vector<128x1xf32>
    %37 = vector.broadcast %36 : vector<128x1xf32> to vector<128x128xf32>
    %38 = arith.select %35, %37, %26 : vector<128x128xi1>, vector<128x128xf32>
    %c0_15 = arith.constant 0 : index
    %c0_16 = arith.constant 0 : index
    %39 = vector.load %arg5[%c0_15, %c0_16] : memref<128x128xf32, #tpu.memory_space<vmem>>, vector<128x128xf32>
    tpu.vector_store %arg5[%c0_15, %c0_16], %38 {strides = array<i32>} : memref<128x128xf32, #tpu.memory_space<vmem>>, vector<128x128xf32>,
    %cst_17 = arith.constant dense<0.000000e+00> : vector<128x128xf32>
    %40 = tpu.matmul %1, %1, %cst_17 {dimension_numbers = #tpu.dot_dimension_numbers<[1], [0], [0], [1], [0, 0, 1, 1], [], []>} : vector<128x128xbf16>, vector<128x128xbf16>, vector<128x128xf32> -> vector<128x128xf32>
    %cst_18 = arith.constant 2.000000e+00 : f32
    %41 = vector.broadcast %cst_18 : f32 to vector<128x128xf32>
    %42 = arith.mulf %41, %0 : vector<128x128xf32>
    %43 = arith.addf %40, %42 : vector<128x128xf32>
    %44 = tpu.iota {dimensions = array<i32: 0>} : vector<128x128xi32>
    %45 = tpu.iota {dimensions = array<i32: 1>} : vector<128x128xi32>
    %46 = arith.cmpi eq, %44, %45 : vector<128x128xi32>
    %cst_19 = arith.constant 0.000000e+00 : f32
    %47 = vector.broadcast %cst_19 : f32 to vector<128x128xf32>
    %48 = arith.select %46, %47, %43 : vector<128x128xi1>, vector<128x128xf32>
    %c0_20 = arith.constant 0 : index
    %c0_21 = arith.constant 0 : index
    %49 = vector.load %arg6[%c0_20, %c0_21] : memref<128x128xf32, #tpu.memory_space<vmem>>, vector<128x128xf32>
    tpu.vector_store %arg6[%c0_20, %c0_21], %48 {strides = array<i32>} : memref<128x128xf32, #tpu.memory_space<vmem>>, vector<128x128xf32>,
    return
  }
}

module attributes {stable_mosaic.version = 11 : i64} {
  func.func @_enc_pool_conv_kernel(%arg0: memref<128x128xf32, #tpu.memory_space<vmem>>, %arg1: memref<128x128xf32, #tpu.memory_space<vmem>>, %arg2: memref<128x1xi32, #tpu.memory_space<vmem>>, %arg3: memref<128x128xbf16, #tpu.memory_space<vmem>>, %arg4: memref<1x128xf32, #tpu.memory_space<vmem>>, %arg5: memref<1x128xf32, #tpu.memory_space<vmem>>, %arg6: memref<128x128xf32, #tpu.memory_space<vmem>>, %arg7: memref<128x128xf32, #tpu.memory_space<vmem>>, %arg8: memref<128x128xf32, #tpu.memory_space<vmem>>) attributes {dimension_semantics = [], scalar_prefetch = 0 : i64, scratch_operands = 0 : i64, tpu.core_type = #tpu.core_type<tc>} {
    %c0 = arith.constant 0 : index
    %c0_0 = arith.constant 0 : index
    %0 = vector.load %arg0[%c0, %c0_0] : memref<128x128xf32, #tpu.memory_space<vmem>>, vector<128x128xf32>
    %c0_1 = arith.constant 0 : index
    %c0_2 = arith.constant 0 : index
    %1 = vector.load %arg1[%c0_1, %c0_2] : memref<128x128xf32, #tpu.memory_space<vmem>>, vector<128x128xf32>
    %c0_3 = arith.constant 0 : index
    %c0_4 = arith.constant 0 : index
    %2 = vector.load %arg2[%c0_3, %c0_4] : memref<128x1xi32, #tpu.memory_space<vmem>>, vector<128x1xi32>
    %3 = tpu.iota {dimensions = array<i32: 1>} : vector<128x128xi32>
    %4 = vector.broadcast %2 : vector<128x1xi32> to vector<128x128xi32>
    %5 = arith.cmpi eq, %4, %3 : vector<128x128xi32>
    %6 = arith.extui %5 : vector<128x128xi1> to vector<128x128xi32>
    %7 = arith.sitofp %6 : vector<128x128xi32> to vector<128x128xf32>
    %8 = arith.truncf %7 : vector<128x128xf32> to vector<128x128xbf16>
    %9 = vector.extract_strided_slice %1 {offsets = [0, 127], sizes = [128, 1], strides = [1, 1]} : vector<128x128xf32> to vector<128x1xf32>
    %10 = vector.broadcast %9 : vector<128x1xf32> to vector<128x128xf32>
    %11 = arith.mulf %1, %10 : vector<128x128xf32>
    %12 = arith.truncf %11 : vector<128x128xf32> to vector<128x128xbf16>
    %cst = arith.constant dense<0.000000e+00> : vector<128x128xf32>
    %13 = tpu.matmul %8, %12, %cst {dimension_numbers = #tpu.dot_dimension_numbers<[1], [0], [0], [1], [0, 0, 1, 1], [], []>} : vector<128x128xbf16>, vector<128x128xbf16>, vector<128x128xf32> -> vector<128x128xf32>
    %14 = arith.truncf %0 : vector<128x128xf32> to vector<128x128xbf16>
    %cst_5 = arith.constant dense<0.000000e+00> : vector<128x128xf32>
    %15 = tpu.matmul %8, %14, %cst_5 {dimension_numbers = #tpu.dot_dimension_numbers<[1], [0], [0], [1], [0, 0, 1, 1], [], []>} : vector<128x128xbf16>, vector<128x128xbf16>, vector<128x128xf32> -> vector<128x128xf32>
    %16 = arith.truncf %15 : vector<128x128xf32> to vector<128x128xbf16>
    %cst_6 = arith.constant dense<0.000000e+00> : vector<128x128xf32>
    %17 = tpu.matmul %16, %8, %cst_6 {dimension_numbers = #tpu.dot_dimension_numbers<[1], [1], [0], [0], [0, 0, 1, 0], [], []>} : vector<128x128xbf16>, vector<128x128xbf16>, vector<128x128xf32> -> vector<128x128xf32>
    %c0_7 = arith.constant 0 : index
    %c0_8 = arith.constant 0 : index
    %18 = vector.load %arg7[%c0_7, %c0_8] : memref<128x128xf32, #tpu.memory_space<vmem>>, vector<128x128xf32>
    tpu.vector_store %arg7[%c0_7, %c0_8], %17 {strides = array<i32>} : memref<128x128xf32, #tpu.memory_space<vmem>>, vector<128x128xf32>,
    %19 = arith.truncf %17 : vector<128x128xf32> to vector<128x128xbf16>
    %c0_9 = arith.constant 0 : index
    %c0_10 = arith.constant 0 : index
    %20 = vector.load %arg3[%c0_9, %c0_10] : memref<128x128xbf16, #tpu.memory_space<vmem>>, vector<128x128xbf16>
    %c0_11 = arith.constant 0 : index
    %c0_12 = arith.constant 0 : index
    %21 = vector.load %arg4[%c0_11, %c0_12] : memref<1x128xf32, #tpu.memory_space<vmem>>, vector<1x128xf32>
    %cst_13 = arith.constant dense<0.000000e+00> : vector<128xf32>
    %22 = vector.multi_reduction <add>, %17, %cst_13 [1] : vector<128x128xf32> to vector<128xf32>
    %23 = vector.shape_cast %22 : vector<128xf32> to vector<128x1xf32>
    %cst_14 = arith.constant 2.000000e+00 : f32
    %24 = vector.broadcast %cst_14 : f32 to vector<128x1xf32>
    %25 = arith.addf %23, %24 : vector<128x1xf32>
    %26 = math.rsqrt %25 : vector<128x1xf32>
    %27 = arith.truncf %13 : vector<128x128xf32> to vector<128x128xbf16>
    %cst_15 = arith.constant dense<0.000000e+00> : vector<128x128xf32>
    %28 = tpu.matmul %27, %20, %cst_15 {dimension_numbers = #tpu.dot_dimension_numbers<[1], [0], [0], [1], [0, 0, 1, 1], [], []>} : vector<128x128xbf16>, vector<128x128xbf16>, vector<128x128xf32> -> vector<128x128xf32>
    %29 = vector.broadcast %26 : vector<128x1xf32> to vector<128x128xf32>
    %30 = arith.mulf %29, %28 : vector<128x128xf32>
    %31 = arith.truncf %30 : vector<128x128xf32> to vector<128x128xbf16>
    %cst_16 = arith.constant dense<0.000000e+00> : vector<128x128xf32>
    %32 = tpu.matmul %19, %31, %cst_16 {dimension_numbers = #tpu.dot_dimension_numbers<[1], [0], [0], [1], [0, 0, 1, 1], [], []>} : vector<128x128xbf16>, vector<128x128xbf16>, vector<128x128xf32> -> vector<128x128xf32>
    %33 = vector.broadcast %26 : vector<128x1xf32> to vector<128x128xf32>
    %34 = arith.mulf %33, %32 : vector<128x128xf32>
    %35 = vector.broadcast %26 : vector<128x1xf32> to vector<128x128xf32>
    %36 = arith.mulf %35, %30 : vector<128x128xf32>
    %cst_17 = arith.constant 2.000000e+00 : f32
    %37 = vector.broadcast %cst_17 : f32 to vector<128x128xf32>
    %38 = arith.mulf %37, %36 : vector<128x128xf32>
    %39 = arith.addf %34, %38 : vector<128x128xf32>
    %40 = vector.broadcast %21 : vector<1x128xf32> to vector<128x128xf32>
    %41 = arith.addf %39, %40 : vector<128x128xf32>
    %cst_18 = arith.constant 0.000000e+00 : f32
    %42 = vector.broadcast %cst_18 : f32 to vector<128x128xf32>
    %43 = arith.maximumf %41, %42 : vector<128x128xf32>
    %c0_19 = arith.constant 0 : index
    %c0_20 = arith.constant 0 : index
    %44 = vector.load %arg5[%c0_19, %c0_20] : memref<1x128xf32, #tpu.memory_space<vmem>>, vector<1x128xf32>
    %45 = vector.broadcast %44 : vector<1x128xf32> to vector<128x128xf32>
    %46 = arith.mulf %43, %45 : vector<128x128xf32>
    %cst_21 = arith.constant dense<0.000000e+00> : vector<128xf32>
    %47 = vector.multi_reduction <add>, %46, %cst_21 [1] : vector<128x128xf32> to vector<128xf32>
    %48 = vector.shape_cast %47 : vector<128xf32> to vector<128x1xf32>
    %49 = math.tanh %48 : vector<128x1xf32>
    %50 = tpu.iota {dimensions = array<i32: 1>} : vector<128x128xi32>
    %c127_i32 = arith.constant 127 : i32
    %51 = vector.broadcast %c127_i32 : i32 to vector<128x128xi32>
    %52 = arith.cmpi eq, %50, %51 : vector<128x128xi32>
    %53 = vector.shape_cast %49 : vector<128x1xf32> to vector<128x1xf32>
    %54 = vector.broadcast %53 : vector<128x1xf32> to vector<128x128xf32>
    %55 = arith.select %52, %54, %43 : vector<128x128xi1>, vector<128x128xf32>
    %c0_22 = arith.constant 0 : index
    %c0_23 = arith.constant 0 : index
    %56 = vector.load %arg6[%c0_22, %c0_23] : memref<128x128xf32, #tpu.memory_space<vmem>>, vector<128x128xf32>
    tpu.vector_store %arg6[%c0_22, %c0_23], %55 {strides = array<i32>} : memref<128x128xf32, #tpu.memory_space<vmem>>, vector<128x128xf32>,
    %cst_24 = arith.constant dense<0.000000e+00> : vector<128x128xf32>
    %57 = tpu.matmul %19, %19, %cst_24 {dimension_numbers = #tpu.dot_dimension_numbers<[1], [0], [0], [1], [0, 0, 1, 1], [], []>} : vector<128x128xbf16>, vector<128x128xbf16>, vector<128x128xf32> -> vector<128x128xf32>
    %cst_25 = arith.constant 2.000000e+00 : f32
    %58 = vector.broadcast %cst_25 : f32 to vector<128x128xf32>
    %59 = arith.mulf %58, %17 : vector<128x128xf32>
    %60 = arith.addf %57, %59 : vector<128x128xf32>
    %61 = tpu.iota {dimensions = array<i32: 0>} : vector<128x128xi32>
    %62 = tpu.iota {dimensions = array<i32: 1>} : vector<128x128xi32>
    %63 = arith.cmpi eq, %61, %62 : vector<128x128xi32>
    %cst_26 = arith.constant 0.000000e+00 : f32
    %64 = vector.broadcast %cst_26 : f32 to vector<128x128xf32>
    %65 = arith.select %63, %64, %60 : vector<128x128xi1>, vector<128x128xf32>
    %c0_27 = arith.constant 0 : index
    %c0_28 = arith.constant 0 : index
    %66 = vector.load %arg8[%c0_27, %c0_28] : memref<128x128xf32, #tpu.memory_space<vmem>>, vector<128x128xf32>
    tpu.vector_store %arg8[%c0_27, %c0_28], %65 {strides = array<i32>} : memref<128x128xf32, #tpu.memory_space<vmem>>, vector<128x128xf32>,
    return
  }
}

module attributes {stable_mosaic.version = 11 : i64} {
  func.func @_enc_pool_conv_last_kernel(%arg0: memref<128x128xf32, #tpu.memory_space<vmem>>, %arg1: memref<128x128xf32, #tpu.memory_space<vmem>>, %arg2: memref<128x1xi32, #tpu.memory_space<vmem>>, %arg3: memref<128x128xbf16, #tpu.memory_space<vmem>>, %arg4: memref<1x128xf32, #tpu.memory_space<vmem>>, %arg5: memref<128x128xf32, #tpu.memory_space<vmem>>) attributes {dimension_semantics = [], scalar_prefetch = 0 : i64, scratch_operands = 0 : i64, tpu.core_type = #tpu.core_type<tc>} {
    %c0 = arith.constant 0 : index
    %c0_0 = arith.constant 0 : index
    %0 = vector.load %arg0[%c0, %c0_0] : memref<128x128xf32, #tpu.memory_space<vmem>>, vector<128x128xf32>
    %c0_1 = arith.constant 0 : index
    %c0_2 = arith.constant 0 : index
    %1 = vector.load %arg1[%c0_1, %c0_2] : memref<128x128xf32, #tpu.memory_space<vmem>>, vector<128x128xf32>
    %c0_3 = arith.constant 0 : index
    %c0_4 = arith.constant 0 : index
    %2 = vector.load %arg2[%c0_3, %c0_4] : memref<128x1xi32, #tpu.memory_space<vmem>>, vector<128x1xi32>
    %3 = tpu.iota {dimensions = array<i32: 1>} : vector<128x128xi32>
    %4 = vector.broadcast %2 : vector<128x1xi32> to vector<128x128xi32>
    %5 = arith.cmpi eq, %4, %3 : vector<128x128xi32>
    %6 = arith.extui %5 : vector<128x128xi1> to vector<128x128xi32>
    %7 = arith.sitofp %6 : vector<128x128xi32> to vector<128x128xf32>
    %8 = arith.truncf %7 : vector<128x128xf32> to vector<128x128xbf16>
    %9 = vector.extract_strided_slice %1 {offsets = [0, 127], sizes = [128, 1], strides = [1, 1]} : vector<128x128xf32> to vector<128x1xf32>
    %10 = vector.broadcast %9 : vector<128x1xf32> to vector<128x128xf32>
    %11 = arith.mulf %1, %10 : vector<128x128xf32>
    %12 = arith.truncf %11 : vector<128x128xf32> to vector<128x128xbf16>
    %cst = arith.constant dense<0.000000e+00> : vector<128x128xf32>
    %13 = tpu.matmul %8, %12, %cst {dimension_numbers = #tpu.dot_dimension_numbers<[1], [0], [0], [1], [0, 0, 1, 1], [], []>} : vector<128x128xbf16>, vector<128x128xbf16>, vector<128x128xf32> -> vector<128x128xf32>
    %14 = arith.truncf %0 : vector<128x128xf32> to vector<128x128xbf16>
    %cst_5 = arith.constant dense<0.000000e+00> : vector<128x128xf32>
    %15 = tpu.matmul %8, %14, %cst_5 {dimension_numbers = #tpu.dot_dimension_numbers<[1], [0], [0], [1], [0, 0, 1, 1], [], []>} : vector<128x128xbf16>, vector<128x128xbf16>, vector<128x128xf32> -> vector<128x128xf32>
    %16 = arith.truncf %15 : vector<128x128xf32> to vector<128x128xbf16>
    %cst_6 = arith.constant dense<0.000000e+00> : vector<128x128xf32>
    %17 = tpu.matmul %16, %8, %cst_6 {dimension_numbers = #tpu.dot_dimension_numbers<[1], [1], [0], [0], [0, 0, 1, 0], [], []>} : vector<128x128xbf16>, vector<128x128xbf16>, vector<128x128xf32> -> vector<128x128xf32>
    %18 = arith.truncf %17 : vector<128x128xf32> to vector<128x128xbf16>
    %c0_7 = arith.constant 0 : index
    %c0_8 = arith.constant 0 : index
    %19 = vector.load %arg3[%c0_7, %c0_8] : memref<128x128xbf16, #tpu.memory_space<vmem>>, vector<128x128xbf16>
    %c0_9 = arith.constant 0 : index
    %c0_10 = arith.constant 0 : index
    %20 = vector.load %arg4[%c0_9, %c0_10] : memref<1x128xf32, #tpu.memory_space<vmem>>, vector<1x128xf32>
    %cst_11 = arith.constant dense<0.000000e+00> : vector<128xf32>
    %21 = vector.multi_reduction <add>, %17, %cst_11 [1] : vector<128x128xf32> to vector<128xf32>
    %22 = vector.shape_cast %21 : vector<128xf32> to vector<128x1xf32>
    %cst_12 = arith.constant 2.000000e+00 : f32
    %23 = vector.broadcast %cst_12 : f32 to vector<128x1xf32>
    %24 = arith.addf %22, %23 : vector<128x1xf32>
    %25 = math.rsqrt %24 : vector<128x1xf32>
    %26 = arith.truncf %13 : vector<128x128xf32> to vector<128x128xbf16>
    %cst_13 = arith.constant dense<0.000000e+00> : vector<128x128xf32>
    %27 = tpu.matmul %26, %19, %cst_13 {dimension_numbers = #tpu.dot_dimension_numbers<[1], [0], [0], [1], [0, 0, 1, 1], [], []>} : vector<128x128xbf16>, vector<128x128xbf16>, vector<128x128xf32> -> vector<128x128xf32>
    %28 = vector.broadcast %25 : vector<128x1xf32> to vector<128x128xf32>
    %29 = arith.mulf %28, %27 : vector<128x128xf32>
    %30 = arith.truncf %29 : vector<128x128xf32> to vector<128x128xbf16>
    %cst_14 = arith.constant dense<0.000000e+00> : vector<128x128xf32>
    %31 = tpu.matmul %18, %30, %cst_14 {dimension_numbers = #tpu.dot_dimension_numbers<[1], [0], [0], [1], [0, 0, 1, 1], [], []>} : vector<128x128xbf16>, vector<128x128xbf16>, vector<128x128xf32> -> vector<128x128xf32>
    %32 = vector.broadcast %25 : vector<128x1xf32> to vector<128x128xf32>
    %33 = arith.mulf %32, %31 : vector<128x128xf32>
    %34 = vector.broadcast %25 : vector<128x1xf32> to vector<128x128xf32>
    %35 = arith.mulf %34, %29 : vector<128x128xf32>
    %cst_15 = arith.constant 2.000000e+00 : f32
    %36 = vector.broadcast %cst_15 : f32 to vector<128x128xf32>
    %37 = arith.mulf %36, %35 : vector<128x128xf32>
    %38 = arith.addf %33, %37 : vector<128x128xf32>
    %39 = vector.broadcast %20 : vector<1x128xf32> to vector<128x128xf32>
    %40 = arith.addf %38, %39 : vector<128x128xf32>
    %cst_16 = arith.constant 0.000000e+00 : f32
    %41 = vector.broadcast %cst_16 : f32 to vector<128x128xf32>
    %42 = arith.maximumf %40, %41 : vector<128x128xf32>
    %c0_17 = arith.constant 0 : index
    %c0_18 = arith.constant 0 : index
    %43 = vector.load %arg5[%c0_17, %c0_18] : memref<128x128xf32, #tpu.memory_space<vmem>>, vector<128x128xf32>
    tpu.vector_store %arg5[%c0_17, %c0_18], %42 {strides = array<i32>} : memref<128x128xf32, #tpu.memory_space<vmem>>, vector<128x128xf32>,
    return
  }
}

module attributes {stable_mosaic.version = 11 : i64} {
  func.func @_dec_unpool_conv_kernel(%arg0: memref<128x128xf32, #tpu.memory_space<vmem>>, %arg1: memref<128x128xf32, #tpu.memory_space<vmem>>, %arg2: memref<128x128xf32, #tpu.memory_space<vmem>>, %arg3: memref<1x128xi32, #tpu.memory_space<vmem>>, %arg4: memref<128x128xbf16, #tpu.memory_space<vmem>>, %arg5: memref<1x128xf32, #tpu.memory_space<vmem>>, %arg6: memref<128x128xf32, #tpu.memory_space<vmem>>) attributes {dimension_semantics = [], scalar_prefetch = 0 : i64, scratch_operands = 0 : i64, tpu.core_type = #tpu.core_type<tc>} {
    %c0 = arith.constant 0 : index
    %c0_0 = arith.constant 0 : index
    %0 = vector.load %arg0[%c0, %c0_0] : memref<128x128xf32, #tpu.memory_space<vmem>>, vector<128x128xf32>
    %1 = tpu.iota {dimensions = array<i32: 0>} : vector<128x128xi32>
    %c0_1 = arith.constant 0 : index
    %c0_2 = arith.constant 0 : index
    %2 = vector.load %arg3[%c0_1, %c0_2] : memref<1x128xi32, #tpu.memory_space<vmem>>, vector<1x128xi32>
    %3 = vector.broadcast %2 : vector<1x128xi32> to vector<128x128xi32>
    %4 = arith.cmpi eq, %1, %3 : vector<128x128xi32>
    %5 = arith.extui %4 : vector<128x128xi1> to vector<128x128xi32>
    %6 = arith.sitofp %5 : vector<128x128xi32> to vector<128x128xf32>
    %7 = arith.truncf %6 : vector<128x128xf32> to vector<128x128xbf16>
    %c0_3 = arith.constant 0 : index
    %c0_4 = arith.constant 0 : index
    %8 = vector.load %arg2[%c0_3, %c0_4] : memref<128x128xf32, #tpu.memory_space<vmem>>, vector<128x128xf32>
    %9 = arith.truncf %8 : vector<128x128xf32> to vector<128x128xbf16>
    %cst = arith.constant dense<0.000000e+00> : vector<128x128xf32>
    %10 = tpu.matmul %7, %9, %cst {dimension_numbers = #tpu.dot_dimension_numbers<[1], [0], [0], [1], [0, 0, 1, 1], [], []>} : vector<128x128xbf16>, vector<128x128xbf16>, vector<128x128xf32> -> vector<128x128xf32>
    %c0_5 = arith.constant 0 : index
    %c0_6 = arith.constant 0 : index
    %11 = vector.load %arg1[%c0_5, %c0_6] : memref<128x128xf32, #tpu.memory_space<vmem>>, vector<128x128xf32>
    %12 = arith.addf %11, %10 : vector<128x128xf32>
    %13 = arith.truncf %0 : vector<128x128xf32> to vector<128x128xbf16>
    %c0_7 = arith.constant 0 : index
    %c0_8 = arith.constant 0 : index
    %14 = vector.load %arg4[%c0_7, %c0_8] : memref<128x128xbf16, #tpu.memory_space<vmem>>, vector<128x128xbf16>
    %c0_9 = arith.constant 0 : index
    %c0_10 = arith.constant 0 : index
    %15 = vector.load %arg5[%c0_9, %c0_10] : memref<1x128xf32, #tpu.memory_space<vmem>>, vector<1x128xf32>
    %cst_11 = arith.constant dense<0.000000e+00> : vector<128xf32>
    %16 = vector.multi_reduction <add>, %0, %cst_11 [1] : vector<128x128xf32> to vector<128xf32>
    %17 = vector.shape_cast %16 : vector<128xf32> to vector<128x1xf32>
    %cst_12 = arith.constant 2.000000e+00 : f32
    %18 = vector.broadcast %cst_12 : f32 to vector<128x1xf32>
    %19 = arith.addf %17, %18 : vector<128x1xf32>
    %20 = math.rsqrt %19 : vector<128x1xf32>
    %21 = arith.truncf %12 : vector<128x128xf32> to vector<128x128xbf16>
    %cst_13 = arith.constant dense<0.000000e+00> : vector<128x128xf32>
    %22 = tpu.matmul %21, %14, %cst_13 {dimension_numbers = #tpu.dot_dimension_numbers<[1], [0], [0], [1], [0, 0, 1, 1], [], []>} : vector<128x128xbf16>, vector<128x128xbf16>, vector<128x128xf32> -> vector<128x128xf32>
    %23 = vector.broadcast %20 : vector<128x1xf32> to vector<128x128xf32>
    %24 = arith.mulf %23, %22 : vector<128x128xf32>
    %25 = arith.truncf %24 : vector<128x128xf32> to vector<128x128xbf16>
    %cst_14 = arith.constant dense<0.000000e+00> : vector<128x128xf32>
    %26 = tpu.matmul %13, %25, %cst_14 {dimension_numbers = #tpu.dot_dimension_numbers<[1], [0], [0], [1], [0, 0, 1, 1], [], []>} : vector<128x128xbf16>, vector<128x128xbf16>, vector<128x128xf32> -> vector<128x128xf32>
    %27 = vector.broadcast %20 : vector<128x1xf32> to vector<128x128xf32>
    %28 = arith.mulf %27, %26 : vector<128x128xf32>
    %29 = vector.broadcast %20 : vector<128x1xf32> to vector<128x128xf32>
    %30 = arith.mulf %29, %24 : vector<128x128xf32>
    %cst_15 = arith.constant 2.000000e+00 : f32
    %31 = vector.broadcast %cst_15 : f32 to vector<128x128xf32>
    %32 = arith.mulf %31, %30 : vector<128x128xf32>
    %33 = arith.addf %28, %32 : vector<128x128xf32>
    %34 = vector.broadcast %15 : vector<1x128xf32> to vector<128x128xf32>
    %35 = arith.addf %33, %34 : vector<128x128xf32>
    %cst_16 = arith.constant 0.000000e+00 : f32
    %36 = vector.broadcast %cst_16 : f32 to vector<128x128xf32>
    %37 = arith.maximumf %35, %36 : vector<128x128xf32>
    %c0_17 = arith.constant 0 : index
    %c0_18 = arith.constant 0 : index
    %38 = vector.load %arg6[%c0_17, %c0_18] : memref<128x128xf32, #tpu.memory_space<vmem>>, vector<128x128xf32>
    tpu.vector_store %arg6[%c0_17, %c0_18], %37 {strides = array<i32>} : memref<128x128xf32, #tpu.memory_space<vmem>>, vector<128x128xf32>,
    return
  }
}

module attributes {stable_mosaic.version = 11 : i64} {
  func.func @_dec_unpool_conv_kernel(%arg0: memref<128x128xf32, #tpu.memory_space<vmem>>, %arg1: memref<128x128xf32, #tpu.memory_space<vmem>>, %arg2: memref<128x128xf32, #tpu.memory_space<vmem>>, %arg3: memref<1x128xi32, #tpu.memory_space<vmem>>, %arg4: memref<128x128xbf16, #tpu.memory_space<vmem>>, %arg5: memref<1x128xf32, #tpu.memory_space<vmem>>, %arg6: memref<128x128xf32, #tpu.memory_space<vmem>>) attributes {dimension_semantics = [], scalar_prefetch = 0 : i64, scratch_operands = 0 : i64, tpu.core_type = #tpu.core_type<tc>} {
    %c0 = arith.constant 0 : index
    %c0_0 = arith.constant 0 : index
    %0 = vector.load %arg0[%c0, %c0_0] : memref<128x128xf32, #tpu.memory_space<vmem>>, vector<128x128xf32>
    %1 = tpu.iota {dimensions = array<i32: 0>} : vector<128x128xi32>
    %c0_1 = arith.constant 0 : index
    %c0_2 = arith.constant 0 : index
    %2 = vector.load %arg3[%c0_1, %c0_2] : memref<1x128xi32, #tpu.memory_space<vmem>>, vector<1x128xi32>
    %3 = vector.broadcast %2 : vector<1x128xi32> to vector<128x128xi32>
    %4 = arith.cmpi eq, %1, %3 : vector<128x128xi32>
    %5 = arith.extui %4 : vector<128x128xi1> to vector<128x128xi32>
    %6 = arith.sitofp %5 : vector<128x128xi32> to vector<128x128xf32>
    %7 = arith.truncf %6 : vector<128x128xf32> to vector<128x128xbf16>
    %c0_3 = arith.constant 0 : index
    %c0_4 = arith.constant 0 : index
    %8 = vector.load %arg2[%c0_3, %c0_4] : memref<128x128xf32, #tpu.memory_space<vmem>>, vector<128x128xf32>
    %9 = arith.truncf %8 : vector<128x128xf32> to vector<128x128xbf16>
    %cst = arith.constant dense<0.000000e+00> : vector<128x128xf32>
    %10 = tpu.matmul %7, %9, %cst {dimension_numbers = #tpu.dot_dimension_numbers<[1], [0], [0], [1], [0, 0, 1, 1], [], []>} : vector<128x128xbf16>, vector<128x128xbf16>, vector<128x128xf32> -> vector<128x128xf32>
    %c0_5 = arith.constant 0 : index
    %c0_6 = arith.constant 0 : index
    %11 = vector.load %arg1[%c0_5, %c0_6] : memref<128x128xf32, #tpu.memory_space<vmem>>, vector<128x128xf32>
    %12 = arith.addf %11, %10 : vector<128x128xf32>
    %13 = arith.truncf %0 : vector<128x128xf32> to vector<128x128xbf16>
    %c0_7 = arith.constant 0 : index
    %c0_8 = arith.constant 0 : index
    %14 = vector.load %arg4[%c0_7, %c0_8] : memref<128x128xbf16, #tpu.memory_space<vmem>>, vector<128x128xbf16>
    %c0_9 = arith.constant 0 : index
    %c0_10 = arith.constant 0 : index
    %15 = vector.load %arg5[%c0_9, %c0_10] : memref<1x128xf32, #tpu.memory_space<vmem>>, vector<1x128xf32>
    %cst_11 = arith.constant dense<0.000000e+00> : vector<128xf32>
    %16 = vector.multi_reduction <add>, %0, %cst_11 [1] : vector<128x128xf32> to vector<128xf32>
    %17 = vector.shape_cast %16 : vector<128xf32> to vector<128x1xf32>
    %cst_12 = arith.constant 2.000000e+00 : f32
    %18 = vector.broadcast %cst_12 : f32 to vector<128x1xf32>
    %19 = arith.addf %17, %18 : vector<128x1xf32>
    %20 = math.rsqrt %19 : vector<128x1xf32>
    %21 = arith.truncf %12 : vector<128x128xf32> to vector<128x128xbf16>
    %cst_13 = arith.constant dense<0.000000e+00> : vector<128x128xf32>
    %22 = tpu.matmul %21, %14, %cst_13 {dimension_numbers = #tpu.dot_dimension_numbers<[1], [0], [0], [1], [0, 0, 1, 1], [], []>} : vector<128x128xbf16>, vector<128x128xbf16>, vector<128x128xf32> -> vector<128x128xf32>
    %23 = vector.broadcast %20 : vector<128x1xf32> to vector<128x128xf32>
    %24 = arith.mulf %23, %22 : vector<128x128xf32>
    %25 = arith.truncf %24 : vector<128x128xf32> to vector<128x128xbf16>
    %cst_14 = arith.constant dense<0.000000e+00> : vector<128x128xf32>
    %26 = tpu.matmul %13, %25, %cst_14 {dimension_numbers = #tpu.dot_dimension_numbers<[1], [0], [0], [1], [0, 0, 1, 1], [], []>} : vector<128x128xbf16>, vector<128x128xbf16>, vector<128x128xf32> -> vector<128x128xf32>
    %27 = vector.broadcast %20 : vector<128x1xf32> to vector<128x128xf32>
    %28 = arith.mulf %27, %26 : vector<128x128xf32>
    %29 = vector.broadcast %20 : vector<128x1xf32> to vector<128x128xf32>
    %30 = arith.mulf %29, %24 : vector<128x128xf32>
    %cst_15 = arith.constant 2.000000e+00 : f32
    %31 = vector.broadcast %cst_15 : f32 to vector<128x128xf32>
    %32 = arith.mulf %31, %30 : vector<128x128xf32>
    %33 = arith.addf %28, %32 : vector<128x128xf32>
    %34 = vector.broadcast %15 : vector<1x128xf32> to vector<128x128xf32>
    %35 = arith.addf %33, %34 : vector<128x128xf32>
    %c0_16 = arith.constant 0 : index
    %c0_17 = arith.constant 0 : index
    %36 = vector.load %arg6[%c0_16, %c0_17] : memref<128x128xf32, #tpu.memory_space<vmem>>, vector<128x128xf32>
    tpu.vector_store %arg6[%c0_16, %c0_17], %35 {strides = array<i32>} : memref<128x128xf32, #tpu.memory_space<vmem>>, vector<128x128xf32>,
    return
  }
}

</mosaic_0001>

<llo_original>
// kernel: graph_unet_forward.6
$region0: #{graph_unet_forward.6}
  #allocation0 [shape = 'u32[]', space=smem, size = 0x4, offset = 0x4, fixed_abs, tag = 'smem constant byte address 0x4 - core index']
  #allocation1 [shape = 'u32[144,128]{1,0:T(1,128)}', space=vmem, size = 0x12000, scoped, tag = 'internal scratch']
  %s0 = inlined_call_operand.vmem [shape: f32[128,128], index: 0, kind: input, shape index: {}]
  %s1 = inlined_call_operand.vmem [shape: f32[128,128], index: 1, kind: input, shape index: {}]
  %s2 = inlined_call_operand.vmem [shape: s32[128,1], index: 2, kind: input, shape index: {}]
  %s3 = inlined_call_operand.vmem [shape: bf16[128,128], index: 3, kind: input, shape index: {}]
  %s4 = inlined_call_operand.vmem [shape: f32[1,128], index: 4, kind: input, shape index: {}]
  %s5 = inlined_call_operand.vmem [shape: f32[1,128], index: 5, kind: input, shape index: {}]
  %s6 = inlined_call_operand.vmem [shape: f32[128,128], index: 6, kind: output, shape index: {0}]
  %s7 = inlined_call_operand.vmem [shape: f32[128,128], index: 7, kind: output, shape index: {1}]
  %s8 = inlined_call_operand.vmem [shape: f32[128,128], index: 8, kind: output, shape index: {2}]
  %9 = xla_tuple %s6, %s7, %s8
  %s10 = sld [smem:[#allocation0]]
  $region50: #{graph_unet_forward.6} parent=0
    _
  %s12 = ssub.s32 1, %s10
  %s13 = scalar_select 0, %s12, %s10
  // Predicated region
  $region2: #{graph_unet_forward.6} parent=0 // pred_check
    _
  $region3: #{graph_unet_forward.6} parent=0 // pred_check_branch
    %15 = sbr.rel (0) target = $region5
  $region4: #{graph_unet_forward.6} parent=0 // pred_region
    _
  $region5: #{graph_unet_forward.6} parent=0 // pred_fallthru
    _
  // Predicated region
  $region6: #{graph_unet_forward.6} parent=0 // pred_check
    _
  $region7: #{graph_unet_forward.6} parent=0 // pred_check_branch
    %17 = sbr.rel (0) target = $region9
  $region8: #{graph_unet_forward.6} parent=0 // pred_region
    _
  $region9: #{graph_unet_forward.6} parent=0 // pred_fallthru
    _
  // Predicated region
  $region10: #{graph_unet_forward.6} parent=0 // pred_check
    _
  $region11: #{graph_unet_forward.6} parent=0 // pred_check_branch
    %19 = sbr.rel (0) target = $region13
  $region12: #{graph_unet_forward.6} parent=0 // pred_region
    _
  $region13: #{graph_unet_forward.6} parent=0 // pred_fallthru
    _
  // Predicated region
  $region14: #{graph_unet_forward.6} parent=0 // pred_check
    _
  $region15: #{graph_unet_forward.6} parent=0 // pred_check_branch
    %21 = sbr.rel (0) target = $region17
  $region16: #{graph_unet_forward.6} parent=0 // pred_region
    _
  $region17: #{graph_unet_forward.6} parent=0 // pred_fallthru
    _
  // Predicated region
  $region18: #{graph_unet_forward.6} parent=0 // pred_check
    _
  $region19: #{graph_unet_forward.6} parent=0 // pred_check_branch
    %23 = sbr.rel (0) target = $region21
  $region20: #{graph_unet_forward.6} parent=0 // pred_region
    _
  $region21: #{graph_unet_forward.6} parent=0 // pred_fallthru
    _
  // Predicated region
  $region22: #{graph_unet_forward.6} parent=0 // pred_check
    _
  $region23: #{graph_unet_forward.6} parent=0 // pred_check_branch
    %25 = sbr.rel (0) target = $region25
  $region24: #{graph_unet_forward.6} parent=0 // pred_region
    _
  $region25: #{graph_unet_forward.6} parent=0 // pred_fallthru
    _
  %v27 = vld [vmem:[%s0] sm:$0xff]
  %v28 = vld [vmem:[%s0 + $0x8] sm:$0xff]
  %v29 = vld [vmem:[%s0 + $0x10] sm:$0xff]
  %v30 = vld [vmem:[%s0 + $0x18] sm:$0xff]
  %v31 = vld [vmem:[%s0 + $0x20] sm:$0xff]
  %v32 = vld [vmem:[%s0 + $0x28] sm:$0xff]
  %v33 = vld [vmem:[%s0 + $0x30] sm:$0xff]
  %v34 = vld [vmem:[%s0 + $0x38] sm:$0xff]
  %v35 = vld [vmem:[%s0 + $0x40] sm:$0xff]
  %v36 = vld [vmem:[%s0 + $0x48] sm:$0xff]
  %v37 = vld [vmem:[%s0 + $0x50] sm:$0xff]
  %v38 = vld [vmem:[%s0 + $0x58] sm:$0xff]
  %v39 = vld [vmem:[%s0 + $0x60] sm:$0xff]
  %v40 = vld [vmem:[%s0 + $0x68] sm:$0xff]
  %v41 = vld [vmem:[%s0 + $0x70] sm:$0xff]
  %v42 = vld [vmem:[%s0 + $0x78] sm:$0xff]
  %v43 = vld [vmem:[%s1] sm:$0xff]
  %v44 = vld [vmem:[%s1 + $0x8] sm:$0xff]
  %v45 = vld [vmem:[%s1 + $0x10] sm:$0xff]
  %v46 = vld [vmem:[%s1 + $0x18] sm:$0xff]
  %v47 = vld [vmem:[%s1 + $0x20] sm:$0xff]
  %v48 = vld [vmem:[%s1 + $0x28] sm:$0xff]
  %v49 = vld [vmem:[%s1 + $0x30] sm:$0xff]
  %v50 = vld [vmem:[%s1 + $0x38] sm:$0xff]
  %v51 = vld [vmem:[%s1 + $0x40] sm:$0xff]
  %v52 = vld [vmem:[%s1 + $0x48] sm:$0xff]
  %v53 = vld [vmem:[%s1 + $0x50] sm:$0xff]
  %v54 = vld [vmem:[%s1 + $0x58] sm:$0xff]
  %v55 = vld [vmem:[%s1 + $0x60] sm:$0xff]
  %v56 = vld [vmem:[%s1 + $0x68] sm:$0xff]
  %v57 = vld [vmem:[%s1 + $0x70] sm:$0xff]
  %v58 = vld [vmem:[%s1 + $0x78] sm:$0xff]
  %v59 = vld [vmem:[%s2] sm:$0xff]
  %v60 = vld [vmem:[%s2 + $0x8] sm:$0xff]
  %v61 = vld [vmem:[%s2 + $0x10] sm:$0xff]
  %v62 = vld [vmem:[%s2 + $0x18] sm:$0xff]
  %v63 = vld [vmem:[%s2 + $0x20] sm:$0xff]
  %v64 = vld [vmem:[%s2 + $0x28] sm:$0xff]
  %v65 = vld [vmem:[%s2 + $0x30] sm:$0xff]
  %v66 = vld [vmem:[%s2 + $0x38] sm:$0xff]
  %v67 = vld [vmem:[%s2 + $0x40] sm:$0xff]
  %v68 = vld [vmem:[%s2 + $0x48] sm:$0xff]
  %v69 = vld [vmem:[%s2 + $0x50] sm:$0xff]
  %v70 = vld [vmem:[%s2 + $0x58] sm:$0xff]
  %v71 = vld [vmem:[%s2 + $0x60] sm:$0xff]
  %v72 = vld [vmem:[%s2 + $0x68] sm:$0xff]
  %v73 = vld [vmem:[%s2 + $0x70] sm:$0xff]
  %v74 = vld [vmem:[%s2 + $0x78] sm:$0xff]
  %v75 = vlaneseq
  %v76 = vand.u32 %v75, 127
  %77 = vset.pattern.permute.xlu0 0
  %78 = vperm.xlu0 %77, %v59
  %v79 = vpop.permute.xlu0 %78
  %80 = vset.pattern.permute.xlu0 0
  %81 = vperm.xlu0 %80, %v60
  %v82 = vpop.permute.xlu0 %81
  %83 = vset.pattern.permute.xlu0 0
  %84 = vperm.xlu0 %83, %v61
  %v85 = vpop.permute.xlu0 %84
  %86 = vset.pattern.permute.xlu0 0
  %87 = vperm.xlu0 %86, %v62
  %v88 = vpop.permute.xlu0 %87
  %89 = vset.pattern.permute.xlu0 0
  %90 = vperm.xlu0 %89, %v63
  %v91 = vpop.permute.xlu0 %90
  %92 = vset.pattern.permute.xlu0 0
  %93 = vperm.xlu0 %92, %v64
  %v94 = vpop.permute.xlu0 %93
  %95 = vset.pattern.permute.xlu0 0
  %96 = vperm.xlu0 %95, %v65
  %v97 = vpop.permute.xlu0 %96
  %98 = vset.pattern.permute.xlu0 0
  %99 = vperm.xlu0 %98, %v66
  %v100 = vpop.permute.xlu0 %99
  %101 = vset.pattern.permute.xlu0 0
  %102 = vperm.xlu0 %101, %v67
  %v103 = vpop.permute.xlu0 %102
  %104 = vset.pattern.permute.xlu0 0
  %105 = vperm.xlu0 %104, %v68
  %v106 = vpop.permute.xlu0 %105
  %107 = vset.pattern.permute.xlu0 0
  %108 = vperm.xlu0 %107, %v69
  %v109 = vpop.permute.xlu0 %108
  %110 = vset.pattern.permute.xlu0 0
  %111 = vperm.xlu0 %110, %v70
  %v112 = vpop.permute.xlu0 %111
  %113 = vset.pattern.permute.xlu0 0
  %114 = vperm.xlu0 %113, %v71
  %v115 = vpop.permute.xlu0 %114
  %116 = vset.pattern.permute.xlu0 0
  %117 = vperm.xlu0 %116, %v72
  %v118 = vpop.permute.xlu0 %117
  %119 = vset.pattern.permute.xlu0 0
  %120 = vperm.xlu0 %119, %v73
  %v121 = vpop.permute.xlu0 %120
  %122 = vset.pattern.permute.xlu0 0
  %123 = vperm.xlu0 %122, %v74
  %v124 = vpop.permute.xlu0 %123
  %vm125 = vcmp.eq.s32.totalorder %v79, %v76
  %vm126 = vcmp.eq.s32.totalorder %v82, %v76
  %vm127 = vcmp.eq.s32.totalorder %v85, %v76
  %vm128 = vcmp.eq.s32.totalorder %v88, %v76
  %vm129 = vcmp.eq.s32.totalorder %v91, %v76
  %vm130 = vcmp.eq.s32.totalorder %v94, %v76
  %vm131 = vcmp.eq.s32.totalorder %v97, %v76
  %vm132 = vcmp.eq.s32.totalorder %v100, %v76
  %vm133 = vcmp.eq.s32.totalorder %v103, %v76
  %vm134 = vcmp.eq.s32.totalorder %v106, %v76
  %vm135 = vcmp.eq.s32.totalorder %v109, %v76
  %vm136 = vcmp.eq.s32.totalorder %v112, %v76
  %vm137 = vcmp.eq.s32.totalorder %v115, %v76
  %vm138 = vcmp.eq.s32.totalorder %v118, %v76
  %vm139 = vcmp.eq.s32.totalorder %v121, %v76
  %vm140 = vcmp.eq.s32.totalorder %v124, %v76
  %v141 = vsel %vm125, 1, 0
  %v142 = vsel %vm126, 1, 0
  %v143 = vsel %vm127, 1, 0
  %v144 = vsel %vm128, 1, 0
  %v145 = vsel %vm129, 1, 0
  %v146 = vsel %vm130, 1, 0
  %v147 = vsel %vm131, 1, 0
  %v148 = vsel %vm132, 1, 0
  %v149 = vsel %vm133, 1, 0
  %v150 = vsel %vm134, 1, 0
  %v151 = vsel %vm135, 1, 0
  %v152 = vsel %vm136, 1, 0
  %v153 = vsel %vm137, 1, 0
  %v154 = vsel %vm138, 1, 0
  %v155 = vsel %vm139, 1, 0
  %v156 = vsel %vm140, 1, 0
  %v157 = vcvt.s32.f32 %v141
  %v158 = vcvt.s32.f32 %v142
  %v159 = vcvt.s32.f32 %v143
  %v160 = vcvt.s32.f32 %v144
  %v161 = vcvt.s32.f32 %v145
  %v162 = vcvt.s32.f32 %v146
  %v163 = vcvt.s32.f32 %v147
  %v164 = vcvt.s32.f32 %v148
  %v165 = vcvt.s32.f32 %v149
  %v166 = vcvt.s32.f32 %v150
  %v167 = vcvt.s32.f32 %v151
  %v168 = vcvt.s32.f32 %v152
  %v169 = vcvt.s32.f32 %v153
  %v170 = vcvt.s32.f32 %v154
  %v171 = vcvt.s32.f32 %v155
  %v172 = vcvt.s32.f32 %v156
  %v173 = vpack.c.bf16 %v158, %v157
  %v174 = vpack.c.bf16 %v160, %v159
  %v175 = vpack.c.bf16 %v162, %v161
  %v176 = vpack.c.bf16 %v164, %v163
  %v177 = vpack.c.bf16 %v166, %v165
  %v178 = vpack.c.bf16 %v168, %v167
  %v179 = vpack.c.bf16 %v170, %v169
  %v180 = vpack.c.bf16 %v172, %v171
  %182 = vset.pattern.permute.xlu0 127
  %183 = vperm.xlu0 %182, %v43
  %v184 = vpop.permute.xlu0 %183
  %187 = vset.pattern.permute.xlu0 127
  %188 = vperm.xlu0 %187, %v44
  %v189 = vpop.permute.xlu0 %188
  %192 = vset.pattern.permute.xlu0 127
  %193 = vperm.xlu0 %192, %v45
  %v194 = vpop.permute.xlu0 %193
  %197 = vset.pattern.permute.xlu0 127
  %198 = vperm.xlu0 %197, %v46
  %v199 = vpop.permute.xlu0 %198
  %202 = vset.pattern.permute.xlu0 127
  %203 = vperm.xlu0 %202, %v47
  %v204 = vpop.permute.xlu0 %203
  %207 = vset.pattern.permute.xlu0 127
  %208 = vperm.xlu0 %207, %v48
  %v209 = vpop.permute.xlu0 %208
  %212 = vset.pattern.permute.xlu0 127
  %213 = vperm.xlu0 %212, %v49
  %v214 = vpop.permute.xlu0 %213
  %217 = vset.pattern.permute.xlu0 127
  %218 = vperm.xlu0 %217, %v50
  %v219 = vpop.permute.xlu0 %218
  %222 = vset.pattern.permute.xlu0 127
  %223 = vperm.xlu0 %222, %v51
  %v224 = vpop.permute.xlu0 %223
  %227 = vset.pattern.permute.xlu0 127
  %228 = vperm.xlu0 %227, %v52
  %v229 = vpop.permute.xlu0 %228
  %232 = vset.pattern.permute.xlu0 127
  %233 = vperm.xlu0 %232, %v53
  %v234 = vpop.permute.xlu0 %233
  %237 = vset.pattern.permute.xlu0 127
  %238 = vperm.xlu0 %237, %v54
  %v239 = vpop.permute.xlu0 %238
  %242 = vset.pattern.permute.xlu0 127
  %243 = vperm.xlu0 %242, %v55
  %v244 = vpop.permute.xlu0 %243
  %247 = vset.pattern.permute.xlu0 127
  %248 = vperm.xlu0 %247, %v56
  %v249 = vpop.permute.xlu0 %248
  %252 = vset.pattern.permute.xlu0 127
  %253 = vperm.xlu0 %252, %v57
  %v254 = vpop.permute.xlu0 %253
  %257 = vset.pattern.permute.xlu0 127
  %258 = vperm.xlu0 %257, %v58
  %v259 = vpop.permute.xlu0 %258
  %v261 = vmul.f32 %v43, %v184
  %v262 = vmul.f32 %v44, %v189
  %v263 = vmul.f32 %v45, %v194
  %v264 = vmul.f32 %v46, %v199
  %v265 = vmul.f32 %v47, %v204
  %v266 = vmul.f32 %v48, %v209
  %v267 = vmul.f32 %v49, %v214
  %v268 = vmul.f32 %v50, %v219
  %v269 = vmul.f32 %v51, %v224
  %v270 = vmul.f32 %v52, %v229
  %v271 = vmul.f32 %v53, %v234
  %v272 = vmul.f32 %v54, %v239
  %v273 = vmul.f32 %v55, %v244
  %v274 = vmul.f32 %v56, %v249
  %v275 = vmul.f32 %v57, %v254
  %v276 = vmul.f32 %v58, %v259
  %v277 = vpack.c.bf16 %v262, %v261
  %v278 = vpack.c.bf16 %v264, %v263
  %v279 = vpack.c.bf16 %v266, %v265
  %v280 = vpack.c.bf16 %v268, %v267
  %v281 = vpack.c.bf16 %v270, %v269
  %v282 = vpack.c.bf16 %v272, %v271
  %v283 = vpack.c.bf16 %v274, %v273
  %v284 = vpack.c.bf16 %v276, %v275
  %285 = vmatprep.subr.bf16.mxu0 0
  %286 = vmatpush1.bf16.msra.mxu0 %v277
  %287 = vmatprep.subr.bf16.mxu0 0
  %288 = vmatpush1.bf16.msra.mxu0 %v278
  %289 = vmatprep.subr.bf16.mxu0 0
  %290 = vmatpush1.bf16.msra.mxu0 %v279
  %291 = vmatprep.subr.bf16.mxu0 0
  %292 = vmatpush1.bf16.msra.mxu0 %v280
  %293 = vmatprep.subr.bf16.mxu0 0
  %294 = vmatpush1.bf16.msra.mxu0 %v281
  %295 = vmatprep.subr.bf16.mxu0 0
  %296 = vmatpush1.bf16.msra.mxu0 %v282
  %297 = vmatprep.subr.bf16.mxu0 0
  %298 = vmatpush1.bf16.msra.mxu0 %v283
  %299 = vmatprep.subr.bf16.mxu0 0
  %300 = vmatpush1.bf16.msra.mxu0 %v284
  %301 = vmatprep.subr.bf16.mxu0 0
  %302 = vmatpush1.bf16.msra.mxu0 0
  %303 = vmatprep.subr.bf16.mxu0 0
  %304 = vmatpush1.bf16.msra.mxu0 0
  %305 = vmatprep.subr.bf16.mxu0 0
  %306 = vmatpush1.bf16.msra.mxu0 0
  %307 = vmatprep.subr.bf16.mxu0 0
  %308 = vmatpush1.bf16.msra.mxu0 0
  %309 = vmatprep.subr.bf16.mxu0 0
  %310 = vmatpush1.bf16.msra.mxu0 0
  %311 = vmatprep.subr.bf16.mxu0 0
  %312 = vmatpush1.bf16.msra.mxu0 0
  %313 = vmatprep.subr.bf16.mxu0 0
  %314 = vmatpush1.bf16.msra.mxu0 0
  %315 = vmatprep.subr.bf16.mxu0 0
  %316 = vmatpush1.bf16.msra.mxu0 0
  %317 = vmatprep.mubr.bf16.mxu0 0
  %318 = vmatmul.mubr.bf16.gmra.mrb[0].mxu0 %v173
  %v319 = vpop.f32.mrb[0].mxu0
  %v320 = vadd.f32 0.0, %v319
  %v321 = vpop.f32.mrb[0].mxu0
  %v322 = vpop.f32.mrb[0].mxu0
  %v323 = vadd.f32 0.0, %v322
  %v324 = vpop.f32.mrb[0].mxu0
  %325 = vmatprep.mubr.bf16.mxu0 0
  %326 = vmatmul.mubr.bf16.gmra.mrb[0].mxu0 %v174
  %v327 = vpop.f32.mrb[0].mxu0
  %v328 = vadd.f32 0.0, %v327
  %v329 = vpop.f32.mrb[0].mxu0
  %v330 = vpop.f32.mrb[0].mxu0
  %v331 = vadd.f32 0.0, %v330
  %v332 = vpop.f32.mrb[0].mxu0
  %333 = vmatprep.mubr.bf16.mxu0 0
  %334 = vmatmul.mubr.bf16.gmra.mrb[0].mxu0 %v175
  %v335 = vpop.f32.mrb[0].mxu0
  %v336 = vadd.f32 0.0, %v335
  %v337 = vpop.f32.mrb[0].mxu0
  %v338 = vpop.f32.mrb[0].mxu0
  %v339 = vadd.f32 0.0, %v338
  %v340 = vpop.f32.mrb[0].mxu0
  %341 = vmatprep.mubr.bf16.mxu0 0
  %342 = vmatmul.mubr.bf16.gmra.mrb[0].mxu0 %v176
  %v343 = vpop.f32.mrb[0].mxu0
  %v344 = vadd.f32 0.0, %v343
  %v345 = vpop.f32.mrb[0].mxu0
  %v346 = vpop.f32.mrb[0].mxu0
  %v347 = vadd.f32 0.0, %v346
  %v348 = vpop.f32.mrb[0].mxu0
  %349 = vmatprep.mubr.bf16.mxu0 0
  %350 = vmatmul.mubr.bf16.gmra.mrb[0].mxu0 %v177
  %v351 = vpop.f32.mrb[0].mxu0
  %v352 = vadd.f32 0.0, %v351
  %v353 = vpop.f32.mrb[0].mxu0
  %v354 = vpop.f32.mrb[0].mxu0
  %v355 = vadd.f32 0.0, %v354
  %v356 = vpop.f32.mrb[0].mxu0
  %357 = vmatprep.mubr.bf16.mxu0 0
  %358 = vmatmul.mubr.bf16.gmra.mrb[0].mxu0 %v178
  %v359 = vpop.f32.mrb[0].mxu0
  %v360 = vadd.f32 0.0, %v359
  %v361 = vpop.f32.mrb[0].mxu0
  %v362 = vpop.f32.mrb[0].mxu0
  %v363 = vadd.f32 0.0, %v362
  %v364 = vpop.f32.mrb[0].mxu0
  %365 = vmatprep.mubr.bf16.mxu0 0
  %366 = vmatmul.mubr.bf16.gmra.mrb[0].mxu0 %v179
  %v367 = vpop.f32.mrb[0].mxu0
  %v368 = vadd.f32 0.0, %v367
  %v369 = vpop.f32.mrb[0].mxu0
  %v370 = vpop.f32.mrb[0].mxu0
  %v371 = vadd.f32 0.0, %v370
  %v372 = vpop.f32.mrb[0].mxu0
  %373 = vmatprep.mubr.bf16.mxu0 0
  %374 = vmatmul.mubr.bf16.gmra.mrb[0].mxu0 %v180
  %v375 = vpop.f32.mrb[0].mxu0
  %v376 = vadd.f32 0.0, %v375
  %v377 = vpop.f32.mrb[0].mxu0
  %v378 = vpop.f32.mrb[0].mxu0
  %v379 = vadd.f32 0.0, %v378
  %v380 = vpop.f32.mrb[0].mxu0
  %381 = vdwg.mxu0
  %v382 = vpack.c.bf16 %v28, %v27
  %v383 = vpack.c.bf16 %v30, %v29
  %v384 = vpack.c.bf16 %v32, %v31
  %v385 = vpack.c.bf16 %v34, %v33
  %v386 = vpack.c.bf16 %v36, %v35
  %v387 = vpack.c.bf16 %v38, %v37
  %v388 = vpack.c.bf16 %v40, %v39
  %v389 = vpack.c.bf16 %v42, %v41
  %390 = vmatprep.subr.bf16.mxu0 0
  %391 = vmatpush1.bf16.msra.mxu0 %v382
  %392 = vmatprep.subr.bf16.mxu0 0
  %393 = vmatpush1.bf16.msra.mxu0 %v383
  %394 = vmatprep.subr.bf16.mxu0 0
  %395 = vmatpush1.bf16.msra.mxu0 %v384
  %396 = vmatprep.subr.bf16.mxu0 0
  %397 = vmatpush1.bf16.msra.mxu0 %v385
  %398 = vmatprep.subr.bf16.mxu0 0
  %399 = vmatpush1.bf16.msra.mxu0 %v386
  %400 = vmatprep.subr.bf16.mxu0 0
  %401 = vmatpush1.bf16.msra.mxu0 %v387
  %402 = vmatprep.subr.bf16.mxu0 0
  %403 = vmatpush1.bf16.msra.mxu0 %v388
  %404 = vmatprep.subr.bf16.mxu0 0
  %405 = vmatpush1.bf16.msra.mxu0 %v389
  %406 = vmatprep.subr.bf16.mxu0 0
  %407 = vmatpush1.bf16.msra.mxu0 0
  %408 = vmatprep.subr.bf16.mxu0 0
  %409 = vmatpush1.bf16.msra.mxu0 0
  %410 = vmatprep.subr.bf16.mxu0 0
  %411 = vmatpush1.bf16.msra.mxu0 0
  %412 = vmatprep.subr.bf16.mxu0 0
  %413 = vmatpush1.bf16.msra.mxu0 0
  %414 = vmatprep.subr.bf16.mxu0 0
  %415 = vmatpush1.bf16.msra.mxu0 0
  %416 = vmatprep.subr.bf16.mxu0 0
  %417 = vmatpush1.bf16.msra.mxu0 0
  %418 = vmatprep.subr.bf16.mxu0 0
  %419 = vmatpush1.bf16.msra.mxu0 0
  %420 = vmatprep.subr.bf16.mxu0 0
  %421 = vmatpush1.bf16.msra.mxu0 0
  %422 = vmatprep.mubr.bf16.mxu0 0
  %423 = vmatmul.mubr.bf16.gmra.mrb[0].mxu0 %v173
  %v424 = vpop.f32.mrb[0].mxu0
  %v425 = vadd.f32 0.0, %v424
  %v426 = vpop.f32.mrb[0].mxu0
  %v427 = vpop.f32.mrb[0].mxu0
  %v428 = vadd.f32 0.0, %v427
  %v429 = vpop.f32.mrb[0].mxu0
  %430 = vmatprep.mubr.bf16.mxu0 0
  %431 = vmatmul.mubr.bf16.gmra.mrb[0].mxu0 %v174
  %v432 = vpop.f32.mrb[0].mxu0
  %v433 = vadd.f32 0.0, %v432
  %v434 = vpop.f32.mrb[0].mxu0
  %v435 = vpop.f32.mrb[0].mxu0
  %v436 = vadd.f32 0.0, %v435
  %v437 = vpop.f32.mrb[0].mxu0
  %438 = vmatprep.mubr.bf16.mxu0 0
  %439 = vmatmul.mubr.bf16.gmra.mrb[0].mxu0 %v175
  %v440 = vpop.f32.mrb[0].mxu0
  %v441 = vadd.f32 0.0, %v440
  %v442 = vpop.f32.mrb[0].mxu0
  %v443 = vpop.f32.mrb[0].mxu0
  %v444 = vadd.f32 0.0, %v443
  %v445 = vpop.f32.mrb[0].mxu0
  %446 = vmatprep.mubr.bf16.mxu0 0
  %447 = vmatmul.mubr.bf16.gmra.mrb[0].mxu0 %v176
  %v448 = vpop.f32.mrb[0].mxu0
  %v449 = vadd.f32 0.0, %v448
  %v450 = vpop.f32.mrb[0].mxu0
  %v451 = vpop.f32.mrb[0].mxu0
  %v452 = vadd.f32 0.0, %v451
  %v453 = vpop.f32.mrb[0].mxu0
  %454 = vmatprep.mubr.bf16.mxu0 0
  %455 = vmatmul.mubr.bf16.gmra.mrb[0].mxu0 %v177
  %v456 = vpop.f32.mrb[0].mxu0
  %v457 = vadd.f32 0.0, %v456
  %v458 = vpop.f32.mrb[0].mxu0
  %v459 = vpop.f32.mrb[0].mxu0
  %v460 = vadd.f32 0.0, %v459
  %v461 = vpop.f32.mrb[0].mxu0
  %462 = vmatprep.mubr.bf16.mxu0 0
  %463 = vmatmul.mubr.bf16.gmra.mrb[0].mxu0 %v178
  %v464 = vpop.f32.mrb[0].mxu0
  %v465 = vadd.f32 0.0, %v464
  %v466 = vpop.f32.mrb[0].mxu0
  %v467 = vpop.f32.mrb[0].mxu0
  %v468 = vadd.f32 0.0, %v467
  %v469 = vpop.f32.mrb[0].mxu0
  %470 = vmatprep.mubr.bf16.mxu0 0
  %471 = vmatmul.mubr.bf16.gmra.mrb[0].mxu0 %v179
  %v472 = vpop.f32.mrb[0].mxu0
  %v473 = vadd.f32 0.0, %v472
  %v474 = vpop.f32.mrb[0].mxu0
  %v475 = vpop.f32.mrb[0].mxu0
  %v476 = vadd.f32 0.0, %v475
  %v477 = vpop.f32.mrb[0].mxu0
  %478 = vmatprep.mubr.bf16.mxu0 0
  %479 = vmatmul.mubr.bf16.gmra.mrb[0].mxu0 %v180
  %v480 = vpop.f32.mrb[0].mxu0
  %v481 = vadd.f32 0.0, %v480
  %v482 = vpop.f32.mrb[0].mxu0
  %v483 = vpop.f32.mrb[0].mxu0
  %v484 = vadd.f32 0.0, %v483
  %v485 = vpop.f32.mrb[0].mxu0
  %486 = vdwg.mxu0
  %v487 = vpack.c.bf16 %v428, %v425
  %v488 = vpack.c.bf16 %v436, %v433
  %v489 = vpack.c.bf16 %v444, %v441
  %v490 = vpack.c.bf16 %v452, %v449
  %v491 = vpack.c.bf16 %v460, %v457
  %v492 = vpack.c.bf16 %v468, %v465
  %v493 = vpack.c.bf16 %v476, %v473
  %v494 = vpack.c.bf16 %v484, %v481
  %495 = vmatprep.subr.bf16.mxu0 0
  %496 = vmatpush1.bf16.xpose.msra.mxu0 %v173
  %497 = vmatprep.subr.bf16.mxu0 0
  %498 = vmatpush1.bf16.xpose.msra.mxu0 %v174
  %499 = vmatprep.subr.bf16.mxu0 0
  %500 = vmatpush1.bf16.xpose.msra.mxu0 %v175
  %501 = vmatprep.subr.bf16.mxu0 0
  %502 = vmatpush1.bf16.xpose.msra.mxu0 %v176
  %503 = vmatprep.subr.bf16.mxu0 0
  %504 = vmatpush1.bf16.xpose.msra.mxu0 %v177
  %505 = vmatprep.subr.bf16.mxu0 0
  %506 = vmatpush1.bf16.xpose.msra.mxu0 %v178
  %507 = vmatprep.subr.bf16.mxu0 0
  %508 = vmatpush1.bf16.xpose.msra.mxu0 %v179
  %509 = vmatprep.subr.bf16.mxu0 0
  %510 = vmatpush1.bf16.xpose.msra.mxu0 %v180
  %511 = vmatprep.subr.bf16.mxu0 0
  %512 = vmatpush1.bf16.xpose.msra.mxu0 0
  %513 = vmatprep.subr.bf16.mxu0 0
  %514 = vmatpush1.bf16.xpose.msra.mxu0 0
  %515 = vmatprep.subr.bf16.mxu0 0
  %516 = vmatpush1.bf16.xpose.msra.mxu0 0
  %517 = vmatprep.subr.bf16.mxu0 0
  %518 = vmatpush1.bf16.xpose.msra.mxu0 0
  %519 = vmatprep.subr.bf16.mxu0 0
  %520 = vmatpush1.bf16.xpose.msra.mxu0 0
  %521 = vmatprep.subr.bf16.mxu0 0
  %522 = vmatpush1.bf16.xpose.msra.mxu0 0
  %523 = vmatprep.subr.bf16.mxu0 0
  %524 = vmatpush1.bf16.xpose.msra.mxu0 0
  %525 = vmatprep.subr.bf16.mxu0 0
  %526 = vmatpush1.bf16.xpose.msra.mxu0 0
  %527 = vmatprep.mubr.bf16.mxu0 0
  %528 = vmatmul.mubr.bf16.gmra.mrb[0].mxu0 %v487
  %v529 = vpop.f32.mrb[0].mxu0
  %v530 = vadd.f32 0.0, %v529
  %v531 = vpop.f32.mrb[0].mxu0
  %v532 = vpop.f32.mrb[0].mxu0
  %v533 = vadd.f32 0.0, %v532
  %v534 = vpop.f32.mrb[0].mxu0
  %535 = vmatprep.mubr.bf16.mxu0 0
  %536 = vmatmul.mubr.bf16.gmra.mrb[0].mxu0 %v488
  %v537 = vpop.f32.mrb[0].mxu0
  %v538 = vadd.f32 0.0, %v537
  %v539 = vpop.f32.mrb[0].mxu0
  %v540 = vpop.f32.mrb[0].mxu0
  %v541 = vadd.f32 0.0, %v540
  %v542 = vpop.f32.mrb[0].mxu0
  %543 = vmatprep.mubr.bf16.mxu0 0
  %544 = vmatmul.mubr.bf16.gmra.mrb[0].mxu0 %v489
  %v545 = vpop.f32.mrb[0].mxu0
  %v546 = vadd.f32 0.0, %v545
  %v547 = vpop.f32.mrb[0].mxu0
  %v548 = vpop.f32.mrb[0].mxu0
  %v549 = vadd.f32 0.0, %v548
  %v550 = vpop.f32.mrb[0].mxu0
  %551 = vmatprep.mubr.bf16.mxu0 0
  %552 = vmatmul.mubr.bf16.gmra.mrb[0].mxu0 %v490
  %v553 = vpop.f32.mrb[0].mxu0
  %v554 = vadd.f32 0.0, %v553
  %v555 = vpop.f32.mrb[0].mxu0
  %v556 = vpop.f32.mrb[0].mxu0
  %v557 = vadd.f32 0.0, %v556
  %v558 = vpop.f32.mrb[0].mxu0
  %559 = vmatprep.mubr.bf16.mxu0 0
  %560 = vmatmul.mubr.bf16.gmra.mrb[0].mxu0 %v491
  %v561 = vpop.f32.mrb[0].mxu0
  %v562 = vadd.f32 0.0, %v561
  %v563 = vpop.f32.mrb[0].mxu0
  %v564 = vpop.f32.mrb[0].mxu0
  %v565 = vadd.f32 0.0, %v564
  %v566 = vpop.f32.mrb[0].mxu0
  %567 = vmatprep.mubr.bf16.mxu0 0
  %568 = vmatmul.mubr.bf16.gmra.mrb[0].mxu0 %v492
  %v569 = vpop.f32.mrb[0].mxu0
  %v570 = vadd.f32 0.0, %v569
  %v571 = vpop.f32.mrb[0].mxu0
  %v572 = vpop.f32.mrb[0].mxu0
  %v573 = vadd.f32 0.0, %v572
  %v574 = vpop.f32.mrb[0].mxu0
  %575 = vmatprep.mubr.bf16.mxu0 0
  %576 = vmatmul.mubr.bf16.gmra.mrb[0].mxu0 %v493
  %v577 = vpop.f32.mrb[0].mxu0
  %v578 = vadd.f32 0.0, %v577
  %v579 = vpop.f32.mrb[0].mxu0
  %v580 = vpop.f32.mrb[0].mxu0
  %v581 = vadd.f32 0.0, %v580
  %v582 = vpop.f32.mrb[0].mxu0
  %583 = vmatprep.mubr.bf16.mxu0 0
  %584 = vmatmul.mubr.bf16.gmra.mrb[0].mxu0 %v494
  %v585 = vpop.f32.mrb[0].mxu0
  %v586 = vadd.f32 0.0, %v585
  %v587 = vpop.f32.mrb[0].mxu0
  %v588 = vpop.f32.mrb[0].mxu0
  %v589 = vadd.f32 0.0, %v588
  %v590 = vpop.f32.mrb[0].mxu0
  %591 = vdwg.mxu0
  %592 = vst [vmem:[%s7] sm:$0xff] %v530
  %593 = vst [vmem:[%s7 + $0x8] sm:$0xff] %v533
  %594 = vst [vmem:[%s7 + $0x10] sm:$0xff] %v538
  %595 = vst [vmem:[%s7 + $0x18] sm:$0xff] %v541
  %596 = vst [vmem:[%s7 + $0x20] sm:$0xff] %v546
  %597 = vst [vmem:[%s7 + $0x28] sm:$0xff] %v549
  %598 = vst [vmem:[%s7 + $0x30] sm:$0xff] %v554
  %599 = vst [vmem:[%s7 + $0x38] sm:$0xff] %v557
  %600 = vst [vmem:[%s7 + $0x40] sm:$0xff] %v562
  %601 = vst [vmem:[%s7 + $0x48] sm:$0xff] %v565
  %602 = vst [vmem:[%s7 + $0x50] sm:$0xff] %v570
  %603 = vst [vmem:[%s7 + $0x58] sm:$0xff] %v573
  %604 = vst [vmem:[%s7 + $0x60] sm:$0xff] %v578
  %605 = vst [vmem:[%s7 + $0x68] sm:$0xff] %v581
  %606 = vst [vmem:[%s7 + $0x70] sm:$0xff] %v586
  %607 = vst [vmem:[%s7 + $0x78] sm:$0xff] %v589
  %v608 = vpack.c.bf16 %v533, %v530
  %v609 = vpack.c.bf16 %v541, %v538
  %v610 = vpack.c.bf16 %v549, %v546
  %v611 = vpack.c.bf16 %v557, %v554
  %v612 = vpack.c.bf16 %v565, %v562
  %v613 = vpack.c.bf16 %v573, %v570
  %v614 = vpack.c.bf16 %v581, %v578
  %v615 = vpack.c.bf16 %v589, %v586
  %v616 = vld [vmem:[%s3] sm:$0xf]
  %v617 = vld [vmem:[%s3 + $0x4] sm:$0xf]
  %v618 = vld [vmem:[%s3 + $0x8] sm:$0xf]
  %v619 = vld [vmem:[%s3 + $0xc] sm:$0xf]
  %v620 = vld [vmem:[%s3 + $0x10] sm:$0xf]
  %v621 = vld [vmem:[%s3 + $0x14] sm:$0xf]
  %v622 = vld [vmem:[%s3 + $0x18] sm:$0xf]
  %v623 = vld [vmem:[%s3 + $0x1c] sm:$0xf]
  %v624 = vld [vmem:[%s3 + $0x20] sm:$0xf]
  %v625 = vld [vmem:[%s3 + $0x24] sm:$0xf]
  %v626 = vld [vmem:[%s3 + $0x28] sm:$0xf]
  %v627 = vld [vmem:[%s3 + $0x2c] sm:$0xf]
  %v628 = vld [vmem:[%s3 + $0x30] sm:$0xf]
  %v629 = vld [vmem:[%s3 + $0x34] sm:$0xf]
  %v630 = vld [vmem:[%s3 + $0x38] sm:$0xf]
  %v631 = vld [vmem:[%s3 + $0x3c] sm:$0xf]
  %v632 = vld [vmem:[%s4] sm:$0x1]
  %633 = vadd.xlane.f32.xlu0 %v530
  %v634 = vpop.xlane.xlu0 %633
  %635 = vadd.xlane.f32.xlu0 %v533
  %v636 = vpop.xlane.xlu0 %635
  %637 = vadd.xlane.f32.xlu0 %v538
  %v638 = vpop.xlane.xlu0 %637
  %639 = vadd.xlane.f32.xlu0 %v541
  %v640 = vpop.xlane.xlu0 %639
  %641 = vadd.xlane.f32.xlu0 %v546
  %v642 = vpop.xlane.xlu0 %641
  %643 = vadd.xlane.f32.xlu0 %v549
  %v644 = vpop.xlane.xlu0 %643
  %645 = vadd.xlane.f32.xlu0 %v554
  %v646 = vpop.xlane.xlu0 %645
  %647 = vadd.xlane.f32.xlu0 %v557
  %v648 = vpop.xlane.xlu0 %647
  %649 = vadd.xlane.f32.xlu0 %v562
  %v650 = vpop.xlane.xlu0 %649
  %651 = vadd.xlane.f32.xlu0 %v565
  %v652 = vpop.xlane.xlu0 %651
  %653 = vadd.xlane.f32.xlu0 %v570
  %v654 = vpop.xlane.xlu0 %653
  %655 = vadd.xlane.f32.xlu0 %v573
  %v656 = vpop.xlane.xlu0 %655
  %657 = vadd.xlane.f32.xlu0 %v578
  %v658 = vpop.xlane.xlu0 %657
  %659 = vadd.xlane.f32.xlu0 %v581
  %v660 = vpop.xlane.xlu0 %659
  %661 = vadd.xlane.f32.xlu0 %v586
  %v662 = vpop.xlane.xlu0 %661
  %663 = vadd.xlane.f32.xlu0 %v589
  %v664 = vpop.xlane.xlu0 %663
  %v665 = vadd.f32 %v634, 2.0
  %v666 = vadd.f32 %v636, 2.0
  %v667 = vadd.f32 %v638, 2.0
  %v668 = vadd.f32 %v640, 2.0
  %v669 = vadd.f32 %v642, 2.0
  %v670 = vadd.f32 %v644, 2.0
  %v671 = vadd.f32 %v646, 2.0
  %v672 = vadd.f32 %v648, 2.0
  %v673 = vadd.f32 %v650, 2.0
  %v674 = vadd.f32 %v652, 2.0
  %v675 = vadd.f32 %v654, 2.0
  %v676 = vadd.f32 %v656, 2.0
  %v677 = vadd.f32 %v658, 2.0
  %v678 = vadd.f32 %v660, 2.0
  %v679 = vadd.f32 %v662, 2.0
  %v680 = vadd.f32 %v664, 2.0
  %v681 = vrsqrt.pop %v665
  %v682 = vrsqrt.pop %v666
  %v683 = vrsqrt.pop %v667
  %v684 = vrsqrt.pop %v668
  %v685 = vrsqrt.pop %v669
  %v686 = vrsqrt.pop %v670
  %v687 = vrsqrt.pop %v671
  %v688 = vrsqrt.pop %v672
  %v689 = vrsqrt.pop %v673
  %v690 = vrsqrt.pop %v674
  %v691 = vrsqrt.pop %v675
  %v692 = vrsqrt.pop %v676
  %v693 = vrsqrt.pop %v677
  %v694 = vrsqrt.pop %v678
  %v695 = vrsqrt.pop %v679
  %v696 = vrsqrt.pop %v680
  %v697 = vpack.c.bf16 %v323, %v320
  %v698 = vpack.c.bf16 %v331, %v328
  %v699 = vpack.c.bf16 %v339, %v336
  %v700 = vpack.c.bf16 %v347, %v344
  %v701 = vpack.c.bf16 %v355, %v352
  %v702 = vpack.c.bf16 %v363, %v360
  %v703 = vpack.c.bf16 %v371, %v368
  %v704 = vpack.c.bf16 %v379, %v376
  %v721 = vunpack.c.l.b16 %v616
  %v722 = vunpack.c.l.b16 %v617
  %v723 = vunpack.c.l.b16 %v618
  %v724 = vunpack.c.l.b16 %v619
  %v725 = vunpack.c.l.b16 %v620
  %v726 = vunpack.c.l.b16 %v621
  %v727 = vunpack.c.l.b16 %v622
  %v728 = vunpack.c.l.b16 %v623
  %v729 = vunpack.c.l.b16 %v624
  %v730 = vunpack.c.l.b16 %v625
  %v731 = vunpack.c.l.b16 %v626
  %v732 = vunpack.c.l.b16 %v627
  %v733 = vunpack.c.l.b16 %v628
  %v734 = vunpack.c.l.b16 %v629
  %v735 = vunpack.c.l.b16 %v630
  %v736 = vunpack.c.l.b16 %v631
  %v737 = vpack.c.b16 %v722, %v721
  %v738 = vpack.c.b16 %v724, %v723
  %v739 = vpack.c.b16 %v726, %v725
  %v740 = vpack.c.b16 %v728, %v727
  %v741 = vpack.c.b16 %v730, %v729
  %v742 = vpack.c.b16 %v732, %v731
  %v743 = vpack.c.b16 %v734, %v733
  %v744 = vpack.c.b16 %v736, %v735
  %753 = vmatprep.subr.bf16.mxu0 0
  %754 = vmatpush1.bf16.msra.mxu0 %v737
  %755 = vmatprep.subr.bf16.mxu0 0
  %756 = vmatpush1.bf16.msra.mxu0 %v738
  %757 = vmatprep.subr.bf16.mxu0 0
  %758 = vmatpush1.bf16.msra.mxu0 %v739
  %759 = vmatprep.subr.bf16.mxu0 0
  %760 = vmatpush1.bf16.msra.mxu0 %v740
  %761 = vmatprep.subr.bf16.mxu0 0
  %762 = vmatpush1.bf16.msra.mxu0 %v741
  %763 = vmatprep.subr.bf16.mxu0 0
  %764 = vmatpush1.bf16.msra.mxu0 %v742
  %765 = vmatprep.subr.bf16.mxu0 0
  %766 = vmatpush1.bf16.msra.mxu0 %v743
  %767 = vmatprep.subr.bf16.mxu0 0
  %768 = vmatpush1.bf16.msra.mxu0 %v744
  %769 = vmatprep.subr.bf16.mxu0 0
  %770 = vmatpush1.bf16.msra.mxu0 0
  %771 = vmatprep.subr.bf16.mxu0 0
  %772 = vmatpush1.bf16.msra.mxu0 0
  %773 = vmatprep.subr.bf16.mxu0 0
  %774 = vmatpush1.bf16.msra.mxu0 0
  %775 = vmatprep.subr.bf16.mxu0 0
  %776 = vmatpush1.bf16.msra.mxu0 0
  %777 = vmatprep.subr.bf16.mxu0 0
  %778 = vmatpush1.bf16.msra.mxu0 0
  %779 = vmatprep.subr.bf16.mxu0 0
  %780 = vmatpush1.bf16.msra.mxu0 0
  %781 = vmatprep.subr.bf16.mxu0 0
  %782 = vmatpush1.bf16.msra.mxu0 0
  %783 = vmatprep.subr.bf16.mxu0 0
  %784 = vmatpush1.bf16.msra.mxu0 0
  %785 = vmatprep.mubr.bf16.mxu0 0
  %786 = vmatmul.mubr.bf16.gmra.mrb[0].mxu0 %v697
  %v787 = vpop.f32.mrb[0].mxu0
  %v788 = vadd.f32 0.0, %v787
  %v789 = vpop.f32.mrb[0].mxu0
  %v790 = vpop.f32.mrb[0].mxu0
  %v791 = vadd.f32 0.0, %v790
  %v792 = vpop.f32.mrb[0].mxu0
  %793 = vmatprep.mubr.bf16.mxu0 0
  %794 = vmatmul.mubr.bf16.gmra.mrb[0].mxu0 %v698
  %v795 = vpop.f32.mrb[0].mxu0
  %v796 = vadd.f32 0.0, %v795
  %v797 = vpop.f32.mrb[0].mxu0
  %v798 = vpop.f32.mrb[0].mxu0
  %v799 = vadd.f32 0.0, %v798
  %v800 = vpop.f32.mrb[0].mxu0
  %801 = vmatprep.mubr.bf16.mxu0 0
  %802 = vmatmul.mubr.bf16.gmra.mrb[0].mxu0 %v699
  %v803 = vpop.f32.mrb[0].mxu0
  %v804 = vadd.f32 0.0, %v803
  %v805 = vpop.f32.mrb[0].mxu0
  %v806 = vpop.f32.mrb[0].mxu0
  %v807 = vadd.f32 0.0, %v806
  %v808 = vpop.f32.mrb[0].mxu0
  %809 = vmatprep.mubr.bf16.mxu0 0
  %810 = vmatmul.mubr.bf16.gmra.mrb[0].mxu0 %v700
  %v811 = vpop.f32.mrb[0].mxu0
  %v812 = vadd.f32 0.0, %v811
  %v813 = vpop.f32.mrb[0].mxu0
  %v814 = vpop.f32.mrb[0].mxu0
  %v815 = vadd.f32 0.0, %v814
  %v816 = vpop.f32.mrb[0].mxu0
  %817 = vmatprep.mubr.bf16.mxu0 0
  %818 = vmatmul.mubr.bf16.gmra.mrb[0].mxu0 %v701
  %v819 = vpop.f32.mrb[0].mxu0
  %v820 = vadd.f32 0.0, %v819
  %v821 = vpop.f32.mrb[0].mxu0
  %v822 = vpop.f32.mrb[0].mxu0
  %v823 = vadd.f32 0.0, %v822
  %v824 = vpop.f32.mrb[0].mxu0
  %825 = vmatprep.mubr.bf16.mxu0 0
  %826 = vmatmul.mubr.bf16.gmra.mrb[0].mxu0 %v702
  %v827 = vpop.f32.mrb[0].mxu0
  %v828 = vadd.f32 0.0, %v827
  %v829 = vpop.f32.mrb[0].mxu0
  %v830 = vpop.f32.mrb[0].mxu0
  %v831 = vadd.f32 0.0, %v830
  %v832 = vpop.f32.mrb[0].mxu0
  %833 = vmatprep.mubr.bf16.mxu0 0
  %834 = vmatmul.mubr.bf16.gmra.mrb[0].mxu0 %v703
  %v835 = vpop.f32.mrb[0].mxu0
  %v836 = vadd.f32 0.0, %v835
  %v837 = vpop.f32.mrb[0].mxu0
  %v838 = vpop.f32.mrb[0].mxu0
  %v839 = vadd.f32 0.0, %v838
  %v840 = vpop.f32.mrb[0].mxu0
  %841 = vmatprep.mubr.bf16.mxu0 0
  %842 = vmatmul.mubr.bf16.gmra.mrb[0].mxu0 %v704
  %v843 = vpop.f32.mrb[0].mxu0
  %v844 = vadd.f32 0.0, %v843
  %v845 = vpop.f32.mrb[0].mxu0
  %v846 = vpop.f32.mrb[0].mxu0
  %v847 = vadd.f32 0.0, %v846
  %v848 = vpop.f32.mrb[0].mxu0
  %849 = vdwg.mxu0
  %v850 = vmul.f32 %v681, %v788
  %v851 = vmul.f32 %v682, %v791
  %v852 = vmul.f32 %v683, %v796
  %v853 = vmul.f32 %v684, %v799
  %v854 = vmul.f32 %v685, %v804
  %v855 = vmul.f32 %v686, %v807
  %v856 = vmul.f32 %v687, %v812
  %v857 = vmul.f32 %v688, %v815
  %v858 = vmul.f32 %v689, %v820
  %v859 = vmul.f32 %v690, %v823
  %v860 = vmul.f32 %v691, %v828
  %v861 = vmul.f32 %v692, %v831
  %v862 = vmul.f32 %v693, %v836
  %v863 = vmul.f32 %v694, %v839
  %v864 = vmul.f32 %v695, %v844
  %v865 = vmul.f32 %v696, %v847
  %v866 = vpack.c.bf16 %v851, %v850
  %v867 = vpack.c.bf16 %v853, %v852
  %v868 = vpack.c.bf16 %v855, %v854
  %v869 = vpack.c.bf16 %v857, %v856
  %v870 = vpack.c.bf16 %v859, %v858
  %v871 = vpack.c.bf16 %v861, %v860
  %v872 = vpack.c.bf16 %v863, %v862
  %v873 = vpack.c.bf16 %v865, %v864
  %874 = vmatprep.subr.bf16.mxu0 0
  %875 = vmatpush1.bf16.msra.mxu0 %v866
  %876 = vmatprep.subr.bf16.mxu0 0
  %877 = vmatpush1.bf16.msra.mxu0 %v867
  %878 = vmatprep.subr.bf16.mxu0 0
  %879 = vmatpush1.bf16.msra.mxu0 %v868
  %880 = vmatprep.subr.bf16.mxu0 0
  %881 = vmatpush1.bf16.msra.mxu0 %v869
  %882 = vmatprep.subr.bf16.mxu0 0
  %883 = vmatpush1.bf16.msra.mxu0 %v870
  %884 = vmatprep.subr.bf16.mxu0 0
  %885 = vmatpush1.bf16.msra.mxu0 %v871
  %886 = vmatprep.subr.bf16.mxu0 0
  %887 = vmatpush1.bf16.msra.mxu0 %v872
  %888 = vmatprep.subr.bf16.mxu0 0
  %889 = vmatpush1.bf16.msra.mxu0 %v873
  %890 = vmatprep.subr.bf16.mxu0 0
  %891 = vmatpush1.bf16.msra.mxu0 0
  %892 = vmatprep.subr.bf16.mxu0 0
  %893 = vmatpush1.bf16.msra.mxu0 0
  %894 = vmatprep.subr.bf16.mxu0 0
  %895 = vmatpush1.bf16.msra.mxu0 0
  %896 = vmatprep.subr.bf16.mxu0 0
  %897 = vmatpush1.bf16.msra.mxu0 0
  %898 = vmatprep.subr.bf16.mxu0 0
  %899 = vmatpush1.bf16.msra.mxu0 0
  %900 = vmatprep.subr.bf16.mxu0 0
  %901 = vmatpush1.bf16.msra.mxu0 0
  %902 = vmatprep.subr.bf16.mxu0 0
  %903 = vmatpush1.bf16.msra.mxu0 0
  %904 = vmatprep.subr.bf16.mxu0 0
  %905 = vmatpush1.bf16.msra.mxu0 0
  %906 = vmatprep.mubr.bf16.mxu0 0
  %907 = vmatmul.mubr.bf16.gmra.mrb[0].mxu0 %v608
  %v908 = vpop.f32.mrb[0].mxu0
  %v909 = vadd.f32 0.0, %v908
  %v910 = vpop.f32.mrb[0].mxu0
  %v911 = vpop.f32.mrb[0].mxu0
  %v912 = vadd.f32 0.0, %v911
  %v913 = vpop.f32.mrb[0].mxu0
  %914 = vmatprep.mubr.bf16.mxu0 0
  %915 = vmatmul.mubr.bf16.gmra.mrb[0].mxu0 %v609
  %v916 = vpop.f32.mrb[0].mxu0
  %v917 = vadd.f32 0.0, %v916
  %v918 = vpop.f32.mrb[0].mxu0
  %v919 = vpop.f32.mrb[0].mxu0
  %v920 = vadd.f32 0.0, %v919
  %v921 = vpop.f32.mrb[0].mxu0
  %922 = vmatprep.mubr.bf16.mxu0 0
  %923 = vmatmul.mubr.bf16.gmra.mrb[0].mxu0 %v610
  %v924 = vpop.f32.mrb[0].mxu0
  %v925 = vadd.f32 0.0, %v924
  %v926 = vpop.f32.mrb[0].mxu0
  %v927 = vpop.f32.mrb[0].mxu0
  %v928 = vadd.f32 0.0, %v927
  %v929 = vpop.f32.mrb[0].mxu0
  %930 = vmatprep.mubr.bf16.mxu0 0
  %931 = vmatmul.mubr.bf16.gmra.mrb[0].mxu0 %v611
  %v932 = vpop.f32.mrb[0].mxu0
  %v933 = vadd.f32 0.0, %v932
  %v934 = vpop.f32.mrb[0].mxu0
  %v935 = vpop.f32.mrb[0].mxu0
  %v936 = vadd.f32 0.0, %v935
  %v937 = vpop.f32.mrb[0].mxu0
  %938 = vmatprep.mubr.bf16.mxu0 0
  %939 = vmatmul.mubr.bf16.gmra.mrb[0].mxu0 %v612
  %v940 = vpop.f32.mrb[0].mxu0
  %v941 = vadd.f32 0.0, %v940
  %v942 = vpop.f32.mrb[0].mxu0
  %v943 = vpop.f32.mrb[0].mxu0
  %v944 = vadd.f32 0.0, %v943
  %v945 = vpop.f32.mrb[0].mxu0
  %946 = vmatprep.mubr.bf16.mxu0 0
  %947 = vmatmul.mubr.bf16.gmra.mrb[0].mxu0 %v613
  %v948 = vpop.f32.mrb[0].mxu0
  %v949 = vadd.f32 0.0, %v948
  %v950 = vpop.f32.mrb[0].mxu0
  %v951 = vpop.f32.mrb[0].mxu0
  %v952 = vadd.f32 0.0, %v951
  %v953 = vpop.f32.mrb[0].mxu0
  %954 = vmatprep.mubr.bf16.mxu0 0
  %955 = vmatmul.mubr.bf16.gmra.mrb[0].mxu0 %v614
  %v956 = vpop.f32.mrb[0].mxu0
  %v957 = vadd.f32 0.0, %v956
  %v958 = vpop.f32.mrb[0].mxu0
  %v959 = vpop.f32.mrb[0].mxu0
  %v960 = vadd.f32 0.0, %v959
  %v961 = vpop.f32.mrb[0].mxu0
  %962 = vmatprep.mubr.bf16.mxu0 0
  %963 = vmatmul.mubr.bf16.gmra.mrb[0].mxu0 %v615
  %v964 = vpop.f32.mrb[0].mxu0
  %v965 = vadd.f32 0.0, %v964
  %v966 = vpop.f32.mrb[0].mxu0
  %v967 = vpop.f32.mrb[0].mxu0
  %v968 = vadd.f32 0.0, %v967
  %v969 = vpop.f32.mrb[0].mxu0
  %970 = vdwg.mxu0
  %v971 = vmul.f32 %v681, %v909
  %v972 = vmul.f32 %v682, %v912
  %v973 = vmul.f32 %v683, %v917
  %v974 = vmul.f32 %v684, %v920
  %v975 = vmul.f32 %v685, %v925
  %v976 = vmul.f32 %v686, %v928
  %v977 = vmul.f32 %v687, %v933
  %v978 = vmul.f32 %v688, %v936
  %v979 = vmul.f32 %v689, %v941
  %v980 = vmul.f32 %v690, %v944
  %v981 = vmul.f32 %v691, %v949
  %v982 = vmul.f32 %v692, %v952
  %v983 = vmul.f32 %v693, %v957
  %v984 = vmul.f32 %v694, %v960
  %v985 = vmul.f32 %v695, %v965
  %v986 = vmul.f32 %v696, %v968
  %v987 = vmul.f32 %v681, %v850
  %v988 = vmul.f32 %v682, %v851
  %v989 = vmul.f32 %v683, %v852
  %v990 = vmul.f32 %v684, %v853
  %v991 = vmul.f32 %v685, %v854
  %v992 = vmul.f32 %v686, %v855
  %v993 = vmul.f32 %v687, %v856
  %v994 = vmul.f32 %v688, %v857
  %v995 = vmul.f32 %v689, %v858
  %v996 = vmul.f32 %v690, %v859
  %v997 = vmul.f32 %v691, %v860
  %v998 = vmul.f32 %v692, %v861
  %v999 = vmul.f32 %v693, %v862
  %v1000 = vmul.f32 %v694, %v863
  %v1001 = vmul.f32 %v695, %v864
  %v1002 = vmul.f32 %v696, %v865
  %v1003 = vmul.f32 %v987, 2.0
  %v1004 = vmul.f32 %v988, 2.0
  %v1005 = vmul.f32 %v989, 2.0
  %v1006 = vmul.f32 %v990, 2.0
  %v1007 = vmul.f32 %v991, 2.0
  %v1008 = vmul.f32 %v992, 2.0
  %v1009 = vmul.f32 %v993, 2.0
  %v1010 = vmul.f32 %v994, 2.0
  %v1011 = vmul.f32 %v995, 2.0
  %v1012 = vmul.f32 %v996, 2.0
  %v1013 = vmul.f32 %v997, 2.0
  %v1014 = vmul.f32 %v998, 2.0
  %v1015 = vmul.f32 %v999, 2.0
  %v1016 = vmul.f32 %v1000, 2.0
  %v1017 = vmul.f32 %v1001, 2.0
  %v1018 = vmul.f32 %v1002, 2.0
  %v1019 = vadd.f32 %v971, %v1003
  %v1020 = vadd.f32 %v972, %v1004
  %v1021 = vadd.f32 %v973, %v1005
  %v1022 = vadd.f32 %v974, %v1006
  %v1023 = vadd.f32 %v975, %v1007
  %v1024 = vadd.f32 %v976, %v1008
  %v1025 = vadd.f32 %v977, %v1009
  %v1026 = vadd.f32 %v978, %v1010
  %v1027 = vadd.f32 %v979, %v1011
  %v1028 = vadd.f32 %v980, %v1012
  %v1029 = vadd.f32 %v981, %v1013
  %v1030 = vadd.f32 %v982, %v1014
  %v1031 = vadd.f32 %v983, %v1015
  %v1032 = vadd.f32 %v984, %v1016
  %v1033 = vadd.f32 %v985, %v1017
  %v1034 = vadd.f32 %v986, %v1018
  %v1036 = vlaneseq
  %v1037 = vshrl.u32 %v1036, 7
  %v1038 = vsub.s32 0, %v1037
  %v1039 = vrot.slane %v632, %v1038
  %v1041 = vadd.f32 %v1019, %v1039
  %v1042 = vadd.f32 %v1020, %v1039
  %v1043 = vadd.f32 %v1021, %v1039
  %v1044 = vadd.f32 %v1022, %v1039
  %v1045 = vadd.f32 %v1023, %v1039
  %v1046 = vadd.f32 %v1024, %v1039
  %v1047 = vadd.f32 %v1025, %v1039
  %v1048 = vadd.f32 %v1026, %v1039
  %v1049 = vadd.f32 %v1027, %v1039
  %v1050 = vadd.f32 %v1028, %v1039
  %v1051 = vadd.f32 %v1029, %v1039
  %v1052 = vadd.f32 %v1030, %v1039
  %v1053 = vadd.f32 %v1031, %v1039
  %v1054 = vadd.f32 %v1032, %v1039
  %v1055 = vadd.f32 %v1033, %v1039
  %v1056 = vadd.f32 %v1034, %v1039
  %v1057 = vmax.f32 %v1041, 0.0
  %v1058 = vmax.f32 %v1042, 0.0
  %v1059 = vmax.f32 %v1043, 0.0
  %v1060 = vmax.f32 %v1044, 0.0
  %v1061 = vmax.f32 %v1045, 0.0
  %v1062 = vmax.f32 %v1046, 0.0
  %v1063 = vmax.f32 %v1047, 0.0
  %v1064 = vmax.f32 %v1048, 0.0
  %v1065 = vmax.f32 %v1049, 0.0
  %v1066 = vmax.f32 %v1050, 0.0
  %v1067 = vmax.f32 %v1051, 0.0
  %v1068 = vmax.f32 %v1052, 0.0
  %v1069 = vmax.f32 %v1053, 0.0
  %v1070 = vmax.f32 %v1054, 0.0
  %v1071 = vmax.f32 %v1055, 0.0
  %v1072 = vmax.f32 %v1056, 0.0
  %v1073 = vld [vmem:[%s5] sm:$0x1]
  %v1075 = vlaneseq
  %v1076 = vshrl.u32 %v1075, 7
  %v1077 = vsub.s32 0, %v1076
  %v1078 = vrot.slane %v1073, %v1077
  %v1080 = vmul.f32 %v1057, %v1078
  %v1081 = vmul.f32 %v1058, %v1078
  %v1082 = vmul.f32 %v1059, %v1078
  %v1083 = vmul.f32 %v1060, %v1078
  %v1084 = vmul.f32 %v1061, %v1078
  %v1085 = vmul.f32 %v1062, %v1078
  %v1086 = vmul.f32 %v1063, %v1078
  %v1087 = vmul.f32 %v1064, %v1078
  %v1088 = vmul.f32 %v1065, %v1078
  %v1089 = vmul.f32 %v1066, %v1078
  %v1090 = vmul.f32 %v1067, %v1078
  %v1091 = vmul.f32 %v1068, %v1078
  %v1092 = vmul.f32 %v1069, %v1078
  %v1093 = vmul.f32 %v1070, %v1078
  %v1094 = vmul.f32 %v1071, %v1078
  %v1095 = vmul.f32 %v1072, %v1078
  %1096 = vadd.xlane.f32.xlu0 %v1080
  %v1097 = vpop.xlane.xlu0 %1096
  %1098 = vadd.xlane.f32.xlu0 %v1081
  %v1099 = vpop.xlane.xlu0 %1098
  %1100 = vadd.xlane.f32.xlu0 %v1082
  %v1101 = vpop.xlane.xlu0 %1100
  %1102 = vadd.xlane.f32.xlu0 %v1083
  %v1103 = vpop.xlane.xlu0 %1102
  %1104 = vadd.xlane.f32.xlu0 %v1084
  %v1105 = vpop.xlane.xlu0 %1104
  %1106 = vadd.xlane.f32.xlu0 %v1085
  %v1107 = vpop.xlane.xlu0 %1106
  %1108 = vadd.xlane.f32.xlu0 %v1086
  %v1109 = vpop.xlane.xlu0 %1108
  %1110 = vadd.xlane.f32.xlu0 %v1087
  %v1111 = vpop.xlane.xlu0 %1110
  %1112 = vadd.xlane.f32.xlu0 %v1088
  %v1113 = vpop.xlane.xlu0 %1112
  %1114 = vadd.xlane.f32.xlu0 %v1089
  %v1115 = vpop.xlane.xlu0 %1114
  %1116 = vadd.xlane.f32.xlu0 %v1090
  %v1117 = vpop.xlane.xlu0 %1116
  %1118 = vadd.xlane.f32.xlu0 %v1091
  %v1119 = vpop.xlane.xlu0 %1118
  %1120 = vadd.xlane.f32.xlu0 %v1092
  %v1121 = vpop.xlane.xlu0 %1120
  %1122 = vadd.xlane.f32.xlu0 %v1093
  %v1123 = vpop.xlane.xlu0 %1122
  %1124 = vadd.xlane.f32.xlu0 %v1094
  %v1125 = vpop.xlane.xlu0 %1124
  %1126 = vadd.xlane.f32.xlu0 %v1095
  %v1127 = vpop.xlane.xlu0 %1126
  %v1128 = vtanh.pop %v1097
  %v1129 = vtanh.pop %v1099
  %v1130 = vtanh.pop %v1101
  %v1131 = vtanh.pop %v1103
  %v1132 = vtanh.pop %v1105
  %v1133 = vtanh.pop %v1107
  %v1134 = vtanh.pop %v1109
  %v1135 = vtanh.pop %v1111
  %v1136 = vtanh.pop %v1113
  %v1137 = vtanh.pop %v1115
  %v1138 = vtanh.pop %v1117
  %v1139 = vtanh.pop %v1119
  %v1140 = vtanh.pop %v1121
  %v1141 = vtanh.pop %v1123
  %v1142 = vtanh.pop %v1125
  %v1143 = vtanh.pop %v1127
  %vm1144 = vcmp.eq.s32.totalorder %v76, 127
  %v1145 = vsel %vm1144, %v1128, %v1057
  %v1146 = vsel %vm1144, %v1129, %v1058
  %v1147 = vsel %vm1144, %v1130, %v1059
  %v1148 = vsel %vm1144, %v1131, %v1060
  %v1149 = vsel %vm1144, %v1132, %v1061
  %v1150 = vsel %vm1144, %v1133, %v1062
  %v1151 = vsel %vm1144, %v1134, %v1063
  %v1152 = vsel %vm1144, %v1135, %v1064
  %v1153 = vsel %vm1144, %v1136, %v1065
  %v1154 = vsel %vm1144, %v1137, %v1066
  %v1155 = vsel %vm1144, %v1138, %v1067
  %v1156 = vsel %vm1144, %v1139, %v1068
  %v1157 = vsel %vm1144, %v1140, %v1069
  %v1158 = vsel %vm1144, %v1141, %v1070
  %v1159 = vsel %vm1144, %v1142, %v1071
  %v1160 = vsel %vm1144, %v1143, %v1072
  %1161 = vst [vmem:[%s6] sm:$0xff] %v1145
  %1162 = vst [vmem:[%s6 + $0x8] sm:$0xff] %v1146
  %1163 = vst [vmem:[%s6 + $0x10] sm:$0xff] %v1147
  %1164 = vst [vmem:[%s6 + $0x18] sm:$0xff] %v1148
  %1165 = vst [vmem:[%s6 + $0x20] sm:$0xff] %v1149
  %1166 = vst [vmem:[%s6 + $0x28] sm:$0xff] %v1150
  %1167 = vst [vmem:[%s6 + $0x30] sm:$0xff] %v1151
  %1168 = vst [vmem:[%s6 + $0x38] sm:$0xff] %v1152
  %1169 = vst [vmem:[%s6 + $0x40] sm:$0xff] %v1153
  %1170 = vst [vmem:[%s6 + $0x48] sm:$0xff] %v1154
  %1171 = vst [vmem:[%s6 + $0x50] sm:$0xff] %v1155
  %1172 = vst [vmem:[%s6 + $0x58] sm:$0xff] %v1156
  %1173 = vst [vmem:[%s6 + $0x60] sm:$0xff] %v1157
  %1174 = vst [vmem:[%s6 + $0x68] sm:$0xff] %v1158
  %1175 = vst [vmem:[%s6 + $0x70] sm:$0xff] %v1159
  %1176 = vst [vmem:[%s6 + $0x78] sm:$0xff] %v1160
  %v1177 = vmul.f32 %v530, 2.0
  %v1178 = vmul.f32 %v533, 2.0
  %v1179 = vmul.f32 %v538, 2.0
  %v1180 = vmul.f32 %v541, 2.0
  %v1181 = vmul.f32 %v546, 2.0
  %v1182 = vmul.f32 %v549, 2.0
  %v1183 = vmul.f32 %v554, 2.0
  %v1184 = vmul.f32 %v557, 2.0
  %v1185 = vmul.f32 %v562, 2.0
  %v1186 = vmul.f32 %v565, 2.0
  %v1187 = vmul.f32 %v570, 2.0
  %v1188 = vmul.f32 %v573, 2.0
  %v1189 = vmul.f32 %v578, 2.0
  %v1190 = vmul.f32 %v581, 2.0
  %v1191 = vmul.f32 %v586, 2.0
  %v1192 = vmul.f32 %v589, 2.0
  %1193 = vmatprep.subr.bf16.mxu0 0
  %1194 = vmatpush1.bf16.msra.mxu0 %v608
  %1195 = vmatprep.subr.bf16.mxu0 0
  %1196 = vmatpush1.bf16.msra.mxu0 %v609
  %1197 = vmatprep.subr.bf16.mxu0 0
  %1198 = vmatpush1.bf16.msra.mxu0 %v610
  %1199 = vmatprep.subr.bf16.mxu0 0
  %1200 = vmatpush1.bf16.msra.mxu0 %v611
  %1201 = vmatprep.subr.bf16.mxu0 0
  %1202 = vmatpush1.bf16.msra.mxu0 %v612
  %1203 = vmatprep.subr.bf16.mxu0 0
  %1204 = vmatpush1.bf16.msra.mxu0 %v613
  %1205 = vmatprep.subr.bf16.mxu0 0
  %1206 = vmatpush1.bf16.msra.mxu0 %v614
  %1207 = vmatprep.subr.bf16.mxu0 0
  %1208 = vmatpush1.bf16.msra.mxu0 %v615
  %1209 = vmatprep.subr.bf16.mxu0 0
  %1210 = vmatpush1.bf16.msra.mxu0 0
  %1211 = vmatprep.subr.bf16.mxu0 0
  %1212 = vmatpush1.bf16.msra.mxu0 0
  %1213 = vmatprep.subr.bf16.mxu0 0
  %1214 = vmatpush1.bf16.msra.mxu0 0
  %1215 = vmatprep.subr.bf16.mxu0 0
  %1216 = vmatpush1.bf16.msra.mxu0 0
  %1217 = vmatprep.subr.bf16.mxu0 0
  %1218 = vmatpush1.bf16.msra.mxu0 0
  %1219 = vmatprep.subr.bf16.mxu0 0
  %1220 = vmatpush1.bf16.msra.mxu0 0
  %1221 = vmatprep.subr.bf16.mxu0 0
  %1222 = vmatpush1.bf16.msra.mxu0 0
  %1223 = vmatprep.subr.bf16.mxu0 0
  %1224 = vmatpush1.bf16.msra.mxu0 0
  %1225 = vmatprep.mubr.bf16.mxu0 0
  %1226 = vmatmul.mubr.bf16.gmra.mrb[0].mxu0 %v608
  %v1227 = vpop.f32.mrb[0].mxu0
  %v1228 = vadd.f32 %v1177, %v1227
  %v1229 = vpop.f32.mrb[0].mxu0
  %v1230 = vpop.f32.mrb[0].mxu0
  %v1231 = vadd.f32 %v1178, %v1230
  %v1232 = vpop.f32.mrb[0].mxu0
  %1233 = vmatprep.mubr.bf16.mxu0 0
  %1234 = vmatmul.mubr.bf16.gmra.mrb[0].mxu0 %v609
  %v1235 = vpop.f32.mrb[0].mxu0
  %v1236 = vadd.f32 %v1179, %v1235
  %v1237 = vpop.f32.mrb[0].mxu0
  %v1238 = vpop.f32.mrb[0].mxu0
  %v1239 = vadd.f32 %v1180, %v1238
  %v1240 = vpop.f32.mrb[0].mxu0
  %1241 = vmatprep.mubr.bf16.mxu0 0
  %1242 = vmatmul.mubr.bf16.gmra.mrb[0].mxu0 %v610
  %v1243 = vpop.f32.mrb[0].mxu0
  %v1244 = vadd.f32 %v1181, %v1243
  %v1245 = vpop.f32.mrb[0].mxu0
  %v1246 = vpop.f32.mrb[0].mxu0
  %v1247 = vadd.f32 %v1182, %v1246
  %v1248 = vpop.f32.mrb[0].mxu0
  %1249 = vmatprep.mubr.bf16.mxu0 0
  %1250 = vmatmul.mubr.bf16.gmra.mrb[0].mxu0 %v611
  %v1251 = vpop.f32.mrb[0].mxu0
  %v1252 = vadd.f32 %v1183, %v1251
  %v1253 = vpop.f32.mrb[0].mxu0
  %v1254 = vpop.f32.mrb[0].mxu0
  %v1255 = vadd.f32 %v1184, %v1254
  %v1256 = vpop.f32.mrb[0].mxu0
  %1257 = vmatprep.mubr.bf16.mxu0 0
  %1258 = vmatmul.mubr.bf16.gmra.mrb[0].mxu0 %v612
  %v1259 = vpop.f32.mrb[0].mxu0
  %v1260 = vadd.f32 %v1185, %v1259
  %v1261 = vpop.f32.mrb[0].mxu0
  %v1262 = vpop.f32.mrb[0].mxu0
  %v1263 = vadd.f32 %v1186, %v1262
  %v1264 = vpop.f32.mrb[0].mxu0
  %1265 = vmatprep.mubr.bf16.mxu0 0
  %1266 = vmatmul.mubr.bf16.gmra.mrb[0].mxu0 %v613
  %v1267 = vpop.f32.mrb[0].mxu0
  %v1268 = vadd.f32 %v1187, %v1267
  %v1269 = vpop.f32.mrb[0].mxu0
  %v1270 = vpop.f32.mrb[0].mxu0
  %v1271 = vadd.f32 %v1188, %v1270
  %v1272 = vpop.f32.mrb[0].mxu0
  %1273 = vmatprep.mubr.bf16.mxu0 0
  %1274 = vmatmul.mubr.bf16.gmra.mrb[0].mxu0 %v614
  %v1275 = vpop.f32.mrb[0].mxu0
  %v1276 = vadd.f32 %v1189, %v1275
  %v1277 = vpop.f32.mrb[0].mxu0
  %v1278 = vpop.f32.mrb[0].mxu0
  %v1279 = vadd.f32 %v1190, %v1278
  %v1280 = vpop.f32.mrb[0].mxu0
  %1281 = vmatprep.mubr.bf16.mxu0 0
  %1282 = vmatmul.mubr.bf16.gmra.mrb[0].mxu0 %v615
  %v1283 = vpop.f32.mrb[0].mxu0
  %v1284 = vadd.f32 %v1191, %v1283
  %v1285 = vpop.f32.mrb[0].mxu0
  %v1286 = vpop.f32.mrb[0].mxu0
  %v1287 = vadd.f32 %v1192, %v1286
  %v1288 = vpop.f32.mrb[0].mxu0
  %1289 = vdwg.mxu0
  %v1290 = vlaneseq
  %v1291 = vshrl.u32 %v1290, 7
  %v1292 = vadd.s32 %v1291, 8
  %v1293 = vadd.s32 %v1291, 16
  %v1294 = vadd.s32 %v1291, 24
  %v1295 = vadd.s32 %v1291, 32
  %v1296 = vadd.s32 %v1291, 40
  %v1297 = vadd.s32 %v1291, 48
  %v1298 = vadd.s32 %v1291, 56
  %v1299 = vadd.s32 %v1291, 64
  %v1300 = vadd.s32 %v1291, 72
  %v1301 = vadd.s32 %v1291, 80
  %v1302 = vadd.s32 %v1291, 88
  %v1303 = vadd.s32 %v1291, 96
  %v1304 = vadd.s32 %v1291, 104
  %v1305 = vadd.s32 %v1291, 112
  %v1306 = vadd.s32 %v1291, 120
  %vm1307 = vcmp.eq.s32.totalorder %v1291, %v76
  %vm1308 = vcmp.eq.s32.totalorder %v1292, %v76
  %vm1309 = vcmp.eq.s32.totalorder %v1293, %v76
  %vm1310 = vcmp.eq.s32.totalorder %v1294, %v76
  %vm1311 = vcmp.eq.s32.totalorder %v1295, %v76
  %vm1312 = vcmp.eq.s32.totalorder %v1296, %v76
  %vm1313 = vcmp.eq.s32.totalorder %v1297, %v76
  %vm1314 = vcmp.eq.s32.totalorder %v1298, %v76
  %vm1315 = vcmp.eq.s32.totalorder %v1299, %v76
  %vm1316 = vcmp.eq.s32.totalorder %v1300, %v76
  %vm1317 = vcmp.eq.s32.totalorder %v1301, %v76
  %vm1318 = vcmp.eq.s32.totalorder %v1302, %v76
  %vm1319 = vcmp.eq.s32.totalorder %v1303, %v76
  %vm1320 = vcmp.eq.s32.totalorder %v1304, %v76
  %vm1321 = vcmp.eq.s32.totalorder %v1305, %v76
  %vm1322 = vcmp.eq.s32.totalorder %v1306, %v76
  %v1323 = vsel %vm1307, 0.0, %v1228
  %v1324 = vsel %vm1308, 0.0, %v1231
  %v1325 = vsel %vm1309, 0.0, %v1236
  %v1326 = vsel %vm1310, 0.0, %v1239
  %v1327 = vsel %vm1311, 0.0, %v1244
  %v1328 = vsel %vm1312, 0.0, %v1247
  %v1329 = vsel %vm1313, 0.0, %v1252
  %v1330 = vsel %vm1314, 0.0, %v1255
  %v1331 = vsel %vm1315, 0.0, %v1260
  %v1332 = vsel %vm1316, 0.0, %v1263
  %v1333 = vsel %vm1317, 0.0, %v1268
  %v1334 = vsel %vm1318, 0.0, %v1271
  %v1335 = vsel %vm1319, 0.0, %v1276
  %v1336 = vsel %vm1320, 0.0, %v1279
  %v1337 = vsel %vm1321, 0.0, %v1284
  %v1338 = vsel %vm1322, 0.0, %v1287
  %1339 = vst [vmem:[%s8] sm:$0xff] %v1323
  %1340 = vst [vmem:[%s8 + $0x8] sm:$0xff] %v1324
  %1341 = vst [vmem:[%s8 + $0x10] sm:$0xff] %v1325
  %1342 = vst [vmem:[%s8 + $0x18] sm:$0xff] %v1326
  %1343 = vst [vmem:[%s8 + $0x20] sm:$0xff] %v1327
  %1344 = vst [vmem:[%s8 + $0x28] sm:$0xff] %v1328
  %1345 = vst [vmem:[%s8 + $0x30] sm:$0xff] %v1329
  %1346 = vst [vmem:[%s8 + $0x38] sm:$0xff] %v1330
  %1347 = vst [vmem:[%s8 + $0x40] sm:$0xff] %v1331
  %1348 = vst [vmem:[%s8 + $0x48] sm:$0xff] %v1332
  %1349 = vst [vmem:[%s8 + $0x50] sm:$0xff] %v1333
  %1350 = vst [vmem:[%s8 + $0x58] sm:$0xff] %v1334
  %1351 = vst [vmem:[%s8 + $0x60] sm:$0xff] %v1335
  %1352 = vst [vmem:[%s8 + $0x68] sm:$0xff] %v1336
  %1353 = vst [vmem:[%s8 + $0x70] sm:$0xff] %v1337
  %1354 = vst [vmem:[%s8 + $0x78] sm:$0xff] %v1338
  // Predicated region
  $region26: #{graph_unet_forward.6} parent=0 // pred_check
    _
  $region27: #{graph_unet_forward.6} parent=0 // pred_check_branch
    %1356 = sbr.rel (0) target = $region29
  $region28: #{graph_unet_forward.6} parent=0 // pred_region
    _
  $region29: #{graph_unet_forward.6} parent=0 // pred_fallthru
    _
  // Predicated region
  $region30: #{graph_unet_forward.6} parent=0 // pred_check
    _
  $region31: #{graph_unet_forward.6} parent=0 // pred_check_branch
    %1358 = sbr.rel (0) target = $region33
  $region32: #{graph_unet_forward.6} parent=0 // pred_region
    _
  $region33: #{graph_unet_forward.6} parent=0 // pred_fallthru
    _
  // Predicated region
  $region34: #{graph_unet_forward.6} parent=0 // pred_check
    _
  $region35: #{graph_unet_forward.6} parent=0 // pred_check_branch
    %1360 = sbr.rel (0) target = $region37
  $region36: #{graph_unet_forward.6} parent=0 // pred_region
    _
  $region37: #{graph_unet_forward.6} parent=0 // pred_fallthru
    _
  // Predicated region
  $region38: #{graph_unet_forward.6} parent=0 // pred_check
    _
  $region39: #{graph_unet_forward.6} parent=0 // pred_check_branch
    %1362 = sbr.rel (0) target = $region41
  $region40: #{graph_unet_forward.6} parent=0 // pred_region
    _
  $region41: #{graph_unet_forward.6} parent=0 // pred_fallthru
    _
  // Predicated region
  $region42: #{graph_unet_forward.6} parent=0 // pred_check
    _
  $region43: #{graph_unet_forward.6} parent=0 // pred_check_branch
    %1364 = sbr.rel (0) target = $region45
  $region44: #{graph_unet_forward.6} parent=0 // pred_region
    _
  $region45: #{graph_unet_forward.6} parent=0 // pred_fallthru
    _
  // Predicated region
  $region46: #{graph_unet_forward.6} parent=0 // pred_check
    _
  $region47: #{graph_unet_forward.6} parent=0 // pred_check_branch
    %1366 = sbr.rel (0) target = $region49
  $region48: #{graph_unet_forward.6} parent=0 // pred_region
    _
  $region49: #{graph_unet_forward.6} parent=0 // pred_fallthru
    _

// kernel: graph_unet_forward.5
$region0: #{graph_unet_forward.5}
  #allocation0 [shape = 'u32[]', space=smem, size = 0x4, offset = 0x4, fixed_abs, tag = 'smem constant byte address 0x4 - core index']
  #allocation1 [shape = 'u32[144,128]{1,0:T(1,128)}', space=vmem, size = 0x12000, scoped, tag = 'internal scratch']
  %s0 = inlined_call_operand.hbm [shape: f32[128,128], index: 0, kind: input, shape index: {}]
  %s1 = inlined_call_operand.hbm [shape: f32[128,128], index: 1, kind: input, shape index: {}]
  %s2 = inlined_call_operand.hbm [shape: bf16[128,128], index: 2, kind: input, shape index: {}]
  %s3 = inlined_call_operand.vmem [shape: f32[1,128], index: 3, kind: input, shape index: {}]
  %s4 = inlined_call_operand.vmem [shape: f32[1,128], index: 4, kind: input, shape index: {}]
  %s5 = inlined_call_operand.vmem [shape: f32[128,128], index: 5, kind: output, shape index: {0}]
  %s6 = inlined_call_operand.vmem [shape: f32[128,128], index: 6, kind: output, shape index: {1}]
  %7 = xla_tuple %s5, %s6
  %s8 = sld [smem:[#allocation0]]
  $region50: #{graph_unet_forward.5} parent=0
    _
  %s10 = ssub.s32 1, %s8
  %s11 = scalar_select 0, %s10, %s8
  $region1: #{graph_unet_forward.5} parent=0
    #allocation2 [shape = 'u8[65536]{0}', space=vmem, size = 0x10000, scoped, tag = 'input window, operand 0, single buffered']
    #allocation3 [shape = 's32[1]{0}', space=sflag, size = 0x4, scoped, tag = 'scoped memory for graph_unet_forward.5']
    #allocation4 [shape = 'u8[65536]{0}', space=vmem, size = 0x10000, scoped, tag = 'input window, operand 1, single buffered']
    #allocation5 [shape = 's32[1]{0}', space=sflag, size = 0x4, scoped, tag = 'scoped memory for graph_unet_forward.5']
    #allocation6 [shape = 'u8[32768]{0}', space=vmem, size = 0x8000, scoped, tag = 'input window, operand 2, single buffered']
    %12 = vsyncpa [#allocation3], 0
    %13 = vsyncpa [#allocation5], 0
    // Predicated region
    $region2: #{graph_unet_forward.5} parent=1 // pred_check
      _
    $region3: #{graph_unet_forward.5} parent=1 // pred_check_branch
      %15 = sbr.rel (0) target = $region5
    $region4: #{graph_unet_forward.5} parent=1 // pred_region
      %s17 = ssub.s32 2048, 2048
      %18 = vsyncadd [#allocation3], %s17
      %s19 = sshll.u32 [#allocation2], 4
      %s20 = int_to_ptr.vmem [resolvable:$true] %s19
      %25 = dma.hbm_to_vmem [thread:$0]  %s0, 2048, %s20, [#allocation3], 128, 128, 8
    $region5: #{graph_unet_forward.5} parent=1 // pred_fallthru
      _
    // Predicated region
    $region6: #{graph_unet_forward.5} parent=1 // pred_check
      _
    $region7: #{graph_unet_forward.5} parent=1 // pred_check_branch
      %27 = sbr.rel (0) target = $region9
    $region8: #{graph_unet_forward.5} parent=1 // pred_region
      %s29 = ssub.s32 2048, 2048
      %30 = vsyncadd [#allocation5], %s29
      %s31 = sshll.u32 [#allocation4], 4
      %s32 = int_to_ptr.vmem [resolvable:$true] %s31
      %37 = dma.hbm_to_vmem [thread:$0]  %s1, 2048, %s32, [#allocation5], 128, 128, 8
    $region9: #{graph_unet_forward.5} parent=1 // pred_fallthru
      _
    // Predicated region
    $region10: #{graph_unet_forward.5} parent=1 // pred_check
      _
    $region11: #{graph_unet_forward.5} parent=1 // pred_check_branch
      %39 = sbr.rel (0) target = $region13
    $region12: #{graph_unet_forward.5} parent=1 // pred_region
      %s41 = ssub.s32 1024, 1024
      %42 = vsyncadd [#allocation5], %s41
      %s43 = sshll.u32 [#allocation6], 4
      %s44 = int_to_ptr.vmem [resolvable:$true] %s43
      %49 = dma.hbm_to_vmem [thread:$0]  %s2, 1024, %s44, [#allocation5], 64, 64, 4
    $region13: #{graph_unet_forward.5} parent=1 // pred_fallthru
      _
    // Predicated region
    $region14: #{graph_unet_forward.5} parent=1 // pred_check
      _
    $region15: #{graph_unet_forward.5} parent=1 // pred_check_branch
      %51 = sbr.rel (0) target = $region17
    $region16: #{graph_unet_forward.5} parent=1 // pred_region
      _
    $region17: #{graph_unet_forward.5} parent=1 // pred_fallthru
      _
    // Predicated region
    $region18: #{graph_unet_forward.5} parent=1 // pred_check
      _
    $region19: #{graph_unet_forward.5} parent=1 // pred_check_branch
      %53 = sbr.rel (0) target = $region21
    $region20: #{graph_unet_forward.5} parent=1 // pred_region
      _
    $region21: #{graph_unet_forward.5} parent=1 // pred_fallthru
      _
    // Predicated region
    $region22: #{graph_unet_forward.5} parent=1 // pred_check
      _
    $region23: #{graph_unet_forward.5} parent=1 // pred_check_branch
      %55 = sbr.rel (0) target = $region25
    $region24: #{graph_unet_forward.5} parent=1 // pred_region
      %56 = dma.done [#allocation3], 2048
    $region25: #{graph_unet_forward.5} parent=1 // pred_fallthru
      _
    // Predicated region
    $region26: #{graph_unet_forward.5} parent=1 // pred_check
      _
    $region27: #{graph_unet_forward.5} parent=1 // pred_check_branch
      %58 = sbr.rel (0) target = $region29
    $region28: #{graph_unet_forward.5} parent=1 // pred_region
      %59 = dma.done [#allocation5], 2048
    $region29: #{graph_unet_forward.5} parent=1 // pred_fallthru
      _
    // Predicated region
    $region30: #{graph_unet_forward.5} parent=1 // pred_check
      _
    $region31: #{graph_unet_forward.5} parent=1 // pred_check_branch
      %61 = sbr.rel (0) target = $region33
    $region32: #{graph_unet_forward.5} parent=1 // pred_region
      %62 = dma.done [#allocation5], 1024
    $region33: #{graph_unet_forward.5} parent=1 // pred_fallthru
      _
    %v64 = vld [vmem:[#allocation2] sm:$0xff]
    %v65 = vld [vmem:[#allocation2 + $0x8] sm:$0xff]
    %v66 = vld [vmem:[#allocation2 + $0x10] sm:$0xff]
    %v67 = vld [vmem:[#allocation2 + $0x18] sm:$0xff]
    %v68 = vld [vmem:[#allocation2 + $0x20] sm:$0xff]
    %v69 = vld [vmem:[#allocation2 + $0x28] sm:$0xff]
    %v70 = vld [vmem:[#allocation2 + $0x30] sm:$0xff]
    %v71 = vld [vmem:[#allocation2 + $0x38] sm:$0xff]
    %v72 = vld [vmem:[#allocation2 + $0x40] sm:$0xff]
    %v73 = vld [vmem:[#allocation2 + $0x48] sm:$0xff]
    %v74 = vld [vmem:[#allocation2 + $0x50] sm:$0xff]
    %v75 = vld [vmem:[#allocation2 + $0x58] sm:$0xff]
    %v76 = vld [vmem:[#allocation2 + $0x60] sm:$0xff]
    %v77 = vld [vmem:[#allocation2 + $0x68] sm:$0xff]
    %v78 = vld [vmem:[#allocation2 + $0x70] sm:$0xff]
    %v79 = vld [vmem:[#allocation2 + $0x78] sm:$0xff]
    %v80 = vpack.c.bf16 %v65, %v64
    %v81 = vpack.c.bf16 %v67, %v66
    %v82 = vpack.c.bf16 %v69, %v68
    %v83 = vpack.c.bf16 %v71, %v70
    %v84 = vpack.c.bf16 %v73, %v72
    %v85 = vpack.c.bf16 %v75, %v74
    %v86 = vpack.c.bf16 %v77, %v76
    %v87 = vpack.c.bf16 %v79, %v78
    %v88 = vld [vmem:[#allocation4] sm:$0xff]
    %v89 = vld [vmem:[#allocation4 + $0x8] sm:$0xff]
    %v90 = vld [vmem:[#allocation4 + $0x10] sm:$0xff]
    %v91 = vld [vmem:[#allocation4 + $0x18] sm:$0xff]
    %v92 = vld [vmem:[#allocation4 + $0x20] sm:$0xff]
    %v93 = vld [vmem:[#allocation4 + $0x28] sm:$0xff]
    %v94 = vld [vmem:[#allocation4 + $0x30] sm:$0xff]
    %v95 = vld [vmem:[#allocation4 + $0x38] sm:$0xff]
    %v96 = vld [vmem:[#allocation4 + $0x40] sm:$0xff]
    %v97 = vld [vmem:[#allocation4 + $0x48] sm:$0xff]
    %v98 = vld [vmem:[#allocation4 + $0x50] sm:$0xff]
    %v99 = vld [vmem:[#allocation4 + $0x58] sm:$0xff]
    %v100 = vld [vmem:[#allocation4 + $0x60] sm:$0xff]
    %v101 = vld [vmem:[#allocation4 + $0x68] sm:$0xff]
    %v102 = vld [vmem:[#allocation4 + $0x70] sm:$0xff]
    %v103 = vld [vmem:[#allocation4 + $0x78] sm:$0xff]
    %v104 = vld [vmem:[#allocation6] sm:$0xf]
    %v105 = vld [vmem:[#allocation6 + $0x4] sm:$0xf]
    %v106 = vld [vmem:[#allocation6 + $0x8] sm:$0xf]
    %v107 = vld [vmem:[#allocation6 + $0xc] sm:$0xf]
    %v108 = vld [vmem:[#allocation6 + $0x10] sm:$0xf]
    %v109 = vld [vmem:[#allocation6 + $0x14] sm:$0xf]
    %v110 = vld [vmem:[#allocation6 + $0x18] sm:$0xf]
    %v111 = vld [vmem:[#allocation6 + $0x1c] sm:$0xf]
    %v112 = vld [vmem:[#allocation6 + $0x20] sm:$0xf]
    %v113 = vld [vmem:[#allocation6 + $0x24] sm:$0xf]
    %v114 = vld [vmem:[#allocation6 + $0x28] sm:$0xf]
    %v115 = vld [vmem:[#allocation6 + $0x2c] sm:$0xf]
    %v116 = vld [vmem:[#allocation6 + $0x30] sm:$0xf]
    %v117 = vld [vmem:[#allocation6 + $0x34] sm:$0xf]
    %v118 = vld [vmem:[#allocation6 + $0x38] sm:$0xf]
    %v119 = vld [vmem:[#allocation6 + $0x3c] sm:$0xf]
    %v120 = vld [vmem:[%s3] sm:$0x1]
    %121 = vadd.xlane.f32.xlu0 %v64
    %v122 = vpop.xlane.xlu0 %121
    %123 = vadd.xlane.f32.xlu0 %v65
    %v124 = vpop.xlane.xlu0 %123
    %125 = vadd.xlane.f32.xlu0 %v66
    %v126 = vpop.xlane.xlu0 %125
    %127 = vadd.xlane.f32.xlu0 %v67
    %v128 = vpop.xlane.xlu0 %127
    %129 = vadd.xlane.f32.xlu0 %v68
    %v130 = vpop.xlane.xlu0 %129
    %131 = vadd.xlane.f32.xlu0 %v69
    %v132 = vpop.xlane.xlu0 %131
    %133 = vadd.xlane.f32.xlu0 %v70
    %v134 = vpop.xlane.xlu0 %133
    %135 = vadd.xlane.f32.xlu0 %v71
    %v136 = vpop.xlane.xlu0 %135
    %137 = vadd.xlane.f32.xlu0 %v72
    %v138 = vpop.xlane.xlu0 %137
    %139 = vadd.xlane.f32.xlu0 %v73
    %v140 = vpop.xlane.xlu0 %139
    %141 = vadd.xlane.f32.xlu0 %v74
    %v142 = vpop.xlane.xlu0 %141
    %143 = vadd.xlane.f32.xlu0 %v75
    %v144 = vpop.xlane.xlu0 %143
    %145 = vadd.xlane.f32.xlu0 %v76
    %v146 = vpop.xlane.xlu0 %145
    %147 = vadd.xlane.f32.xlu0 %v77
    %v148 = vpop.xlane.xlu0 %147
    %149 = vadd.xlane.f32.xlu0 %v78
    %v150 = vpop.xlane.xlu0 %149
    %151 = vadd.xlane.f32.xlu0 %v79
    %v152 = vpop.xlane.xlu0 %151
    %v153 = vadd.f32 %v122, 2.0
    %v154 = vadd.f32 %v124, 2.0
    %v155 = vadd.f32 %v126, 2.0
    %v156 = vadd.f32 %v128, 2.0
    %v157 = vadd.f32 %v130, 2.0
    %v158 = vadd.f32 %v132, 2.0
    %v159 = vadd.f32 %v134, 2.0
    %v160 = vadd.f32 %v136, 2.0
    %v161 = vadd.f32 %v138, 2.0
    %v162 = vadd.f32 %v140, 2.0
    %v163 = vadd.f32 %v142, 2.0
    %v164 = vadd.f32 %v144, 2.0
    %v165 = vadd.f32 %v146, 2.0
    %v166 = vadd.f32 %v148, 2.0
    %v167 = vadd.f32 %v150, 2.0
    %v168 = vadd.f32 %v152, 2.0
    %v169 = vrsqrt.pop %v153
    %v170 = vrsqrt.pop %v154
    %v171 = vrsqrt.pop %v155
    %v172 = vrsqrt.pop %v156
    %v173 = vrsqrt.pop %v157
    %v174 = vrsqrt.pop %v158
    %v175 = vrsqrt.pop %v159
    %v176 = vrsqrt.pop %v160
    %v177 = vrsqrt.pop %v161
    %v178 = vrsqrt.pop %v162
    %v179 = vrsqrt.pop %v163
    %v180 = vrsqrt.pop %v164
    %v181 = vrsqrt.pop %v165
    %v182 = vrsqrt.pop %v166
    %v183 = vrsqrt.pop %v167
    %v184 = vrsqrt.pop %v168
    %v185 = vpack.c.bf16 %v89, %v88
    %v186 = vpack.c.bf16 %v91, %v90
    %v187 = vpack.c.bf16 %v93, %v92
    %v188 = vpack.c.bf16 %v95, %v94
    %v189 = vpack.c.bf16 %v97, %v96
    %v190 = vpack.c.bf16 %v99, %v98
    %v191 = vpack.c.bf16 %v101, %v100
    %v192 = vpack.c.bf16 %v103, %v102
    %v209 = vunpack.c.l.b16 %v104
    %v210 = vunpack.c.l.b16 %v105
    %v211 = vunpack.c.l.b16 %v106
    %v212 = vunpack.c.l.b16 %v107
    %v213 = vunpack.c.l.b16 %v108
    %v214 = vunpack.c.l.b16 %v109
    %v215 = vunpack.c.l.b16 %v110
    %v216 = vunpack.c.l.b16 %v111
    %v217 = vunpack.c.l.b16 %v112
    %v218 = vunpack.c.l.b16 %v113
    %v219 = vunpack.c.l.b16 %v114
    %v220 = vunpack.c.l.b16 %v115
    %v221 = vunpack.c.l.b16 %v116
    %v222 = vunpack.c.l.b16 %v117
    %v223 = vunpack.c.l.b16 %v118
    %v224 = vunpack.c.l.b16 %v119
    %v225 = vpack.c.b16 %v210, %v209
    %v226 = vpack.c.b16 %v212, %v211
    %v227 = vpack.c.b16 %v214, %v213
    %v228 = vpack.c.b16 %v216, %v215
    %v229 = vpack.c.b16 %v218, %v217
    %v230 = vpack.c.b16 %v220, %v219
    %v231 = vpack.c.b16 %v222, %v221
    %v232 = vpack.c.b16 %v224, %v223
    %241 = vmatprep.subr.bf16.mxu0 0
    %242 = vmatpush1.bf16.msra.mxu0 %v225
    %243 = vmatprep.subr.bf16.mxu0 0
    %244 = vmatpush1.bf16.msra.mxu0 %v226
    %245 = vmatprep.subr.bf16.mxu0 0
    %246 = vmatpush1.bf16.msra.mxu0 %v227
    %247 = vmatprep.subr.bf16.mxu0 0
    %248 = vmatpush1.bf16.msra.mxu0 %v228
    %249 = vmatprep.subr.bf16.mxu0 0
    %250 = vmatpush1.bf16.msra.mxu0 %v229
    %251 = vmatprep.subr.bf16.mxu0 0
    %252 = vmatpush1.bf16.msra.mxu0 %v230
    %253 = vmatprep.subr.bf16.mxu0 0
    %254 = vmatpush1.bf16.msra.mxu0 %v231
    %255 = vmatprep.subr.bf16.mxu0 0
    %256 = vmatpush1.bf16.msra.mxu0 %v232
    %257 = vmatprep.subr.bf16.mxu0 0
    %258 = vmatpush1.bf16.msra.mxu0 0
    %259 = vmatprep.subr.bf16.mxu0 0
    %260 = vmatpush1.bf16.msra.mxu0 0
    %261 = vmatprep.subr.bf16.mxu0 0
    %262 = vmatpush1.bf16.msra.mxu0 0
    %263 = vmatprep.subr.bf16.mxu0 0
    %264 = vmatpush1.bf16.msra.mxu0 0
    %265 = vmatprep.subr.bf16.mxu0 0
    %266 = vmatpush1.bf16.msra.mxu0 0
    %267 = vmatprep.subr.bf16.mxu0 0
    %268 = vmatpush1.bf16.msra.mxu0 0
    %269 = vmatprep.subr.bf16.mxu0 0
    %270 = vmatpush1.bf16.msra.mxu0 0
    %271 = vmatprep.subr.bf16.mxu0 0
    %272 = vmatpush1.bf16.msra.mxu0 0
    %273 = vmatprep.mubr.bf16.mxu0 0
    %274 = vmatmul.mubr.bf16.gmra.mrb[0].mxu0 %v185
    %v275 = vpop.f32.mrb[0].mxu0
    %v276 = vadd.f32 0.0, %v275
    %v277 = vpop.f32.mrb[0].mxu0
    %v278 = vpop.f32.mrb[0].mxu0
    %v279 = vadd.f32 0.0, %v278
    %v280 = vpop.f32.mrb[0].mxu0
    %281 = vmatprep.mubr.bf16.mxu0 0
    %282 = vmatmul.mubr.bf16.gmra.mrb[0].mxu0 %v186
    %v283 = vpop.f32.mrb[0].mxu0
    %v284 = vadd.f32 0.0, %v283
    %v285 = vpop.f32.mrb[0].mxu0
    %v286 = vpop.f32.mrb[0].mxu0
    %v287 = vadd.f32 0.0, %v286
    %v288 = vpop.f32.mrb[0].mxu0
    %289 = vmatprep.mubr.bf16.mxu0 0
    %290 = vmatmul.mubr.bf16.gmra.mrb[0].mxu0 %v187
    %v291 = vpop.f32.mrb[0].mxu0
    %v292 = vadd.f32 0.0, %v291
    %v293 = vpop.f32.mrb[0].mxu0
    %v294 = vpop.f32.mrb[0].mxu0
    %v295 = vadd.f32 0.0, %v294
    %v296 = vpop.f32.mrb[0].mxu0
    %297 = vmatprep.mubr.bf16.mxu0 0
    %298 = vmatmul.mubr.bf16.gmra.mrb[0].mxu0 %v188
    %v299 = vpop.f32.mrb[0].mxu0
    %v300 = vadd.f32 0.0, %v299
    %v301 = vpop.f32.mrb[0].mxu0
    %v302 = vpop.f32.mrb[0].mxu0
    %v303 = vadd.f32 0.0, %v302
    %v304 = vpop.f32.mrb[0].mxu0
    %305 = vmatprep.mubr.bf16.mxu0 0
    %306 = vmatmul.mubr.bf16.gmra.mrb[0].mxu0 %v189
    %v307 = vpop.f32.mrb[0].mxu0
    %v308 = vadd.f32 0.0, %v307
    %v309 = vpop.f32.mrb[0].mxu0
    %v310 = vpop.f32.mrb[0].mxu0
    %v311 = vadd.f32 0.0, %v310
    %v312 = vpop.f32.mrb[0].mxu0
    %313 = vmatprep.mubr.bf16.mxu0 0
    %314 = vmatmul.mubr.bf16.gmra.mrb[0].mxu0 %v190
    %v315 = vpop.f32.mrb[0].mxu0
    %v316 = vadd.f32 0.0, %v315
    %v317 = vpop.f32.mrb[0].mxu0
    %v318 = vpop.f32.mrb[0].mxu0
    %v319 = vadd.f32 0.0, %v318
    %v320 = vpop.f32.mrb[0].mxu0
    %321 = vmatprep.mubr.bf16.mxu0 0
    %322 = vmatmul.mubr.bf16.gmra.mrb[0].mxu0 %v191
    %v323 = vpop.f32.mrb[0].mxu0
    %v324 = vadd.f32 0.0, %v323
    %v325 = vpop.f32.mrb[0].mxu0
    %v326 = vpop.f32.mrb[0].mxu0
    %v327 = vadd.f32 0.0, %v326
    %v328 = vpop.f32.mrb[0].mxu0
    %329 = vmatprep.mubr.bf16.mxu0 0
    %330 = vmatmul.mubr.bf16.gmra.mrb[0].mxu0 %v192
    %v331 = vpop.f32.mrb[0].mxu0
    %v332 = vadd.f32 0.0, %v331
    %v333 = vpop.f32.mrb[0].mxu0
    %v334 = vpop.f32.mrb[0].mxu0
    %v335 = vadd.f32 0.0, %v334
    %v336 = vpop.f32.mrb[0].mxu0
    %337 = vdwg.mxu0
    %v338 = vmul.f32 %v169, %v276
    %v339 = vmul.f32 %v170, %v279
    %v340 = vmul.f32 %v171, %v284
    %v341 = vmul.f32 %v172, %v287
    %v342 = vmul.f32 %v173, %v292
    %v343 = vmul.f32 %v174, %v295
    %v344 = vmul.f32 %v175, %v300
    %v345 = vmul.f32 %v176, %v303
    %v346 = vmul.f32 %v177, %v308
    %v347 = vmul.f32 %v178, %v311
    %v348 = vmul.f32 %v179, %v316
    %v349 = vmul.f32 %v180, %v319
    %v350 = vmul.f32 %v181, %v324
    %v351 = vmul.f32 %v182, %v327
    %v352 = vmul.f32 %v183, %v332
    %v353 = vmul.f32 %v184, %v335
    %v354 = vpack.c.bf16 %v339, %v338
    %v355 = vpack.c.bf16 %v341, %v340
    %v356 = vpack.c.bf16 %v343, %v342
    %v357 = vpack.c.bf16 %v345, %v344
    %v358 = vpack.c.bf16 %v347, %v346
    %v359 = vpack.c.bf16 %v349, %v348
    %v360 = vpack.c.bf16 %v351, %v350
    %v361 = vpack.c.bf16 %v353, %v352
    %362 = vmatprep.subr.bf16.mxu0 0
    %363 = vmatpush1.bf16.msra.mxu0 %v354
    %364 = vmatprep.subr.bf16.mxu0 0
    %365 = vmatpush1.bf16.msra.mxu0 %v355
    %366 = vmatprep.subr.bf16.mxu0 0
    %367 = vmatpush1.bf16.msra.mxu0 %v356
    %368 = vmatprep.subr.bf16.mxu0 0
    %369 = vmatpush1.bf16.msra.mxu0 %v357
    %370 = vmatprep.subr.bf16.mxu0 0
    %371 = vmatpush1.bf16.msra.mxu0 %v358
    %372 = vmatprep.subr.bf16.mxu0 0
    %373 = vmatpush1.bf16.msra.mxu0 %v359
    %374 = vmatprep.subr.bf16.mxu0 0
    %375 = vmatpush1.bf16.msra.mxu0 %v360
    %376 = vmatprep.subr.bf16.mxu0 0
    %377 = vmatpush1.bf16.msra.mxu0 %v361
    %378 = vmatprep.subr.bf16.mxu0 0
    %379 = vmatpush1.bf16.msra.mxu0 0
    %380 = vmatprep.subr.bf16.mxu0 0
    %381 = vmatpush1.bf16.msra.mxu0 0
    %382 = vmatprep.subr.bf16.mxu0 0
    %383 = vmatpush1.bf16.msra.mxu0 0
    %384 = vmatprep.subr.bf16.mxu0 0
    %385 = vmatpush1.bf16.msra.mxu0 0
    %386 = vmatprep.subr.bf16.mxu0 0
    %387 = vmatpush1.bf16.msra.mxu0 0
    %388 = vmatprep.subr.bf16.mxu0 0
    %389 = vmatpush1.bf16.msra.mxu0 0
    %390 = vmatprep.subr.bf16.mxu0 0
    %391 = vmatpush1.bf16.msra.mxu0 0
    %392 = vmatprep.subr.bf16.mxu0 0
    %393 = vmatpush1.bf16.msra.mxu0 0
    %394 = vmatprep.mubr.bf16.mxu0 0
    %395 = vmatmul.mubr.bf16.gmra.mrb[0].mxu0 %v80
    %v396 = vpop.f32.mrb[0].mxu0
    %v397 = vadd.f32 0.0, %v396
    %v398 = vpop.f32.mrb[0].mxu0
    %v399 = vpop.f32.mrb[0].mxu0
    %v400 = vadd.f32 0.0, %v399
    %v401 = vpop.f32.mrb[0].mxu0
    %402 = vmatprep.mubr.bf16.mxu0 0
    %403 = vmatmul.mubr.bf16.gmra.mrb[0].mxu0 %v81
    %v404 = vpop.f32.mrb[0].mxu0
    %v405 = vadd.f32 0.0, %v404
    %v406 = vpop.f32.mrb[0].mxu0
    %v407 = vpop.f32.mrb[0].mxu0
    %v408 = vadd.f32 0.0, %v407
    %v409 = vpop.f32.mrb[0].mxu0
    %410 = vmatprep.mubr.bf16.mxu0 0
    %411 = vmatmul.mubr.bf16.gmra.mrb[0].mxu0 %v82
    %v412 = vpop.f32.mrb[0].mxu0
    %v413 = vadd.f32 0.0, %v412
    %v414 = vpop.f32.mrb[0].mxu0
    %v415 = vpop.f32.mrb[0].mxu0
    %v416 = vadd.f32 0.0, %v415
    %v417 = vpop.f32.mrb[0].mxu0
    %418 = vmatprep.mubr.bf16.mxu0 0
    %419 = vmatmul.mubr.bf16.gmra.mrb[0].mxu0 %v83
    %v420 = vpop.f32.mrb[0].mxu0
    %v421 = vadd.f32 0.0, %v420
    %v422 = vpop.f32.mrb[0].mxu0
    %v423 = vpop.f32.mrb[0].mxu0
    %v424 = vadd.f32 0.0, %v423
    %v425 = vpop.f32.mrb[0].mxu0
    %426 = vmatprep.mubr.bf16.mxu0 0
    %427 = vmatmul.mubr.bf16.gmra.mrb[0].mxu0 %v84
    %v428 = vpop.f32.mrb[0].mxu0
    %v429 = vadd.f32 0.0, %v428
    %v430 = vpop.f32.mrb[0].mxu0
    %v431 = vpop.f32.mrb[0].mxu0
    %v432 = vadd.f32 0.0, %v431
    %v433 = vpop.f32.mrb[0].mxu0
    %434 = vmatprep.mubr.bf16.mxu0 0
    %435 = vmatmul.mubr.bf16.gmra.mrb[0].mxu0 %v85
    %v436 = vpop.f32.mrb[0].mxu0
    %v437 = vadd.f32 0.0, %v436
    %v438 = vpop.f32.mrb[0].mxu0
    %v439 = vpop.f32.mrb[0].mxu0
    %v440 = vadd.f32 0.0, %v439
    %v441 = vpop.f32.mrb[0].mxu0
    %442 = vmatprep.mubr.bf16.mxu0 0
    %443 = vmatmul.mubr.bf16.gmra.mrb[0].mxu0 %v86
    %v444 = vpop.f32.mrb[0].mxu0
    %v445 = vadd.f32 0.0, %v444
    %v446 = vpop.f32.mrb[0].mxu0
    %v447 = vpop.f32.mrb[0].mxu0
    %v448 = vadd.f32 0.0, %v447
    %v449 = vpop.f32.mrb[0].mxu0
    %450 = vmatprep.mubr.bf16.mxu0 0
    %451 = vmatmul.mubr.bf16.gmra.mrb[0].mxu0 %v87
    %v452 = vpop.f32.mrb[0].mxu0
    %v453 = vadd.f32 0.0, %v452
    %v454 = vpop.f32.mrb[0].mxu0
    %v455 = vpop.f32.mrb[0].mxu0
    %v456 = vadd.f32 0.0, %v455
    %v457 = vpop.f32.mrb[0].mxu0
    %458 = vdwg.mxu0
    %v459 = vmul.f32 %v169, %v397
    %v460 = vmul.f32 %v170, %v400
    %v461 = vmul.f32 %v171, %v405
    %v462 = vmul.f32 %v172, %v408
    %v463 = vmul.f32 %v173, %v413
    %v464 = vmul.f32 %v174, %v416
    %v465 = vmul.f32 %v175, %v421
    %v466 = vmul.f32 %v176, %v424
    %v467 = vmul.f32 %v177, %v429
    %v468 = vmul.f32 %v178, %v432
    %v469 = vmul.f32 %v179, %v437
    %v470 = vmul.f32 %v180, %v440
    %v471 = vmul.f32 %v181, %v445
    %v472 = vmul.f32 %v182, %v448
    %v473 = vmul.f32 %v183, %v453
    %v474 = vmul.f32 %v184, %v456
    %v475 = vmul.f32 %v169, %v338
    %v476 = vmul.f32 %v170, %v339
    %v477 = vmul.f32 %v171, %v340
    %v478 = vmul.f32 %v172, %v341
    %v479 = vmul.f32 %v173, %v342
    %v480 = vmul.f32 %v174, %v343
    %v481 = vmul.f32 %v175, %v344
    %v482 = vmul.f32 %v176, %v345
    %v483 = vmul.f32 %v177, %v346
    %v484 = vmul.f32 %v178, %v347
    %v485 = vmul.f32 %v179, %v348
    %v486 = vmul.f32 %v180, %v349
    %v487 = vmul.f32 %v181, %v350
    %v488 = vmul.f32 %v182, %v351
    %v489 = vmul.f32 %v183, %v352
    %v490 = vmul.f32 %v184, %v353
    %v491 = vmul.f32 %v475, 2.0
    %v492 = vmul.f32 %v476, 2.0
    %v493 = vmul.f32 %v477, 2.0
    %v494 = vmul.f32 %v478, 2.0
    %v495 = vmul.f32 %v479, 2.0
    %v496 = vmul.f32 %v480, 2.0
    %v497 = vmul.f32 %v481, 2.0
    %v498 = vmul.f32 %v482, 2.0
    %v499 = vmul.f32 %v483, 2.0
    %v500 = vmul.f32 %v484, 2.0
    %v501 = vmul.f32 %v485, 2.0
    %v502 = vmul.f32 %v486, 2.0
    %v503 = vmul.f32 %v487, 2.0
    %v504 = vmul.f32 %v488, 2.0
    %v505 = vmul.f32 %v489, 2.0
    %v506 = vmul.f32 %v490, 2.0
    %v507 = vadd.f32 %v459, %v491
    %v508 = vadd.f32 %v460, %v492
    %v509 = vadd.f32 %v461, %v493
    %v510 = vadd.f32 %v462, %v494
    %v511 = vadd.f32 %v463, %v495
    %v512 = vadd.f32 %v464, %v496
    %v513 = vadd.f32 %v465, %v497
    %v514 = vadd.f32 %v466, %v498
    %v515 = vadd.f32 %v467, %v499
    %v516 = vadd.f32 %v468, %v500
    %v517 = vadd.f32 %v469, %v501
    %v518 = vadd.f32 %v470, %v502
    %v519 = vadd.f32 %v471, %v503
    %v520 = vadd.f32 %v472, %v504
    %v521 = vadd.f32 %v473, %v505
    %v522 = vadd.f32 %v474, %v506
    %v524 = vlaneseq
    %v525 = vshrl.u32 %v524, 7
    %v526 = vsub.s32 0, %v525
    %v527 = vrot.slane %v120, %v526
    %v529 = vadd.f32 %v507, %v527
    %v530 = vadd.f32 %v508, %v527
    %v531 = vadd.f32 %v509, %v527
    %v532 = vadd.f32 %v510, %v527
    %v533 = vadd.f32 %v511, %v527
    %v534 = vadd.f32 %v512, %v527
    %v535 = vadd.f32 %v513, %v527
    %v536 = vadd.f32 %v514, %v527
    %v537 = vadd.f32 %v515, %v527
    %v538 = vadd.f32 %v516, %v527
    %v539 = vadd.f32 %v517, %v527
    %v540 = vadd.f32 %v518, %v527
    %v541 = vadd.f32 %v519, %v527
    %v542 = vadd.f32 %v520, %v527
    %v543 = vadd.f32 %v521, %v527
    %v544 = vadd.f32 %v522, %v527
    %v545 = vmax.f32 %v529, 0.0
    %v546 = vmax.f32 %v530, 0.0
    %v547 = vmax.f32 %v531, 0.0
    %v548 = vmax.f32 %v532, 0.0
    %v549 = vmax.f32 %v533, 0.0
    %v550 = vmax.f32 %v534, 0.0
    %v551 = vmax.f32 %v535, 0.0
    %v552 = vmax.f32 %v536, 0.0
    %v553 = vmax.f32 %v537, 0.0
    %v554 = vmax.f32 %v538, 0.0
    %v555 = vmax.f32 %v539, 0.0
    %v556 = vmax.f32 %v540, 0.0
    %v557 = vmax.f32 %v541, 0.0
    %v558 = vmax.f32 %v542, 0.0
    %v559 = vmax.f32 %v543, 0.0
    %v560 = vmax.f32 %v544, 0.0
    %v561 = vld [vmem:[%s4] sm:$0x1]
    %v563 = vlaneseq
    %v564 = vshrl.u32 %v563, 7
    %v565 = vsub.s32 0, %v564
    %v566 = vrot.slane %v561, %v565
    %v568 = vmul.f32 %v545, %v566
    %v569 = vmul.f32 %v546, %v566
    %v570 = vmul.f32 %v547, %v566
    %v571 = vmul.f32 %v548, %v566
    %v572 = vmul.f32 %v549, %v566
    %v573 = vmul.f32 %v550, %v566
    %v574 = vmul.f32 %v551, %v566
    %v575 = vmul.f32 %v552, %v566
    %v576 = vmul.f32 %v553, %v566
    %v577 = vmul.f32 %v554, %v566
    %v578 = vmul.f32 %v555, %v566
    %v579 = vmul.f32 %v556, %v566
    %v580 = vmul.f32 %v557, %v566
    %v581 = vmul.f32 %v558, %v566
    %v582 = vmul.f32 %v559, %v566
    %v583 = vmul.f32 %v560, %v566
    %584 = vadd.xlane.f32.xlu0 %v568
    %v585 = vpop.xlane.xlu0 %584
    %586 = vadd.xlane.f32.xlu0 %v569
    %v587 = vpop.xlane.xlu0 %586
    %588 = vadd.xlane.f32.xlu0 %v570
    %v589 = vpop.xlane.xlu0 %588
    %590 = vadd.xlane.f32.xlu0 %v571
    %v591 = vpop.xlane.xlu0 %590
    %592 = vadd.xlane.f32.xlu0 %v572
    %v593 = vpop.xlane.xlu0 %592
    %594 = vadd.xlane.f32.xlu0 %v573
    %v595 = vpop.xlane.xlu0 %594
    %596 = vadd.xlane.f32.xlu0 %v574
    %v597 = vpop.xlane.xlu0 %596
    %598 = vadd.xlane.f32.xlu0 %v575
    %v599 = vpop.xlane.xlu0 %598
    %600 = vadd.xlane.f32.xlu0 %v576
    %v601 = vpop.xlane.xlu0 %600
    %602 = vadd.xlane.f32.xlu0 %v577
    %v603 = vpop.xlane.xlu0 %602
    %604 = vadd.xlane.f32.xlu0 %v578
    %v605 = vpop.xlane.xlu0 %604
    %606 = vadd.xlane.f32.xlu0 %v579
    %v607 = vpop.xlane.xlu0 %606
    %608 = vadd.xlane.f32.xlu0 %v580
    %v609 = vpop.xlane.xlu0 %608
    %610 = vadd.xlane.f32.xlu0 %v581
    %v611 = vpop.xlane.xlu0 %610
    %612 = vadd.xlane.f32.xlu0 %v582
    %v613 = vpop.xlane.xlu0 %612
    %614 = vadd.xlane.f32.xlu0 %v583
    %v615 = vpop.xlane.xlu0 %614
    %v616 = vtanh.pop %v585
    %v617 = vtanh.pop %v587
    %v618 = vtanh.pop %v589
    %v619 = vtanh.pop %v591
    %v620 = vtanh.pop %v593
    %v621 = vtanh.pop %v595
    %v622 = vtanh.pop %v597
    %v623 = vtanh.pop %v599
    %v624 = vtanh.pop %v601
    %v625 = vtanh.pop %v603
    %v626 = vtanh.pop %v605
    %v627 = vtanh.pop %v607
    %v628 = vtanh.pop %v609
    %v629 = vtanh.pop %v611
    %v630 = vtanh.pop %v613
    %v631 = vtanh.pop %v615
    %v632 = vlaneseq
    %v633 = vand.u32 %v632, 127
    %vm634 = vcmp.eq.s32.totalorder %v633, 127
    %v635 = vsel %vm634, %v616, %v545
    %v636 = vsel %vm634, %v617, %v546
    %v637 = vsel %vm634, %v618, %v547
    %v638 = vsel %vm634, %v619, %v548
    %v639 = vsel %vm634, %v620, %v549
    %v640 = vsel %vm634, %v621, %v550
    %v641 = vsel %vm634, %v622, %v551
    %v642 = vsel %vm634, %v623, %v552
    %v643 = vsel %vm634, %v624, %v553
    %v644 = vsel %vm634, %v625, %v554
    %v645 = vsel %vm634, %v626, %v555
    %v646 = vsel %vm634, %v627, %v556
    %v647 = vsel %vm634, %v628, %v557
    %v648 = vsel %vm634, %v629, %v558
    %v649 = vsel %vm634, %v630, %v559
    %v650 = vsel %vm634, %v631, %v560
    %651 = vst [vmem:[%s5] sm:$0xff] %v635
    %652 = vst [vmem:[%s5 + $0x8] sm:$0xff] %v636
    %653 = vst [vmem:[%s5 + $0x10] sm:$0xff] %v637
    %654 = vst [vmem:[%s5 + $0x18] sm:$0xff] %v638
    %655 = vst [vmem:[%s5 + $0x20] sm:$0xff] %v639
    %656 = vst [vmem:[%s5 + $0x28] sm:$0xff] %v640
    %657 = vst [vmem:[%s5 + $0x30] sm:$0xff] %v641
    %658 = vst [vmem:[%s5 + $0x38] sm:$0xff] %v642
    %659 = vst [vmem:[%s5 + $0x40] sm:$0xff] %v643
    %660 = vst [vmem:[%s5 + $0x48] sm:$0xff] %v644
    %661 = vst [vmem:[%s5 + $0x50] sm:$0xff] %v645
    %662 = vst [vmem:[%s5 + $0x58] sm:$0xff] %v646
    %663 = vst [vmem:[%s5 + $0x60] sm:$0xff] %v647
    %664 = vst [vmem:[%s5 + $0x68] sm:$0xff] %v648
    %665 = vst [vmem:[%s5 + $0x70] sm:$0xff] %v649
    %666 = vst [vmem:[%s5 + $0x78] sm:$0xff] %v650
    %v667 = vmul.f32 %v64, 2.0
    %v668 = vmul.f32 %v65, 2.0
    %v669 = vmul.f32 %v66, 2.0
    %v670 = vmul.f32 %v67, 2.0
    %v671 = vmul.f32 %v68, 2.0
    %v672 = vmul.f32 %v69, 2.0
    %v673 = vmul.f32 %v70, 2.0
    %v674 = vmul.f32 %v71, 2.0
    %v675 = vmul.f32 %v72, 2.0
    %v676 = vmul.f32 %v73, 2.0
    %v677 = vmul.f32 %v74, 2.0
    %v678 = vmul.f32 %v75, 2.0
    %v679 = vmul.f32 %v76, 2.0
    %v680 = vmul.f32 %v77, 2.0
    %v681 = vmul.f32 %v78, 2.0
    %v682 = vmul.f32 %v79, 2.0
    %683 = vmatprep.subr.bf16.mxu0 0
    %684 = vmatpush1.bf16.msra.mxu0 %v80
    %685 = vmatprep.subr.bf16.mxu0 0
    %686 = vmatpush1.bf16.msra.mxu0 %v81
    %687 = vmatprep.subr.bf16.mxu0 0
    %688 = vmatpush1.bf16.msra.mxu0 %v82
    %689 = vmatprep.subr.bf16.mxu0 0
    %690 = vmatpush1.bf16.msra.mxu0 %v83
    %691 = vmatprep.subr.bf16.mxu0 0
    %692 = vmatpush1.bf16.msra.mxu0 %v84
    %693 = vmatprep.subr.bf16.mxu0 0
    %694 = vmatpush1.bf16.msra.mxu0 %v85
    %695 = vmatprep.subr.bf16.mxu0 0
    %696 = vmatpush1.bf16.msra.mxu0 %v86
    %697 = vmatprep.subr.bf16.mxu0 0
    %698 = vmatpush1.bf16.msra.mxu0 %v87
    %699 = vmatprep.subr.bf16.mxu0 0
    %700 = vmatpush1.bf16.msra.mxu0 0
    %701 = vmatprep.subr.bf16.mxu0 0
    %702 = vmatpush1.bf16.msra.mxu0 0
    %703 = vmatprep.subr.bf16.mxu0 0
    %704 = vmatpush1.bf16.msra.mxu0 0
    %705 = vmatprep.subr.bf16.mxu0 0
    %706 = vmatpush1.bf16.msra.mxu0 0
    %707 = vmatprep.subr.bf16.mxu0 0
    %708 = vmatpush1.bf16.msra.mxu0 0
    %709 = vmatprep.subr.bf16.mxu0 0
    %710 = vmatpush1.bf16.msra.mxu0 0
    %711 = vmatprep.subr.bf16.mxu0 0
    %712 = vmatpush1.bf16.msra.mxu0 0
    %713 = vmatprep.subr.bf16.mxu0 0
    %714 = vmatpush1.bf16.msra.mxu0 0
    %715 = vmatprep.mubr.bf16.mxu0 0
    %716 = vmatmul.mubr.bf16.gmra.mrb[0].mxu0 %v80
    %v717 = vpop.f32.mrb[0].mxu0
    %v718 = vadd.f32 %v667, %v717
    %v719 = vpop.f32.mrb[0].mxu0
    %v720 = vpop.f32.mrb[0].mxu0
    %v721 = vadd.f32 %v668, %v720
    %v722 = vpop.f32.mrb[0].mxu0
    %723 = vmatprep.mubr.bf16.mxu0 0
    %724 = vmatmul.mubr.bf16.gmra.mrb[0].mxu0 %v81
    %v725 = vpop.f32.mrb[0].mxu0
    %v726 = vadd.f32 %v669, %v725
    %v727 = vpop.f32.mrb[0].mxu0
    %v728 = vpop.f32.mrb[0].mxu0
    %v729 = vadd.f32 %v670, %v728
    %v730 = vpop.f32.mrb[0].mxu0
    %731 = vmatprep.mubr.bf16.mxu0 0
    %732 = vmatmul.mubr.bf16.gmra.mrb[0].mxu0 %v82
    %v733 = vpop.f32.mrb[0].mxu0
    %v734 = vadd.f32 %v671, %v733
    %v735 = vpop.f32.mrb[0].mxu0
    %v736 = vpop.f32.mrb[0].mxu0
    %v737 = vadd.f32 %v672, %v736
    %v738 = vpop.f32.mrb[0].mxu0
    %739 = vmatprep.mubr.bf16.mxu0 0
    %740 = vmatmul.mubr.bf16.gmra.mrb[0].mxu0 %v83
    %v741 = vpop.f32.mrb[0].mxu0
    %v742 = vadd.f32 %v673, %v741
    %v743 = vpop.f32.mrb[0].mxu0
    %v744 = vpop.f32.mrb[0].mxu0
    %v745 = vadd.f32 %v674, %v744
    %v746 = vpop.f32.mrb[0].mxu0
    %747 = vmatprep.mubr.bf16.mxu0 0
    %748 = vmatmul.mubr.bf16.gmra.mrb[0].mxu0 %v84
    %v749 = vpop.f32.mrb[0].mxu0
    %v750 = vadd.f32 %v675, %v749
    %v751 = vpop.f32.mrb[0].mxu0
    %v752 = vpop.f32.mrb[0].mxu0
    %v753 = vadd.f32 %v676, %v752
    %v754 = vpop.f32.mrb[0].mxu0
    %755 = vmatprep.mubr.bf16.mxu0 0
    %756 = vmatmul.mubr.bf16.gmra.mrb[0].mxu0 %v85
    %v757 = vpop.f32.mrb[0].mxu0
    %v758 = vadd.f32 %v677, %v757
    %v759 = vpop.f32.mrb[0].mxu0
    %v760 = vpop.f32.mrb[0].mxu0
    %v761 = vadd.f32 %v678, %v760
    %v762 = vpop.f32.mrb[0].mxu0
    %763 = vmatprep.mubr.bf16.mxu0 0
    %764 = vmatmul.mubr.bf16.gmra.mrb[0].mxu0 %v86
    %v765 = vpop.f32.mrb[0].mxu0
    %v766 = vadd.f32 %v679, %v765
    %v767 = vpop.f32.mrb[0].mxu0
    %v768 = vpop.f32.mrb[0].mxu0
    %v769 = vadd.f32 %v680, %v768
    %v770 = vpop.f32.mrb[0].mxu0
    %771 = vmatprep.mubr.bf16.mxu0 0
    %772 = vmatmul.mubr.bf16.gmra.mrb[0].mxu0 %v87
    %v773 = vpop.f32.mrb[0].mxu0
    %v774 = vadd.f32 %v681, %v773
    %v775 = vpop.f32.mrb[0].mxu0
    %v776 = vpop.f32.mrb[0].mxu0
    %v777 = vadd.f32 %v682, %v776
    %v778 = vpop.f32.mrb[0].mxu0
    %779 = vdwg.mxu0
    %v780 = vlaneseq
    %v781 = vshrl.u32 %v780, 7
    %v782 = vadd.s32 %v781, 8
    %v783 = vadd.s32 %v781, 16
    %v784 = vadd.s32 %v781, 24
    %v785 = vadd.s32 %v781, 32
    %v786 = vadd.s32 %v781, 40
    %v787 = vadd.s32 %v781, 48
    %v788 = vadd.s32 %v781, 56
    %v789 = vadd.s32 %v781, 64
    %v790 = vadd.s32 %v781, 72
    %v791 = vadd.s32 %v781, 80
    %v792 = vadd.s32 %v781, 88
    %v793 = vadd.s32 %v781, 96
    %v794 = vadd.s32 %v781, 104
    %v795 = vadd.s32 %v781, 112
    %v796 = vadd.s32 %v781, 120
    %vm797 = vcmp.eq.s32.totalorder %v781, %v633
    %vm798 = vcmp.eq.s32.totalorder %v782, %v633
    %vm799 = vcmp.eq.s32.totalorder %v783, %v633
    %vm800 = vcmp.eq.s32.totalorder %v784, %v633
    %vm801 = vcmp.eq.s32.totalorder %v785, %v633
    %vm802 = vcmp.eq.s32.totalorder %v786, %v633
    %vm803 = vcmp.eq.s32.totalorder %v787, %v633
    %vm804 = vcmp.eq.s32.totalorder %v788, %v633
    %vm805 = vcmp.eq.s32.totalorder %v789, %v633
    %vm806 = vcmp.eq.s32.totalorder %v790, %v633
    %vm807 = vcmp.eq.s32.totalorder %v791, %v633
    %vm808 = vcmp.eq.s32.totalorder %v792, %v633
    %vm809 = vcmp.eq.s32.totalorder %v793, %v633
    %vm810 = vcmp.eq.s32.totalorder %v794, %v633
    %vm811 = vcmp.eq.s32.totalorder %v795, %v633
    %vm812 = vcmp.eq.s32.totalorder %v796, %v633
    %v813 = vsel %vm797, 0.0, %v718
    %v814 = vsel %vm798, 0.0, %v721
    %v815 = vsel %vm799, 0.0, %v726
    %v816 = vsel %vm800, 0.0, %v729
    %v817 = vsel %vm801, 0.0, %v734
    %v818 = vsel %vm802, 0.0, %v737
    %v819 = vsel %vm803, 0.0, %v742
    %v820 = vsel %vm804, 0.0, %v745
    %v821 = vsel %vm805, 0.0, %v750
    %v822 = vsel %vm806, 0.0, %v753
    %v823 = vsel %vm807, 0.0, %v758
    %v824 = vsel %vm808, 0.0, %v761
    %v825 = vsel %vm809, 0.0, %v766
    %v826 = vsel %vm810, 0.0, %v769
    %v827 = vsel %vm811, 0.0, %v774
    %v828 = vsel %vm812, 0.0, %v777
    %829 = vst [vmem:[%s6] sm:$0xff] %v813
    %830 = vst [vmem:[%s6 + $0x8] sm:$0xff] %v814
    %831 = vst [vmem:[%s6 + $0x10] sm:$0xff] %v815
    %832 = vst [vmem:[%s6 + $0x18] sm:$0xff] %v816
    %833 = vst [vmem:[%s6 + $0x20] sm:$0xff] %v817
    %834 = vst [vmem:[%s6 + $0x28] sm:$0xff] %v818
    %835 = vst [vmem:[%s6 + $0x30] sm:$0xff] %v819
    %836 = vst [vmem:[%s6 + $0x38] sm:$0xff] %v820
    %837 = vst [vmem:[%s6 + $0x40] sm:$0xff] %v821
    %838 = vst [vmem:[%s6 + $0x48] sm:$0xff] %v822
    %839 = vst [vmem:[%s6 + $0x50] sm:$0xff] %v823
    %840 = vst [vmem:[%s6 + $0x58] sm:$0xff] %v824
    %841 = vst [vmem:[%s6 + $0x60] sm:$0xff] %v825
    %842 = vst [vmem:[%s6 + $0x68] sm:$0xff] %v826
    %843 = vst [vmem:[%s6 + $0x70] sm:$0xff] %v827
    %844 = vst [vmem:[%s6 + $0x78] sm:$0xff] %v828
    // Predicated region
    $region34: #{graph_unet_forward.5} parent=1 // pred_check
      _
    $region35: #{graph_unet_forward.5} parent=1 // pred_check_branch
      %846 = sbr.rel (0) target = $region37
    $region36: #{graph_unet_forward.5} parent=1 // pred_region
      _
    $region37: #{graph_unet_forward.5} parent=1 // pred_fallthru
      _
    // Predicated region
    $region38: #{graph_unet_forward.5} parent=1 // pred_check
      _
    $region39: #{graph_unet_forward.5} parent=1 // pred_check_branch
      %848 = sbr.rel (0) target = $region41
    $region40: #{graph_unet_forward.5} parent=1 // pred_region
      _
    $region41: #{graph_unet_forward.5} parent=1 // pred_fallthru
      _
    // Predicated region
    $region42: #{graph_unet_forward.5} parent=1 // pred_check
      _
    $region43: #{graph_unet_forward.5} parent=1 // pred_check_branch
      %850 = sbr.rel (0) target = $region45
    $region44: #{graph_unet_forward.5} parent=1 // pred_region
      _
    $region45: #{graph_unet_forward.5} parent=1 // pred_fallthru
      _
    // Predicated region
    $region46: #{graph_unet_forward.5} parent=1 // pred_check
      _
    $region47: #{graph_unet_forward.5} parent=1 // pred_check_branch
      %852 = sbr.rel (0) target = $region49
    $region48: #{graph_unet_forward.5} parent=1 // pred_region
      _
    $region49: #{graph_unet_forward.5} parent=1 // pred_fallthru
      _
    %853 = vsyncpa [#allocation3], 1
    %854 = vsyncpa [#allocation5], 1

// kernel: graph_unet_forward.7
$region0: #{graph_unet_forward.7}
  #allocation0 [shape = 'u32[]', space=smem, size = 0x4, offset = 0x4, fixed_abs, tag = 'smem constant byte address 0x4 - core index']
  #allocation1 [shape = 'u32[144,128]{1,0:T(1,128)}', space=vmem, size = 0x12000, scoped, tag = 'internal scratch']
  %s0 = inlined_call_operand.vmem [shape: f32[128,128], index: 0, kind: input, shape index: {}]
  %s1 = inlined_call_operand.vmem [shape: f32[128,128], index: 1, kind: input, shape index: {}]
  %s2 = inlined_call_operand.vmem [shape: s32[128,1], index: 2, kind: input, shape index: {}]
  %s3 = inlined_call_operand.vmem [shape: bf16[128,128], index: 3, kind: input, shape index: {}]
  %s4 = inlined_call_operand.vmem [shape: f32[1,128], index: 4, kind: input, shape index: {}]
  %s5 = inlined_call_operand.vmem [shape: f32[128,128], index: 5, kind: output, shape index: {}]
  %s6 = sld [smem:[#allocation0]]
  $region30: #{graph_unet_forward.7} parent=0
    _
  %s8 = ssub.s32 1, %s6
  %s9 = scalar_select 0, %s8, %s6
  // Predicated region
  $region2: #{graph_unet_forward.7} parent=0 // pred_check
    _
  $region3: #{graph_unet_forward.7} parent=0 // pred_check_branch
    %11 = sbr.rel (0) target = $region5
  $region4: #{graph_unet_forward.7} parent=0 // pred_region
    _
  $region5: #{graph_unet_forward.7} parent=0 // pred_fallthru
    _
  // Predicated region
  $region6: #{graph_unet_forward.7} parent=0 // pred_check
    _
  $region7: #{graph_unet_forward.7} parent=0 // pred_check_branch
    %13 = sbr.rel (0) target = $region9
  $region8: #{graph_unet_forward.7} parent=0 // pred_region
    _
  $region9: #{graph_unet_forward.7} parent=0 // pred_fallthru
    _
  // Predicated region
  $region10: #{graph_unet_forward.7} parent=0 // pred_check
    _
  $region11: #{graph_unet_forward.7} parent=0 // pred_check_branch
    %15 = sbr.rel (0) target = $region13
  $region12: #{graph_unet_forward.7} parent=0 // pred_region
    _
  $region13: #{graph_unet_forward.7} parent=0 // pred_fallthru
    _
  // Predicated region
  $region14: #{graph_unet_forward.7} parent=0 // pred_check
    _
  $region15: #{graph_unet_forward.7} parent=0 // pred_check_branch
    %17 = sbr.rel (0) target = $region17
  $region16: #{graph_unet_forward.7} parent=0 // pred_region
    _
  $region17: #{graph_unet_forward.7} parent=0 // pred_fallthru
    _
  // Predicated region
  $region18: #{graph_unet_forward.7} parent=0 // pred_check
    _
  $region19: #{graph_unet_forward.7} parent=0 // pred_check_branch
    %19 = sbr.rel (0) target = $region21
  $region20: #{graph_unet_forward.7} parent=0 // pred_region
    _
  $region21: #{graph_unet_forward.7} parent=0 // pred_fallthru
    _
  %v21 = vld [vmem:[%s0] sm:$0xff]
  %v22 = vld [vmem:[%s0 + $0x8] sm:$0xff]
  %v23 = vld [vmem:[%s0 + $0x10] sm:$0xff]
  %v24 = vld [vmem:[%s0 + $0x18] sm:$0xff]
  %v25 = vld [vmem:[%s0 + $0x20] sm:$0xff]
  %v26 = vld [vmem:[%s0 + $0x28] sm:$0xff]
  %v27 = vld [vmem:[%s0 + $0x30] sm:$0xff]
  %v28 = vld [vmem:[%s0 + $0x38] sm:$0xff]
  %v29 = vld [vmem:[%s0 + $0x40] sm:$0xff]
  %v30 = vld [vmem:[%s0 + $0x48] sm:$0xff]
  %v31 = vld [vmem:[%s0 + $0x50] sm:$0xff]
  %v32 = vld [vmem:[%s0 + $0x58] sm:$0xff]
  %v33 = vld [vmem:[%s0 + $0x60] sm:$0xff]
  %v34 = vld [vmem:[%s0 + $0x68] sm:$0xff]
  %v35 = vld [vmem:[%s0 + $0x70] sm:$0xff]
  %v36 = vld [vmem:[%s0 + $0x78] sm:$0xff]
  %v37 = vld [vmem:[%s1] sm:$0xff]
  %v38 = vld [vmem:[%s1 + $0x8] sm:$0xff]
  %v39 = vld [vmem:[%s1 + $0x10] sm:$0xff]
  %v40 = vld [vmem:[%s1 + $0x18] sm:$0xff]
  %v41 = vld [vmem:[%s1 + $0x20] sm:$0xff]
  %v42 = vld [vmem:[%s1 + $0x28] sm:$0xff]
  %v43 = vld [vmem:[%s1 + $0x30] sm:$0xff]
  %v44 = vld [vmem:[%s1 + $0x38] sm:$0xff]
  %v45 = vld [vmem:[%s1 + $0x40] sm:$0xff]
  %v46 = vld [vmem:[%s1 + $0x48] sm:$0xff]
  %v47 = vld [vmem:[%s1 + $0x50] sm:$0xff]
  %v48 = vld [vmem:[%s1 + $0x58] sm:$0xff]
  %v49 = vld [vmem:[%s1 + $0x60] sm:$0xff]
  %v50 = vld [vmem:[%s1 + $0x68] sm:$0xff]
  %v51 = vld [vmem:[%s1 + $0x70] sm:$0xff]
  %v52 = vld [vmem:[%s1 + $0x78] sm:$0xff]
  %v53 = vld [vmem:[%s2] sm:$0xff]
  %v54 = vld [vmem:[%s2 + $0x8] sm:$0xff]
  %v55 = vld [vmem:[%s2 + $0x10] sm:$0xff]
  %v56 = vld [vmem:[%s2 + $0x18] sm:$0xff]
  %v57 = vld [vmem:[%s2 + $0x20] sm:$0xff]
  %v58 = vld [vmem:[%s2 + $0x28] sm:$0xff]
  %v59 = vld [vmem:[%s2 + $0x30] sm:$0xff]
  %v60 = vld [vmem:[%s2 + $0x38] sm:$0xff]
  %v61 = vld [vmem:[%s2 + $0x40] sm:$0xff]
  %v62 = vld [vmem:[%s2 + $0x48] sm:$0xff]
  %v63 = vld [vmem:[%s2 + $0x50] sm:$0xff]
  %v64 = vld [vmem:[%s2 + $0x58] sm:$0xff]
  %v65 = vld [vmem:[%s2 + $0x60] sm:$0xff]
  %v66 = vld [vmem:[%s2 + $0x68] sm:$0xff]
  %v67 = vld [vmem:[%s2 + $0x70] sm:$0xff]
  %v68 = vld [vmem:[%s2 + $0x78] sm:$0xff]
  %v69 = vlaneseq
  %v70 = vand.u32 %v69, 127
  %71 = vset.pattern.permute.xlu0 0
  %72 = vperm.xlu0 %71, %v53
  %v73 = vpop.permute.xlu0 %72
  %74 = vset.pattern.permute.xlu0 0
  %75 = vperm.xlu0 %74, %v54
  %v76 = vpop.permute.xlu0 %75
  %77 = vset.pattern.permute.xlu0 0
  %78 = vperm.xlu0 %77, %v55
  %v79 = vpop.permute.xlu0 %78
  %80 = vset.pattern.permute.xlu0 0
  %81 = vperm.xlu0 %80, %v56
  %v82 = vpop.permute.xlu0 %81
  %83 = vset.pattern.permute.xlu0 0
  %84 = vperm.xlu0 %83, %v57
  %v85 = vpop.permute.xlu0 %84
  %86 = vset.pattern.permute.xlu0 0
  %87 = vperm.xlu0 %86, %v58
  %v88 = vpop.permute.xlu0 %87
  %89 = vset.pattern.permute.xlu0 0
  %90 = vperm.xlu0 %89, %v59
  %v91 = vpop.permute.xlu0 %90
  %92 = vset.pattern.permute.xlu0 0
  %93 = vperm.xlu0 %92, %v60
  %v94 = vpop.permute.xlu0 %93
  %95 = vset.pattern.permute.xlu0 0
  %96 = vperm.xlu0 %95, %v61
  %v97 = vpop.permute.xlu0 %96
  %98 = vset.pattern.permute.xlu0 0
  %99 = vperm.xlu0 %98, %v62
  %v100 = vpop.permute.xlu0 %99
  %101 = vset.pattern.permute.xlu0 0
  %102 = vperm.xlu0 %101, %v63
  %v103 = vpop.permute.xlu0 %102
  %104 = vset.pattern.permute.xlu0 0
  %105 = vperm.xlu0 %104, %v64
  %v106 = vpop.permute.xlu0 %105
  %107 = vset.pattern.permute.xlu0 0
  %108 = vperm.xlu0 %107, %v65
  %v109 = vpop.permute.xlu0 %108
  %110 = vset.pattern.permute.xlu0 0
  %111 = vperm.xlu0 %110, %v66
  %v112 = vpop.permute.xlu0 %111
  %113 = vset.pattern.permute.xlu0 0
  %114 = vperm.xlu0 %113, %v67
  %v115 = vpop.permute.xlu0 %114
  %116 = vset.pattern.permute.xlu0 0
  %117 = vperm.xlu0 %116, %v68
  %v118 = vpop.permute.xlu0 %117
  %vm119 = vcmp.eq.s32.totalorder %v73, %v70
  %vm120 = vcmp.eq.s32.totalorder %v76, %v70
  %vm121 = vcmp.eq.s32.totalorder %v79, %v70
  %vm122 = vcmp.eq.s32.totalorder %v82, %v70
  %vm123 = vcmp.eq.s32.totalorder %v85, %v70
  %vm124 = vcmp.eq.s32.totalorder %v88, %v70
  %vm125 = vcmp.eq.s32.totalorder %v91, %v70
  %vm126 = vcmp.eq.s32.totalorder %v94, %v70
  %vm127 = vcmp.eq.s32.totalorder %v97, %v70
  %vm128 = vcmp.eq.s32.totalorder %v100, %v70
  %vm129 = vcmp.eq.s32.totalorder %v103, %v70
  %vm130 = vcmp.eq.s32.totalorder %v106, %v70
  %vm131 = vcmp.eq.s32.totalorder %v109, %v70
  %vm132 = vcmp.eq.s32.totalorder %v112, %v70
  %vm133 = vcmp.eq.s32.totalorder %v115, %v70
  %vm134 = vcmp.eq.s32.totalorder %v118, %v70
  %v135 = vsel %vm119, 1, 0
  %v136 = vsel %vm120, 1, 0
  %v137 = vsel %vm121, 1, 0
  %v138 = vsel %vm122, 1, 0
  %v139 = vsel %vm123, 1, 0
  %v140 = vsel %vm124, 1, 0
  %v141 = vsel %vm125, 1, 0
  %v142 = vsel %vm126, 1, 0
  %v143 = vsel %vm127, 1, 0
  %v144 = vsel %vm128, 1, 0
  %v145 = vsel %vm129, 1, 0
  %v146 = vsel %vm130, 1, 0
  %v147 = vsel %vm131, 1, 0
  %v148 = vsel %vm132, 1, 0
  %v149 = vsel %vm133, 1, 0
  %v150 = vsel %vm134, 1, 0
  %v151 = vcvt.s32.f32 %v135
  %v152 = vcvt.s32.f32 %v136
  %v153 = vcvt.s32.f32 %v137
  %v154 = vcvt.s32.f32 %v138
  %v155 = vcvt.s32.f32 %v139
  %v156 = vcvt.s32.f32 %v140
  %v157 = vcvt.s32.f32 %v141
  %v158 = vcvt.s32.f32 %v142
  %v159 = vcvt.s32.f32 %v143
  %v160 = vcvt.s32.f32 %v144
  %v161 = vcvt.s32.f32 %v145
  %v162 = vcvt.s32.f32 %v146
  %v163 = vcvt.s32.f32 %v147
  %v164 = vcvt.s32.f32 %v148
  %v165 = vcvt.s32.f32 %v149
  %v166 = vcvt.s32.f32 %v150
  %v167 = vpack.c.bf16 %v152, %v151
  %v168 = vpack.c.bf16 %v154, %v153
  %v169 = vpack.c.bf16 %v156, %v155
  %v170 = vpack.c.bf16 %v158, %v157
  %v171 = vpack.c.bf16 %v160, %v159
  %v172 = vpack.c.bf16 %v162, %v161
  %v173 = vpack.c.bf16 %v164, %v163
  %v174 = vpack.c.bf16 %v166, %v165
  %176 = vset.pattern.permute.xlu0 127
  %177 = vperm.xlu0 %176, %v37
  %v178 = vpop.permute.xlu0 %177
  %181 = vset.pattern.permute.xlu0 127
  %182 = vperm.xlu0 %181, %v38
  %v183 = vpop.permute.xlu0 %182
  %186 = vset.pattern.permute.xlu0 127
  %187 = vperm.xlu0 %186, %v39
  %v188 = vpop.permute.xlu0 %187
  %191 = vset.pattern.permute.xlu0 127
  %192 = vperm.xlu0 %191, %v40
  %v193 = vpop.permute.xlu0 %192
  %196 = vset.pattern.permute.xlu0 127
  %197 = vperm.xlu0 %196, %v41
  %v198 = vpop.permute.xlu0 %197
  %201 = vset.pattern.permute.xlu0 127
  %202 = vperm.xlu0 %201, %v42
  %v203 = vpop.permute.xlu0 %202
  %206 = vset.pattern.permute.xlu0 127
  %207 = vperm.xlu0 %206, %v43
  %v208 = vpop.permute.xlu0 %207
  %211 = vset.pattern.permute.xlu0 127
  %212 = vperm.xlu0 %211, %v44
  %v213 = vpop.permute.xlu0 %212
  %216 = vset.pattern.permute.xlu0 127
  %217 = vperm.xlu0 %216, %v45
  %v218 = vpop.permute.xlu0 %217
  %221 = vset.pattern.permute.xlu0 127
  %222 = vperm.xlu0 %221, %v46
  %v223 = vpop.permute.xlu0 %222
  %226 = vset.pattern.permute.xlu0 127
  %227 = vperm.xlu0 %226, %v47
  %v228 = vpop.permute.xlu0 %227
  %231 = vset.pattern.permute.xlu0 127
  %232 = vperm.xlu0 %231, %v48
  %v233 = vpop.permute.xlu0 %232
  %236 = vset.pattern.permute.xlu0 127
  %237 = vperm.xlu0 %236, %v49
  %v238 = vpop.permute.xlu0 %237
  %241 = vset.pattern.permute.xlu0 127
  %242 = vperm.xlu0 %241, %v50
  %v243 = vpop.permute.xlu0 %242
  %246 = vset.pattern.permute.xlu0 127
  %247 = vperm.xlu0 %246, %v51
  %v248 = vpop.permute.xlu0 %247
  %251 = vset.pattern.permute.xlu0 127
  %252 = vperm.xlu0 %251, %v52
  %v253 = vpop.permute.xlu0 %252
  %v255 = vmul.f32 %v37, %v178
  %v256 = vmul.f32 %v38, %v183
  %v257 = vmul.f32 %v39, %v188
  %v258 = vmul.f32 %v40, %v193
  %v259 = vmul.f32 %v41, %v198
  %v260 = vmul.f32 %v42, %v203
  %v261 = vmul.f32 %v43, %v208
  %v262 = vmul.f32 %v44, %v213
  %v263 = vmul.f32 %v45, %v218
  %v264 = vmul.f32 %v46, %v223
  %v265 = vmul.f32 %v47, %v228
  %v266 = vmul.f32 %v48, %v233
  %v267 = vmul.f32 %v49, %v238
  %v268 = vmul.f32 %v50, %v243
  %v269 = vmul.f32 %v51, %v248
  %v270 = vmul.f32 %v52, %v253
  %v271 = vpack.c.bf16 %v256, %v255
  %v272 = vpack.c.bf16 %v258, %v257
  %v273 = vpack.c.bf16 %v260, %v259
  %v274 = vpack.c.bf16 %v262, %v261
  %v275 = vpack.c.bf16 %v264, %v263
  %v276 = vpack.c.bf16 %v266, %v265
  %v277 = vpack.c.bf16 %v268, %v267
  %v278 = vpack.c.bf16 %v270, %v269
  %279 = vmatprep.subr.bf16.mxu0 0
  %280 = vmatpush1.bf16.msra.mxu0 %v271
  %281 = vmatprep.subr.bf16.mxu0 0
  %282 = vmatpush1.bf16.msra.mxu0 %v272
  %283 = vmatprep.subr.bf16.mxu0 0
  %284 = vmatpush1.bf16.msra.mxu0 %v273
  %285 = vmatprep.subr.bf16.mxu0 0
  %286 = vmatpush1.bf16.msra.mxu0 %v274
  %287 = vmatprep.subr.bf16.mxu0 0
  %288 = vmatpush1.bf16.msra.mxu0 %v275
  %289 = vmatprep.subr.bf16.mxu0 0
  %290 = vmatpush1.bf16.msra.mxu0 %v276
  %291 = vmatprep.subr.bf16.mxu0 0
  %292 = vmatpush1.bf16.msra.mxu0 %v277
  %293 = vmatprep.subr.bf16.mxu0 0
  %294 = vmatpush1.bf16.msra.mxu0 %v278
  %295 = vmatprep.subr.bf16.mxu0 0
  %296 = vmatpush1.bf16.msra.mxu0 0
  %297 = vmatprep.subr.bf16.mxu0 0
  %298 = vmatpush1.bf16.msra.mxu0 0
  %299 = vmatprep.subr.bf16.mxu0 0
  %300 = vmatpush1.bf16.msra.mxu0 0
  %301 = vmatprep.subr.bf16.mxu0 0
  %302 = vmatpush1.bf16.msra.mxu0 0
  %303 = vmatprep.subr.bf16.mxu0 0
  %304 = vmatpush1.bf16.msra.mxu0 0
  %305 = vmatprep.subr.bf16.mxu0 0
  %306 = vmatpush1.bf16.msra.mxu0 0
  %307 = vmatprep.subr.bf16.mxu0 0
  %308 = vmatpush1.bf16.msra.mxu0 0
  %309 = vmatprep.subr.bf16.mxu0 0
  %310 = vmatpush1.bf16.msra.mxu0 0
  %311 = vmatprep.mubr.bf16.mxu0 0
  %312 = vmatmul.mubr.bf16.gmra.mrb[0].mxu0 %v167
  %v313 = vpop.f32.mrb[0].mxu0
  %v314 = vadd.f32 0.0, %v313
  %v315 = vpop.f32.mrb[0].mxu0
  %v316 = vpop.f32.mrb[0].mxu0
  %v317 = vadd.f32 0.0, %v316
  %v318 = vpop.f32.mrb[0].mxu0
  %319 = vmatprep.mubr.bf16.mxu0 0
  %320 = vmatmul.mubr.bf16.gmra.mrb[0].mxu0 %v168
  %v321 = vpop.f32.mrb[0].mxu0
  %v322 = vadd.f32 0.0, %v321
  %v323 = vpop.f32.mrb[0].mxu0
  %v324 = vpop.f32.mrb[0].mxu0
  %v325 = vadd.f32 0.0, %v324
  %v326 = vpop.f32.mrb[0].mxu0
  %327 = vmatprep.mubr.bf16.mxu0 0
  %328 = vmatmul.mubr.bf16.gmra.mrb[0].mxu0 %v169
  %v329 = vpop.f32.mrb[0].mxu0
  %v330 = vadd.f32 0.0, %v329
  %v331 = vpop.f32.mrb[0].mxu0
  %v332 = vpop.f32.mrb[0].mxu0
  %v333 = vadd.f32 0.0, %v332
  %v334 = vpop.f32.mrb[0].mxu0
  %335 = vmatprep.mubr.bf16.mxu0 0
  %336 = vmatmul.mubr.bf16.gmra.mrb[0].mxu0 %v170
  %v337 = vpop.f32.mrb[0].mxu0
  %v338 = vadd.f32 0.0, %v337
  %v339 = vpop.f32.mrb[0].mxu0
  %v340 = vpop.f32.mrb[0].mxu0
  %v341 = vadd.f32 0.0, %v340
  %v342 = vpop.f32.mrb[0].mxu0
  %343 = vmatprep.mubr.bf16.mxu0 0
  %344 = vmatmul.mubr.bf16.gmra.mrb[0].mxu0 %v171
  %v345 = vpop.f32.mrb[0].mxu0
  %v346 = vadd.f32 0.0, %v345
  %v347 = vpop.f32.mrb[0].mxu0
  %v348 = vpop.f32.mrb[0].mxu0
  %v349 = vadd.f32 0.0, %v348
  %v350 = vpop.f32.mrb[0].mxu0
  %351 = vmatprep.mubr.bf16.mxu0 0
  %352 = vmatmul.mubr.bf16.gmra.mrb[0].mxu0 %v172
  %v353 = vpop.f32.mrb[0].mxu0
  %v354 = vadd.f32 0.0, %v353
  %v355 = vpop.f32.mrb[0].mxu0
  %v356 = vpop.f32.mrb[0].mxu0
  %v357 = vadd.f32 0.0, %v356
  %v358 = vpop.f32.mrb[0].mxu0
  %359 = vmatprep.mubr.bf16.mxu0 0
  %360 = vmatmul.mubr.bf16.gmra.mrb[0].mxu0 %v173
  %v361 = vpop.f32.mrb[0].mxu0
  %v362 = vadd.f32 0.0, %v361
  %v363 = vpop.f32.mrb[0].mxu0
  %v364 = vpop.f32.mrb[0].mxu0
  %v365 = vadd.f32 0.0, %v364
  %v366 = vpop.f32.mrb[0].mxu0
  %367 = vmatprep.mubr.bf16.mxu0 0
  %368 = vmatmul.mubr.bf16.gmra.mrb[0].mxu0 %v174
  %v369 = vpop.f32.mrb[0].mxu0
  %v370 = vadd.f32 0.0, %v369
  %v371 = vpop.f32.mrb[0].mxu0
  %v372 = vpop.f32.mrb[0].mxu0
  %v373 = vadd.f32 0.0, %v372
  %v374 = vpop.f32.mrb[0].mxu0
  %375 = vdwg.mxu0
  %v376 = vpack.c.bf16 %v22, %v21
  %v377 = vpack.c.bf16 %v24, %v23
  %v378 = vpack.c.bf16 %v26, %v25
  %v379 = vpack.c.bf16 %v28, %v27
  %v380 = vpack.c.bf16 %v30, %v29
  %v381 = vpack.c.bf16 %v32, %v31
  %v382 = vpack.c.bf16 %v34, %v33
  %v383 = vpack.c.bf16 %v36, %v35
  %384 = vmatprep.subr.bf16.mxu0 0
  %385 = vmatpush1.bf16.msra.mxu0 %v376
  %386 = vmatprep.subr.bf16.mxu0 0
  %387 = vmatpush1.bf16.msra.mxu0 %v377
  %388 = vmatprep.subr.bf16.mxu0 0
  %389 = vmatpush1.bf16.msra.mxu0 %v378
  %390 = vmatprep.subr.bf16.mxu0 0
  %391 = vmatpush1.bf16.msra.mxu0 %v379
  %392 = vmatprep.subr.bf16.mxu0 0
  %393 = vmatpush1.bf16.msra.mxu0 %v380
  %394 = vmatprep.subr.bf16.mxu0 0
  %395 = vmatpush1.bf16.msra.mxu0 %v381
  %396 = vmatprep.subr.bf16.mxu0 0
  %397 = vmatpush1.bf16.msra.mxu0 %v382
  %398 = vmatprep.subr.bf16.mxu0 0
  %399 = vmatpush1.bf16.msra.mxu0 %v383
  %400 = vmatprep.subr.bf16.mxu0 0
  %401 = vmatpush1.bf16.msra.mxu0 0
  %402 = vmatprep.subr.bf16.mxu0 0
  %403 = vmatpush1.bf16.msra.mxu0 0
  %404 = vmatprep.subr.bf16.mxu0 0
  %405 = vmatpush1.bf16.msra.mxu0 0
  %406 = vmatprep.subr.bf16.mxu0 0
  %407 = vmatpush1.bf16.msra.mxu0 0
  %408 = vmatprep.subr.bf16.mxu0 0
  %409 = vmatpush1.bf16.msra.mxu0 0
  %410 = vmatprep.subr.bf16.mxu0 0
  %411 = vmatpush1.bf16.msra.mxu0 0
  %412 = vmatprep.subr.bf16.mxu0 0
  %413 = vmatpush1.bf16.msra.mxu0 0
  %414 = vmatprep.subr.bf16.mxu0 0
  %415 = vmatpush1.bf16.msra.mxu0 0
  %416 = vmatprep.mubr.bf16.mxu0 0
  %417 = vmatmul.mubr.bf16.gmra.mrb[0].mxu0 %v167
  %v418 = vpop.f32.mrb[0].mxu0
  %v419 = vadd.f32 0.0, %v418
  %v420 = vpop.f32.mrb[0].mxu0
  %v421 = vpop.f32.mrb[0].mxu0
  %v422 = vadd.f32 0.0, %v421
  %v423 = vpop.f32.mrb[0].mxu0
  %424 = vmatprep.mubr.bf16.mxu0 0
  %425 = vmatmul.mubr.bf16.gmra.mrb[0].mxu0 %v168
  %v426 = vpop.f32.mrb[0].mxu0
  %v427 = vadd.f32 0.0, %v426
  %v428 = vpop.f32.mrb[0].mxu0
  %v429 = vpop.f32.mrb[0].mxu0
  %v430 = vadd.f32 0.0, %v429
  %v431 = vpop.f32.mrb[0].mxu0
  %432 = vmatprep.mubr.bf16.mxu0 0
  %433 = vmatmul.mubr.bf16.gmra.mrb[0].mxu0 %v169
  %v434 = vpop.f32.mrb[0].mxu0
  %v435 = vadd.f32 0.0, %v434
  %v436 = vpop.f32.mrb[0].mxu0
  %v437 = vpop.f32.mrb[0].mxu0
  %v438 = vadd.f32 0.0, %v437
  %v439 = vpop.f32.mrb[0].mxu0
  %440 = vmatprep.mubr.bf16.mxu0 0
  %441 = vmatmul.mubr.bf16.gmra.mrb[0].mxu0 %v170
  %v442 = vpop.f32.mrb[0].mxu0
  %v443 = vadd.f32 0.0, %v442
  %v444 = vpop.f32.mrb[0].mxu0
  %v445 = vpop.f32.mrb[0].mxu0
  %v446 = vadd.f32 0.0, %v445
  %v447 = vpop.f32.mrb[0].mxu0
  %448 = vmatprep.mubr.bf16.mxu0 0
  %449 = vmatmul.mubr.bf16.gmra.mrb[0].mxu0 %v171
  %v450 = vpop.f32.mrb[0].mxu0
  %v451 = vadd.f32 0.0, %v450
  %v452 = vpop.f32.mrb[0].mxu0
  %v453 = vpop.f32.mrb[0].mxu0
  %v454 = vadd.f32 0.0, %v453
  %v455 = vpop.f32.mrb[0].mxu0
  %456 = vmatprep.mubr.bf16.mxu0 0
  %457 = vmatmul.mubr.bf16.gmra.mrb[0].mxu0 %v172
  %v458 = vpop.f32.mrb[0].mxu0
  %v459 = vadd.f32 0.0, %v458
  %v460 = vpop.f32.mrb[0].mxu0
  %v461 = vpop.f32.mrb[0].mxu0
  %v462 = vadd.f32 0.0, %v461
  %v463 = vpop.f32.mrb[0].mxu0
  %464 = vmatprep.mubr.bf16.mxu0 0
  %465 = vmatmul.mubr.bf16.gmra.mrb[0].mxu0 %v173
  %v466 = vpop.f32.mrb[0].mxu0
  %v467 = vadd.f32 0.0, %v466
  %v468 = vpop.f32.mrb[0].mxu0
  %v469 = vpop.f32.mrb[0].mxu0
  %v470 = vadd.f32 0.0, %v469
  %v471 = vpop.f32.mrb[0].mxu0
  %472 = vmatprep.mubr.bf16.mxu0 0
  %473 = vmatmul.mubr.bf16.gmra.mrb[0].mxu0 %v174
  %v474 = vpop.f32.mrb[0].mxu0
  %v475 = vadd.f32 0.0, %v474
  %v476 = vpop.f32.mrb[0].mxu0
  %v477 = vpop.f32.mrb[0].mxu0
  %v478 = vadd.f32 0.0, %v477
  %v479 = vpop.f32.mrb[0].mxu0
  %480 = vdwg.mxu0
  %v481 = vpack.c.bf16 %v422, %v419
  %v482 = vpack.c.bf16 %v430, %v427
  %v483 = vpack.c.bf16 %v438, %v435
  %v484 = vpack.c.bf16 %v446, %v443
  %v485 = vpack.c.bf16 %v454, %v451
  %v486 = vpack.c.bf16 %v462, %v459
  %v487 = vpack.c.bf16 %v470, %v467
  %v488 = vpack.c.bf16 %v478, %v475
  %489 = vmatprep.subr.bf16.mxu0 0
  %490 = vmatpush1.bf16.xpose.msra.mxu0 %v167
  %491 = vmatprep.subr.bf16.mxu0 0
  %492 = vmatpush1.bf16.xpose.msra.mxu0 %v168
  %493 = vmatprep.subr.bf16.mxu0 0
  %494 = vmatpush1.bf16.xpose.msra.mxu0 %v169
  %495 = vmatprep.subr.bf16.mxu0 0
  %496 = vmatpush1.bf16.xpose.msra.mxu0 %v170
  %497 = vmatprep.subr.bf16.mxu0 0
  %498 = vmatpush1.bf16.xpose.msra.mxu0 %v171
  %499 = vmatprep.subr.bf16.mxu0 0
  %500 = vmatpush1.bf16.xpose.msra.mxu0 %v172
  %501 = vmatprep.subr.bf16.mxu0 0
  %502 = vmatpush1.bf16.xpose.msra.mxu0 %v173
  %503 = vmatprep.subr.bf16.mxu0 0
  %504 = vmatpush1.bf16.xpose.msra.mxu0 %v174
  %505 = vmatprep.subr.bf16.mxu0 0
  %506 = vmatpush1.bf16.xpose.msra.mxu0 0
  %507 = vmatprep.subr.bf16.mxu0 0
  %508 = vmatpush1.bf16.xpose.msra.mxu0 0
  %509 = vmatprep.subr.bf16.mxu0 0
  %510 = vmatpush1.bf16.xpose.msra.mxu0 0
  %511 = vmatprep.subr.bf16.mxu0 0
  %512 = vmatpush1.bf16.xpose.msra.mxu0 0
  %513 = vmatprep.subr.bf16.mxu0 0
  %514 = vmatpush1.bf16.xpose.msra.mxu0 0
  %515 = vmatprep.subr.bf16.mxu0 0
  %516 = vmatpush1.bf16.xpose.msra.mxu0 0
  %517 = vmatprep.subr.bf16.mxu0 0
  %518 = vmatpush1.bf16.xpose.msra.mxu0 0
  %519 = vmatprep.subr.bf16.mxu0 0
  %520 = vmatpush1.bf16.xpose.msra.mxu0 0
  %521 = vmatprep.mubr.bf16.mxu0 0
  %522 = vmatmul.mubr.bf16.gmra.mrb[0].mxu0 %v481
  %v523 = vpop.f32.mrb[0].mxu0
  %v524 = vadd.f32 0.0, %v523
  %v525 = vpop.f32.mrb[0].mxu0
  %v526 = vpop.f32.mrb[0].mxu0
  %v527 = vadd.f32 0.0, %v526
  %v528 = vpop.f32.mrb[0].mxu0
  %529 = vmatprep.mubr.bf16.mxu0 0
  %530 = vmatmul.mubr.bf16.gmra.mrb[0].mxu0 %v482
  %v531 = vpop.f32.mrb[0].mxu0
  %v532 = vadd.f32 0.0, %v531
  %v533 = vpop.f32.mrb[0].mxu0
  %v534 = vpop.f32.mrb[0].mxu0
  %v535 = vadd.f32 0.0, %v534
  %v536 = vpop.f32.mrb[0].mxu0
  %537 = vmatprep.mubr.bf16.mxu0 0
  %538 = vmatmul.mubr.bf16.gmra.mrb[0].mxu0 %v483
  %v539 = vpop.f32.mrb[0].mxu0
  %v540 = vadd.f32 0.0, %v539
  %v541 = vpop.f32.mrb[0].mxu0
  %v542 = vpop.f32.mrb[0].mxu0
  %v543 = vadd.f32 0.0, %v542
  %v544 = vpop.f32.mrb[0].mxu0
  %545 = vmatprep.mubr.bf16.mxu0 0
  %546 = vmatmul.mubr.bf16.gmra.mrb[0].mxu0 %v484
  %v547 = vpop.f32.mrb[0].mxu0
  %v548 = vadd.f32 0.0, %v547
  %v549 = vpop.f32.mrb[0].mxu0
  %v550 = vpop.f32.mrb[0].mxu0
  %v551 = vadd.f32 0.0, %v550
  %v552 = vpop.f32.mrb[0].mxu0
  %553 = vmatprep.mubr.bf16.mxu0 0
  %554 = vmatmul.mubr.bf16.gmra.mrb[0].mxu0 %v485
  %v555 = vpop.f32.mrb[0].mxu0
  %v556 = vadd.f32 0.0, %v555
  %v557 = vpop.f32.mrb[0].mxu0
  %v558 = vpop.f32.mrb[0].mxu0
  %v559 = vadd.f32 0.0, %v558
  %v560 = vpop.f32.mrb[0].mxu0
  %561 = vmatprep.mubr.bf16.mxu0 0
  %562 = vmatmul.mubr.bf16.gmra.mrb[0].mxu0 %v486
  %v563 = vpop.f32.mrb[0].mxu0
  %v564 = vadd.f32 0.0, %v563
  %v565 = vpop.f32.mrb[0].mxu0
  %v566 = vpop.f32.mrb[0].mxu0
  %v567 = vadd.f32 0.0, %v566
  %v568 = vpop.f32.mrb[0].mxu0
  %569 = vmatprep.mubr.bf16.mxu0 0
  %570 = vmatmul.mubr.bf16.gmra.mrb[0].mxu0 %v487
  %v571 = vpop.f32.mrb[0].mxu0
  %v572 = vadd.f32 0.0, %v571
  %v573 = vpop.f32.mrb[0].mxu0
  %v574 = vpop.f32.mrb[0].mxu0
  %v575 = vadd.f32 0.0, %v574
  %v576 = vpop.f32.mrb[0].mxu0
  %577 = vmatprep.mubr.bf16.mxu0 0
  %578 = vmatmul.mubr.bf16.gmra.mrb[0].mxu0 %v488
  %v579 = vpop.f32.mrb[0].mxu0
  %v580 = vadd.f32 0.0, %v579
  %v581 = vpop.f32.mrb[0].mxu0
  %v582 = vpop.f32.mrb[0].mxu0
  %v583 = vadd.f32 0.0, %v582
  %v584 = vpop.f32.mrb[0].mxu0
  %585 = vdwg.mxu0
  %v586 = vpack.c.bf16 %v527, %v524
  %v587 = vpack.c.bf16 %v535, %v532
  %v588 = vpack.c.bf16 %v543, %v540
  %v589 = vpack.c.bf16 %v551, %v548
  %v590 = vpack.c.bf16 %v559, %v556
  %v591 = vpack.c.bf16 %v567, %v564
  %v592 = vpack.c.bf16 %v575, %v572
  %v593 = vpack.c.bf16 %v583, %v580
  %v594 = vld [vmem:[%s3] sm:$0xf]
  %v595 = vld [vmem:[%s3 + $0x4] sm:$0xf]
  %v596 = vld [vmem:[%s3 + $0x8] sm:$0xf]
  %v597 = vld [vmem:[%s3 + $0xc] sm:$0xf]
  %v598 = vld [vmem:[%s3 + $0x10] sm:$0xf]
  %v599 = vld [vmem:[%s3 + $0x14] sm:$0xf]
  %v600 = vld [vmem:[%s3 + $0x18] sm:$0xf]
  %v601 = vld [vmem:[%s3 + $0x1c] sm:$0xf]
  %v602 = vld [vmem:[%s3 + $0x20] sm:$0xf]
  %v603 = vld [vmem:[%s3 + $0x24] sm:$0xf]
  %v604 = vld [vmem:[%s3 + $0x28] sm:$0xf]
  %v605 = vld [vmem:[%s3 + $0x2c] sm:$0xf]
  %v606 = vld [vmem:[%s3 + $0x30] sm:$0xf]
  %v607 = vld [vmem:[%s3 + $0x34] sm:$0xf]
  %v608 = vld [vmem:[%s3 + $0x38] sm:$0xf]
  %v609 = vld [vmem:[%s3 + $0x3c] sm:$0xf]
  %v610 = vld [vmem:[%s4] sm:$0x1]
  %611 = vadd.xlane.f32.xlu0 %v524
  %v612 = vpop.xlane.xlu0 %611
  %613 = vadd.xlane.f32.xlu0 %v527
  %v614 = vpop.xlane.xlu0 %613
  %615 = vadd.xlane.f32.xlu0 %v532
  %v616 = vpop.xlane.xlu0 %615
  %617 = vadd.xlane.f32.xlu0 %v535
  %v618 = vpop.xlane.xlu0 %617
  %619 = vadd.xlane.f32.xlu0 %v540
  %v620 = vpop.xlane.xlu0 %619
  %621 = vadd.xlane.f32.xlu0 %v543
  %v622 = vpop.xlane.xlu0 %621
  %623 = vadd.xlane.f32.xlu0 %v548
  %v624 = vpop.xlane.xlu0 %623
  %625 = vadd.xlane.f32.xlu0 %v551
  %v626 = vpop.xlane.xlu0 %625
  %627 = vadd.xlane.f32.xlu0 %v556
  %v628 = vpop.xlane.xlu0 %627
  %629 = vadd.xlane.f32.xlu0 %v559
  %v630 = vpop.xlane.xlu0 %629
  %631 = vadd.xlane.f32.xlu0 %v564
  %v632 = vpop.xlane.xlu0 %631
  %633 = vadd.xlane.f32.xlu0 %v567
  %v634 = vpop.xlane.xlu0 %633
  %635 = vadd.xlane.f32.xlu0 %v572
  %v636 = vpop.xlane.xlu0 %635
  %637 = vadd.xlane.f32.xlu0 %v575
  %v638 = vpop.xlane.xlu0 %637
  %639 = vadd.xlane.f32.xlu0 %v580
  %v640 = vpop.xlane.xlu0 %639
  %641 = vadd.xlane.f32.xlu0 %v583
  %v642 = vpop.xlane.xlu0 %641
  %v643 = vadd.f32 %v612, 2.0
  %v644 = vadd.f32 %v614, 2.0
  %v645 = vadd.f32 %v616, 2.0
  %v646 = vadd.f32 %v618, 2.0
  %v647 = vadd.f32 %v620, 2.0
  %v648 = vadd.f32 %v622, 2.0
  %v649 = vadd.f32 %v624, 2.0
  %v650 = vadd.f32 %v626, 2.0
  %v651 = vadd.f32 %v628, 2.0
  %v652 = vadd.f32 %v630, 2.0
  %v653 = vadd.f32 %v632, 2.0
  %v654 = vadd.f32 %v634, 2.0
  %v655 = vadd.f32 %v636, 2.0
  %v656 = vadd.f32 %v638, 2.0
  %v657 = vadd.f32 %v640, 2.0
  %v658 = vadd.f32 %v642, 2.0
  %v659 = vrsqrt.pop %v643
  %v660 = vrsqrt.pop %v644
  %v661 = vrsqrt.pop %v645
  %v662 = vrsqrt.pop %v646
  %v663 = vrsqrt.pop %v647
  %v664 = vrsqrt.pop %v648
  %v665 = vrsqrt.pop %v649
  %v666 = vrsqrt.pop %v650
  %v667 = vrsqrt.pop %v651
  %v668 = vrsqrt.pop %v652
  %v669 = vrsqrt.pop %v653
  %v670 = vrsqrt.pop %v654
  %v671 = vrsqrt.pop %v655
  %v672 = vrsqrt.pop %v656
  %v673 = vrsqrt.pop %v657
  %v674 = vrsqrt.pop %v658
  %v675 = vpack.c.bf16 %v317, %v314
  %v676 = vpack.c.bf16 %v325, %v322
  %v677 = vpack.c.bf16 %v333, %v330
  %v678 = vpack.c.bf16 %v341, %v338
  %v679 = vpack.c.bf16 %v349, %v346
  %v680 = vpack.c.bf16 %v357, %v354
  %v681 = vpack.c.bf16 %v365, %v362
  %v682 = vpack.c.bf16 %v373, %v370
  %v699 = vunpack.c.l.b16 %v594
  %v700 = vunpack.c.l.b16 %v595
  %v701 = vunpack.c.l.b16 %v596
  %v702 = vunpack.c.l.b16 %v597
  %v703 = vunpack.c.l.b16 %v598
  %v704 = vunpack.c.l.b16 %v599
  %v705 = vunpack.c.l.b16 %v600
  %v706 = vunpack.c.l.b16 %v601
  %v707 = vunpack.c.l.b16 %v602
  %v708 = vunpack.c.l.b16 %v603
  %v709 = vunpack.c.l.b16 %v604
  %v710 = vunpack.c.l.b16 %v605
  %v711 = vunpack.c.l.b16 %v606
  %v712 = vunpack.c.l.b16 %v607
  %v713 = vunpack.c.l.b16 %v608
  %v714 = vunpack.c.l.b16 %v609
  %v715 = vpack.c.b16 %v700, %v699
  %v716 = vpack.c.b16 %v702, %v701
  %v717 = vpack.c.b16 %v704, %v703
  %v718 = vpack.c.b16 %v706, %v705
  %v719 = vpack.c.b16 %v708, %v707
  %v720 = vpack.c.b16 %v710, %v709
  %v721 = vpack.c.b16 %v712, %v711
  %v722 = vpack.c.b16 %v714, %v713
  %731 = vmatprep.subr.bf16.mxu0 0
  %732 = vmatpush1.bf16.msra.mxu0 %v715
  %733 = vmatprep.subr.bf16.mxu0 0
  %734 = vmatpush1.bf16.msra.mxu0 %v716
  %735 = vmatprep.subr.bf16.mxu0 0
  %736 = vmatpush1.bf16.msra.mxu0 %v717
  %737 = vmatprep.subr.bf16.mxu0 0
  %738 = vmatpush1.bf16.msra.mxu0 %v718
  %739 = vmatprep.subr.bf16.mxu0 0
  %740 = vmatpush1.bf16.msra.mxu0 %v719
  %741 = vmatprep.subr.bf16.mxu0 0
  %742 = vmatpush1.bf16.msra.mxu0 %v720
  %743 = vmatprep.subr.bf16.mxu0 0
  %744 = vmatpush1.bf16.msra.mxu0 %v721
  %745 = vmatprep.subr.bf16.mxu0 0
  %746 = vmatpush1.bf16.msra.mxu0 %v722
  %747 = vmatprep.subr.bf16.mxu0 0
  %748 = vmatpush1.bf16.msra.mxu0 0
  %749 = vmatprep.subr.bf16.mxu0 0
  %750 = vmatpush1.bf16.msra.mxu0 0
  %751 = vmatprep.subr.bf16.mxu0 0
  %752 = vmatpush1.bf16.msra.mxu0 0
  %753 = vmatprep.subr.bf16.mxu0 0
  %754 = vmatpush1.bf16.msra.mxu0 0
  %755 = vmatprep.subr.bf16.mxu0 0
  %756 = vmatpush1.bf16.msra.mxu0 0
  %757 = vmatprep.subr.bf16.mxu0 0
  %758 = vmatpush1.bf16.msra.mxu0 0
  %759 = vmatprep.subr.bf16.mxu0 0
  %760 = vmatpush1.bf16.msra.mxu0 0
  %761 = vmatprep.subr.bf16.mxu0 0
  %762 = vmatpush1.bf16.msra.mxu0 0
  %763 = vmatprep.mubr.bf16.mxu0 0
  %764 = vmatmul.mubr.bf16.gmra.mrb[0].mxu0 %v675
  %v765 = vpop.f32.mrb[0].mxu0
  %v766 = vadd.f32 0.0, %v765
  %v767 = vpop.f32.mrb[0].mxu0
  %v768 = vpop.f32.mrb[0].mxu0
  %v769 = vadd.f32 0.0, %v768
  %v770 = vpop.f32.mrb[0].mxu0
  %771 = vmatprep.mubr.bf16.mxu0 0
  %772 = vmatmul.mubr.bf16.gmra.mrb[0].mxu0 %v676
  %v773 = vpop.f32.mrb[0].mxu0
  %v774 = vadd.f32 0.0, %v773
  %v775 = vpop.f32.mrb[0].mxu0
  %v776 = vpop.f32.mrb[0].mxu0
  %v777 = vadd.f32 0.0, %v776
  %v778 = vpop.f32.mrb[0].mxu0
  %779 = vmatprep.mubr.bf16.mxu0 0
  %780 = vmatmul.mubr.bf16.gmra.mrb[0].mxu0 %v677
  %v781 = vpop.f32.mrb[0].mxu0
  %v782 = vadd.f32 0.0, %v781
  %v783 = vpop.f32.mrb[0].mxu0
  %v784 = vpop.f32.mrb[0].mxu0
  %v785 = vadd.f32 0.0, %v784
  %v786 = vpop.f32.mrb[0].mxu0
  %787 = vmatprep.mubr.bf16.mxu0 0
  %788 = vmatmul.mubr.bf16.gmra.mrb[0].mxu0 %v678
  %v789 = vpop.f32.mrb[0].mxu0
  %v790 = vadd.f32 0.0, %v789
  %v791 = vpop.f32.mrb[0].mxu0
  %v792 = vpop.f32.mrb[0].mxu0
  %v793 = vadd.f32 0.0, %v792
  %v794 = vpop.f32.mrb[0].mxu0
  %795 = vmatprep.mubr.bf16.mxu0 0
  %796 = vmatmul.mubr.bf16.gmra.mrb[0].mxu0 %v679
  %v797 = vpop.f32.mrb[0].mxu0
  %v798 = vadd.f32 0.0, %v797
  %v799 = vpop.f32.mrb[0].mxu0
  %v800 = vpop.f32.mrb[0].mxu0
  %v801 = vadd.f32 0.0, %v800
  %v802 = vpop.f32.mrb[0].mxu0
  %803 = vmatprep.mubr.bf16.mxu0 0
  %804 = vmatmul.mubr.bf16.gmra.mrb[0].mxu0 %v680
  %v805 = vpop.f32.mrb[0].mxu0
  %v806 = vadd.f32 0.0, %v805
  %v807 = vpop.f32.mrb[0].mxu0
  %v808 = vpop.f32.mrb[0].mxu0
  %v809 = vadd.f32 0.0, %v808
  %v810 = vpop.f32.mrb[0].mxu0
  %811 = vmatprep.mubr.bf16.mxu0 0
  %812 = vmatmul.mubr.bf16.gmra.mrb[0].mxu0 %v681
  %v813 = vpop.f32.mrb[0].mxu0
  %v814 = vadd.f32 0.0, %v813
  %v815 = vpop.f32.mrb[0].mxu0
  %v816 = vpop.f32.mrb[0].mxu0
  %v817 = vadd.f32 0.0, %v816
  %v818 = vpop.f32.mrb[0].mxu0
  %819 = vmatprep.mubr.bf16.mxu0 0
  %820 = vmatmul.mubr.bf16.gmra.mrb[0].mxu0 %v682
  %v821 = vpop.f32.mrb[0].mxu0
  %v822 = vadd.f32 0.0, %v821
  %v823 = vpop.f32.mrb[0].mxu0
  %v824 = vpop.f32.mrb[0].mxu0
  %v825 = vadd.f32 0.0, %v824
  %v826 = vpop.f32.mrb[0].mxu0
  %827 = vdwg.mxu0
  %v828 = vmul.f32 %v659, %v766
  %v829 = vmul.f32 %v660, %v769
  %v830 = vmul.f32 %v661, %v774
  %v831 = vmul.f32 %v662, %v777
  %v832 = vmul.f32 %v663, %v782
  %v833 = vmul.f32 %v664, %v785
  %v834 = vmul.f32 %v665, %v790
  %v835 = vmul.f32 %v666, %v793
  %v836 = vmul.f32 %v667, %v798
  %v837 = vmul.f32 %v668, %v801
  %v838 = vmul.f32 %v669, %v806
  %v839 = vmul.f32 %v670, %v809
  %v840 = vmul.f32 %v671, %v814
  %v841 = vmul.f32 %v672, %v817
  %v842 = vmul.f32 %v673, %v822
  %v843 = vmul.f32 %v674, %v825
  %v844 = vpack.c.bf16 %v829, %v828
  %v845 = vpack.c.bf16 %v831, %v830
  %v846 = vpack.c.bf16 %v833, %v832
  %v847 = vpack.c.bf16 %v835, %v834
  %v848 = vpack.c.bf16 %v837, %v836
  %v849 = vpack.c.bf16 %v839, %v838
  %v850 = vpack.c.bf16 %v841, %v840
  %v851 = vpack.c.bf16 %v843, %v842
  %852 = vmatprep.subr.bf16.mxu0 0
  %853 = vmatpush1.bf16.msra.mxu0 %v844
  %854 = vmatprep.subr.bf16.mxu0 0
  %855 = vmatpush1.bf16.msra.mxu0 %v845
  %856 = vmatprep.subr.bf16.mxu0 0
  %857 = vmatpush1.bf16.msra.mxu0 %v846
  %858 = vmatprep.subr.bf16.mxu0 0
  %859 = vmatpush1.bf16.msra.mxu0 %v847
  %860 = vmatprep.subr.bf16.mxu0 0
  %861 = vmatpush1.bf16.msra.mxu0 %v848
  %862 = vmatprep.subr.bf16.mxu0 0
  %863 = vmatpush1.bf16.msra.mxu0 %v849
  %864 = vmatprep.subr.bf16.mxu0 0
  %865 = vmatpush1.bf16.msra.mxu0 %v850
  %866 = vmatprep.subr.bf16.mxu0 0
  %867 = vmatpush1.bf16.msra.mxu0 %v851
  %868 = vmatprep.subr.bf16.mxu0 0
  %869 = vmatpush1.bf16.msra.mxu0 0
  %870 = vmatprep.subr.bf16.mxu0 0
  %871 = vmatpush1.bf16.msra.mxu0 0
  %872 = vmatprep.subr.bf16.mxu0 0
  %873 = vmatpush1.bf16.msra.mxu0 0
  %874 = vmatprep.subr.bf16.mxu0 0
  %875 = vmatpush1.bf16.msra.mxu0 0
  %876 = vmatprep.subr.bf16.mxu0 0
  %877 = vmatpush1.bf16.msra.mxu0 0
  %878 = vmatprep.subr.bf16.mxu0 0
  %879 = vmatpush1.bf16.msra.mxu0 0
  %880 = vmatprep.subr.bf16.mxu0 0
  %881 = vmatpush1.bf16.msra.mxu0 0
  %882 = vmatprep.subr.bf16.mxu0 0
  %883 = vmatpush1.bf16.msra.mxu0 0
  %884 = vmatprep.mubr.bf16.mxu0 0
  %885 = vmatmul.mubr.bf16.gmra.mrb[0].mxu0 %v586
  %v886 = vpop.f32.mrb[0].mxu0
  %v887 = vadd.f32 0.0, %v886
  %v888 = vpop.f32.mrb[0].mxu0
  %v889 = vpop.f32.mrb[0].mxu0
  %v890 = vadd.f32 0.0, %v889
  %v891 = vpop.f32.mrb[0].mxu0
  %892 = vmatprep.mubr.bf16.mxu0 0
  %893 = vmatmul.mubr.bf16.gmra.mrb[0].mxu0 %v587
  %v894 = vpop.f32.mrb[0].mxu0
  %v895 = vadd.f32 0.0, %v894
  %v896 = vpop.f32.mrb[0].mxu0
  %v897 = vpop.f32.mrb[0].mxu0
  %v898 = vadd.f32 0.0, %v897
  %v899 = vpop.f32.mrb[0].mxu0
  %900 = vmatprep.mubr.bf16.mxu0 0
  %901 = vmatmul.mubr.bf16.gmra.mrb[0].mxu0 %v588
  %v902 = vpop.f32.mrb[0].mxu0
  %v903 = vadd.f32 0.0, %v902
  %v904 = vpop.f32.mrb[0].mxu0
  %v905 = vpop.f32.mrb[0].mxu0
  %v906 = vadd.f32 0.0, %v905
  %v907 = vpop.f32.mrb[0].mxu0
  %908 = vmatprep.mubr.bf16.mxu0 0
  %909 = vmatmul.mubr.bf16.gmra.mrb[0].mxu0 %v589
  %v910 = vpop.f32.mrb[0].mxu0
  %v911 = vadd.f32 0.0, %v910
  %v912 = vpop.f32.mrb[0].mxu0
  %v913 = vpop.f32.mrb[0].mxu0
  %v914 = vadd.f32 0.0, %v913
  %v915 = vpop.f32.mrb[0].mxu0
  %916 = vmatprep.mubr.bf16.mxu0 0
  %917 = vmatmul.mubr.bf16.gmra.mrb[0].mxu0 %v590
  %v918 = vpop.f32.mrb[0].mxu0
  %v919 = vadd.f32 0.0, %v918
  %v920 = vpop.f32.mrb[0].mxu0
  %v921 = vpop.f32.mrb[0].mxu0
  %v922 = vadd.f32 0.0, %v921
  %v923 = vpop.f32.mrb[0].mxu0
  %924 = vmatprep.mubr.bf16.mxu0 0
  %925 = vmatmul.mubr.bf16.gmra.mrb[0].mxu0 %v591
  %v926 = vpop.f32.mrb[0].mxu0
  %v927 = vadd.f32 0.0, %v926
  %v928 = vpop.f32.mrb[0].mxu0
  %v929 = vpop.f32.mrb[0].mxu0
  %v930 = vadd.f32 0.0, %v929
  %v931 = vpop.f32.mrb[0].mxu0
  %932 = vmatprep.mubr.bf16.mxu0 0
  %933 = vmatmul.mubr.bf16.gmra.mrb[0].mxu0 %v592
  %v934 = vpop.f32.mrb[0].mxu0
  %v935 = vadd.f32 0.0, %v934
  %v936 = vpop.f32.mrb[0].mxu0
  %v937 = vpop.f32.mrb[0].mxu0
  %v938 = vadd.f32 0.0, %v937
  %v939 = vpop.f32.mrb[0].mxu0
  %940 = vmatprep.mubr.bf16.mxu0 0
  %941 = vmatmul.mubr.bf16.gmra.mrb[0].mxu0 %v593
  %v942 = vpop.f32.mrb[0].mxu0
  %v943 = vadd.f32 0.0, %v942
  %v944 = vpop.f32.mrb[0].mxu0
  %v945 = vpop.f32.mrb[0].mxu0
  %v946 = vadd.f32 0.0, %v945
  %v947 = vpop.f32.mrb[0].mxu0
  %948 = vdwg.mxu0
  %v949 = vmul.f32 %v659, %v887
  %v950 = vmul.f32 %v660, %v890
  %v951 = vmul.f32 %v661, %v895
  %v952 = vmul.f32 %v662, %v898
  %v953 = vmul.f32 %v663, %v903
  %v954 = vmul.f32 %v664, %v906
  %v955 = vmul.f32 %v665, %v911
  %v956 = vmul.f32 %v666, %v914
  %v957 = vmul.f32 %v667, %v919
  %v958 = vmul.f32 %v668, %v922
  %v959 = vmul.f32 %v669, %v927
  %v960 = vmul.f32 %v670, %v930
  %v961 = vmul.f32 %v671, %v935
  %v962 = vmul.f32 %v672, %v938
  %v963 = vmul.f32 %v673, %v943
  %v964 = vmul.f32 %v674, %v946
  %v965 = vmul.f32 %v659, %v828
  %v966 = vmul.f32 %v660, %v829
  %v967 = vmul.f32 %v661, %v830
  %v968 = vmul.f32 %v662, %v831
  %v969 = vmul.f32 %v663, %v832
  %v970 = vmul.f32 %v664, %v833
  %v971 = vmul.f32 %v665, %v834
  %v972 = vmul.f32 %v666, %v835
  %v973 = vmul.f32 %v667, %v836
  %v974 = vmul.f32 %v668, %v837
  %v975 = vmul.f32 %v669, %v838
  %v976 = vmul.f32 %v670, %v839
  %v977 = vmul.f32 %v671, %v840
  %v978 = vmul.f32 %v672, %v841
  %v979 = vmul.f32 %v673, %v842
  %v980 = vmul.f32 %v674, %v843
  %v981 = vmul.f32 %v965, 2.0
  %v982 = vmul.f32 %v966, 2.0
  %v983 = vmul.f32 %v967, 2.0
  %v984 = vmul.f32 %v968, 2.0
  %v985 = vmul.f32 %v969, 2.0
  %v986 = vmul.f32 %v970, 2.0
  %v987 = vmul.f32 %v971, 2.0
  %v988 = vmul.f32 %v972, 2.0
  %v989 = vmul.f32 %v973, 2.0
  %v990 = vmul.f32 %v974, 2.0
  %v991 = vmul.f32 %v975, 2.0
  %v992 = vmul.f32 %v976, 2.0
  %v993 = vmul.f32 %v977, 2.0
  %v994 = vmul.f32 %v978, 2.0
  %v995 = vmul.f32 %v979, 2.0
  %v996 = vmul.f32 %v980, 2.0
  %v997 = vadd.f32 %v949, %v981
  %v998 = vadd.f32 %v950, %v982
  %v999 = vadd.f32 %v951, %v983
  %v1000 = vadd.f32 %v952, %v984
  %v1001 = vadd.f32 %v953, %v985
  %v1002 = vadd.f32 %v954, %v986
  %v1003 = vadd.f32 %v955, %v987
  %v1004 = vadd.f32 %v956, %v988
  %v1005 = vadd.f32 %v957, %v989
  %v1006 = vadd.f32 %v958, %v990
  %v1007 = vadd.f32 %v959, %v991
  %v1008 = vadd.f32 %v960, %v992
  %v1009 = vadd.f32 %v961, %v993
  %v1010 = vadd.f32 %v962, %v994
  %v1011 = vadd.f32 %v963, %v995
  %v1012 = vadd.f32 %v964, %v996
  %v1014 = vlaneseq
  %v1015 = vshrl.u32 %v1014, 7
  %v1016 = vsub.s32 0, %v1015
  %v1017 = vrot.slane %v610, %v1016
  %v1019 = vadd.f32 %v997, %v1017
  %v1020 = vadd.f32 %v998, %v1017
  %v1021 = vadd.f32 %v999, %v1017
  %v1022 = vadd.f32 %v1000, %v1017
  %v1023 = vadd.f32 %v1001, %v1017
  %v1024 = vadd.f32 %v1002, %v1017
  %v1025 = vadd.f32 %v1003, %v1017
  %v1026 = vadd.f32 %v1004, %v1017
  %v1027 = vadd.f32 %v1005, %v1017
  %v1028 = vadd.f32 %v1006, %v1017
  %v1029 = vadd.f32 %v1007, %v1017
  %v1030 = vadd.f32 %v1008, %v1017
  %v1031 = vadd.f32 %v1009, %v1017
  %v1032 = vadd.f32 %v1010, %v1017
  %v1033 = vadd.f32 %v1011, %v1017
  %v1034 = vadd.f32 %v1012, %v1017
  %v1035 = vmax.f32 %v1019, 0.0
  %v1036 = vmax.f32 %v1020, 0.0
  %v1037 = vmax.f32 %v1021, 0.0
  %v1038 = vmax.f32 %v1022, 0.0
  %v1039 = vmax.f32 %v1023, 0.0
  %v1040 = vmax.f32 %v1024, 0.0
  %v1041 = vmax.f32 %v1025, 0.0
  %v1042 = vmax.f32 %v1026, 0.0
  %v1043 = vmax.f32 %v1027, 0.0
  %v1044 = vmax.f32 %v1028, 0.0
  %v1045 = vmax.f32 %v1029, 0.0
  %v1046 = vmax.f32 %v1030, 0.0
  %v1047 = vmax.f32 %v1031, 0.0
  %v1048 = vmax.f32 %v1032, 0.0
  %v1049 = vmax.f32 %v1033, 0.0
  %v1050 = vmax.f32 %v1034, 0.0
  %1051 = vst [vmem:[%s5] sm:$0xff] %v1035
  %1052 = vst [vmem:[%s5 + $0x8] sm:$0xff] %v1036
  %1053 = vst [vmem:[%s5 + $0x10] sm:$0xff] %v1037
  %1054 = vst [vmem:[%s5 + $0x18] sm:$0xff] %v1038
  %1055 = vst [vmem:[%s5 + $0x20] sm:$0xff] %v1039
  %1056 = vst [vmem:[%s5 + $0x28] sm:$0xff] %v1040
  %1057 = vst [vmem:[%s5 + $0x30] sm:$0xff] %v1041
  %1058 = vst [vmem:[%s5 + $0x38] sm:$0xff] %v1042
  %1059 = vst [vmem:[%s5 + $0x40] sm:$0xff] %v1043
  %1060 = vst [vmem:[%s5 + $0x48] sm:$0xff] %v1044
  %1061 = vst [vmem:[%s5 + $0x50] sm:$0xff] %v1045
  %1062 = vst [vmem:[%s5 + $0x58] sm:$0xff] %v1046
  %1063 = vst [vmem:[%s5 + $0x60] sm:$0xff] %v1047
  %1064 = vst [vmem:[%s5 + $0x68] sm:$0xff] %v1048
  %1065 = vst [vmem:[%s5 + $0x70] sm:$0xff] %v1049
  %1066 = vst [vmem:[%s5 + $0x78] sm:$0xff] %v1050
  // Predicated region
  $region22: #{graph_unet_forward.7} parent=0 // pred_check
    _
  $region23: #{graph_unet_forward.7} parent=0 // pred_check_branch
    %1068 = sbr.rel (0) target = $region25
  $region24: #{graph_unet_forward.7} parent=0 // pred_region
    _
  $region25: #{graph_unet_forward.7} parent=0 // pred_fallthru
    _
  // Predicated region
  $region26: #{graph_unet_forward.7} parent=0 // pred_check
    _
  $region27: #{graph_unet_forward.7} parent=0 // pred_check_branch
    %1070 = sbr.rel (0) target = $region29
  $region28: #{graph_unet_forward.7} parent=0 // pred_region
    _
  $region29: #{graph_unet_forward.7} parent=0 // pred_fallthru
    _

// kernel: graph_unet_forward.8
$region0: #{graph_unet_forward.8}
  #allocation0 [shape = 'u32[]', space=smem, size = 0x4, offset = 0x4, fixed_abs, tag = 'smem constant byte address 0x4 - core index']
  #allocation1 [shape = 'u32[144,128]{1,0:T(1,128)}', space=vmem, size = 0x12000, scoped, tag = 'internal scratch']
  %s0 = inlined_call_operand.vmem [shape: f32[128,128], index: 0, kind: input, shape index: {}]
  %s1 = inlined_call_operand.vmem [shape: f32[128,128], index: 1, kind: input, shape index: {}]
  %s2 = inlined_call_operand.vmem [shape: f32[128,128], index: 2, kind: input, shape index: {}]
  %s3 = inlined_call_operand.vmem [shape: s32[1,128], index: 3, kind: input, shape index: {}]
  %s4 = inlined_call_operand.vmem [shape: bf16[128,128], index: 4, kind: input, shape index: {}]
  %s5 = inlined_call_operand.vmem [shape: f32[1,128], index: 5, kind: input, shape index: {}]
  %s6 = inlined_call_operand.vmem [shape: f32[128,128], index: 6, kind: output, shape index: {}]
  %s7 = sld [smem:[#allocation0]]
  $region34: #{graph_unet_forward.8} parent=0
    _
  %s9 = ssub.s32 1, %s7
  %s10 = scalar_select 0, %s9, %s7
  // Predicated region
  $region2: #{graph_unet_forward.8} parent=0 // pred_check
    _
  $region3: #{graph_unet_forward.8} parent=0 // pred_check_branch
    %12 = sbr.rel (0) target = $region5
  $region4: #{graph_unet_forward.8} parent=0 // pred_region
    _
  $region5: #{graph_unet_forward.8} parent=0 // pred_fallthru
    _
  // Predicated region
  $region6: #{graph_unet_forward.8} parent=0 // pred_check
    _
  $region7: #{graph_unet_forward.8} parent=0 // pred_check_branch
    %14 = sbr.rel (0) target = $region9
  $region8: #{graph_unet_forward.8} parent=0 // pred_region
    _
  $region9: #{graph_unet_forward.8} parent=0 // pred_fallthru
    _
  // Predicated region
  $region10: #{graph_unet_forward.8} parent=0 // pred_check
    _
  $region11: #{graph_unet_forward.8} parent=0 // pred_check_branch
    %16 = sbr.rel (0) target = $region13
  $region12: #{graph_unet_forward.8} parent=0 // pred_region
    _
  $region13: #{graph_unet_forward.8} parent=0 // pred_fallthru
    _
  // Predicated region
  $region14: #{graph_unet_forward.8} parent=0 // pred_check
    _
  $region15: #{graph_unet_forward.8} parent=0 // pred_check_branch
    %18 = sbr.rel (0) target = $region17
  $region16: #{graph_unet_forward.8} parent=0 // pred_region
    _
  $region17: #{graph_unet_forward.8} parent=0 // pred_fallthru
    _
  // Predicated region
  $region18: #{graph_unet_forward.8} parent=0 // pred_check
    _
  $region19: #{graph_unet_forward.8} parent=0 // pred_check_branch
    %20 = sbr.rel (0) target = $region21
  $region20: #{graph_unet_forward.8} parent=0 // pred_region
    _
  $region21: #{graph_unet_forward.8} parent=0 // pred_fallthru
    _
  // Predicated region
  $region22: #{graph_unet_forward.8} parent=0 // pred_check
    _
  $region23: #{graph_unet_forward.8} parent=0 // pred_check_branch
    %22 = sbr.rel (0) target = $region25
  $region24: #{graph_unet_forward.8} parent=0 // pred_region
    _
  $region25: #{graph_unet_forward.8} parent=0 // pred_fallthru
    _
  %v24 = vld [vmem:[%s0] sm:$0xff]
  %v25 = vld [vmem:[%s0 + $0x8] sm:$0xff]
  %v26 = vld [vmem:[%s0 + $0x10] sm:$0xff]
  %v27 = vld [vmem:[%s0 + $0x18] sm:$0xff]
  %v28 = vld [vmem:[%s0 + $0x20] sm:$0xff]
  %v29 = vld [vmem:[%s0 + $0x28] sm:$0xff]
  %v30 = vld [vmem:[%s0 + $0x30] sm:$0xff]
  %v31 = vld [vmem:[%s0 + $0x38] sm:$0xff]
  %v32 = vld [vmem:[%s0 + $0x40] sm:$0xff]
  %v33 = vld [vmem:[%s0 + $0x48] sm:$0xff]
  %v34 = vld [vmem:[%s0 + $0x50] sm:$0xff]
  %v35 = vld [vmem:[%s0 + $0x58] sm:$0xff]
  %v36 = vld [vmem:[%s0 + $0x60] sm:$0xff]
  %v37 = vld [vmem:[%s0 + $0x68] sm:$0xff]
  %v38 = vld [vmem:[%s0 + $0x70] sm:$0xff]
  %v39 = vld [vmem:[%s0 + $0x78] sm:$0xff]
  %v40 = vlaneseq
  %v41 = vshrl.u32 %v40, 7
  %v42 = vadd.s32 %v41, 8
  %v43 = vadd.s32 %v41, 16
  %v44 = vadd.s32 %v41, 24
  %v45 = vadd.s32 %v41, 32
  %v46 = vadd.s32 %v41, 40
  %v47 = vadd.s32 %v41, 48
  %v48 = vadd.s32 %v41, 56
  %v49 = vadd.s32 %v41, 64
  %v50 = vadd.s32 %v41, 72
  %v51 = vadd.s32 %v41, 80
  %v52 = vadd.s32 %v41, 88
  %v53 = vadd.s32 %v41, 96
  %v54 = vadd.s32 %v41, 104
  %v55 = vadd.s32 %v41, 112
  %v56 = vadd.s32 %v41, 120
  %v57 = vld [vmem:[%s3] sm:$0x1]
  %v58 = vlaneseq
  %v59 = vshrl.u32 %v58, 7
  %v60 = vsub.s32 0, %v59
  %v61 = vrot.slane %v57, %v60
  %vm62 = vcmp.eq.s32.totalorder %v41, %v61
  %vm63 = vcmp.eq.s32.totalorder %v42, %v61
  %vm64 = vcmp.eq.s32.totalorder %v43, %v61
  %vm65 = vcmp.eq.s32.totalorder %v44, %v61
  %vm66 = vcmp.eq.s32.totalorder %v45, %v61
  %vm67 = vcmp.eq.s32.totalorder %v46, %v61
  %vm68 = vcmp.eq.s32.totalorder %v47, %v61
  %vm69 = vcmp.eq.s32.totalorder %v48, %v61
  %vm70 = vcmp.eq.s32.totalorder %v49, %v61
  %vm71 = vcmp.eq.s32.totalorder %v50, %v61
  %vm72 = vcmp.eq.s32.totalorder %v51, %v61
  %vm73 = vcmp.eq.s32.totalorder %v52, %v61
  %vm74 = vcmp.eq.s32.totalorder %v53, %v61
  %vm75 = vcmp.eq.s32.totalorder %v54, %v61
  %vm76 = vcmp.eq.s32.totalorder %v55, %v61
  %vm77 = vcmp.eq.s32.totalorder %v56, %v61
  %v78 = vsel %vm62, 1, 0
  %v79 = vsel %vm63, 1, 0
  %v80 = vsel %vm64, 1, 0
  %v81 = vsel %vm65, 1, 0
  %v82 = vsel %vm66, 1, 0
  %v83 = vsel %vm67, 1, 0
  %v84 = vsel %vm68, 1, 0
  %v85 = vsel %vm69, 1, 0
  %v86 = vsel %vm70, 1, 0
  %v87 = vsel %vm71, 1, 0
  %v88 = vsel %vm72, 1, 0
  %v89 = vsel %vm73, 1, 0
  %v90 = vsel %vm74, 1, 0
  %v91 = vsel %vm75, 1, 0
  %v92 = vsel %vm76, 1, 0
  %v93 = vsel %vm77, 1, 0
  %v94 = vcvt.s32.f32 %v78
  %v95 = vcvt.s32.f32 %v79
  %v96 = vcvt.s32.f32 %v80
  %v97 = vcvt.s32.f32 %v81
  %v98 = vcvt.s32.f32 %v82
  %v99 = vcvt.s32.f32 %v83
  %v100 = vcvt.s32.f32 %v84
  %v101 = vcvt.s32.f32 %v85
  %v102 = vcvt.s32.f32 %v86
  %v103 = vcvt.s32.f32 %v87
  %v104 = vcvt.s32.f32 %v88
  %v105 = vcvt.s32.f32 %v89
  %v106 = vcvt.s32.f32 %v90
  %v107 = vcvt.s32.f32 %v91
  %v108 = vcvt.s32.f32 %v92
  %v109 = vcvt.s32.f32 %v93
  %v110 = vpack.c.bf16 %v95, %v94
  %v111 = vpack.c.bf16 %v97, %v96
  %v112 = vpack.c.bf16 %v99, %v98
  %v113 = vpack.c.bf16 %v101, %v100
  %v114 = vpack.c.bf16 %v103, %v102
  %v115 = vpack.c.bf16 %v105, %v104
  %v116 = vpack.c.bf16 %v107, %v106
  %v117 = vpack.c.bf16 %v109, %v108
  %v118 = vld [vmem:[%s2] sm:$0xff]
  %v119 = vld [vmem:[%s2 + $0x8] sm:$0xff]
  %v120 = vld [vmem:[%s2 + $0x10] sm:$0xff]
  %v121 = vld [vmem:[%s2 + $0x18] sm:$0xff]
  %v122 = vld [vmem:[%s2 + $0x20] sm:$0xff]
  %v123 = vld [vmem:[%s2 + $0x28] sm:$0xff]
  %v124 = vld [vmem:[%s2 + $0x30] sm:$0xff]
  %v125 = vld [vmem:[%s2 + $0x38] sm:$0xff]
  %v126 = vld [vmem:[%s2 + $0x40] sm:$0xff]
  %v127 = vld [vmem:[%s2 + $0x48] sm:$0xff]
  %v128 = vld [vmem:[%s2 + $0x50] sm:$0xff]
  %v129 = vld [vmem:[%s2 + $0x58] sm:$0xff]
  %v130 = vld [vmem:[%s2 + $0x60] sm:$0xff]
  %v131 = vld [vmem:[%s2 + $0x68] sm:$0xff]
  %v132 = vld [vmem:[%s2 + $0x70] sm:$0xff]
  %v133 = vld [vmem:[%s2 + $0x78] sm:$0xff]
  %v134 = vpack.c.bf16 %v119, %v118
  %v135 = vpack.c.bf16 %v121, %v120
  %v136 = vpack.c.bf16 %v123, %v122
  %v137 = vpack.c.bf16 %v125, %v124
  %v138 = vpack.c.bf16 %v127, %v126
  %v139 = vpack.c.bf16 %v129, %v128
  %v140 = vpack.c.bf16 %v131, %v130
  %v141 = vpack.c.bf16 %v133, %v132
  %142 = vmatprep.subr.bf16.mxu0 0
  %143 = vmatpush1.bf16.msra.mxu0 %v134
  %144 = vmatprep.subr.bf16.mxu0 0
  %145 = vmatpush1.bf16.msra.mxu0 %v135
  %146 = vmatprep.subr.bf16.mxu0 0
  %147 = vmatpush1.bf16.msra.mxu0 %v136
  %148 = vmatprep.subr.bf16.mxu0 0
  %149 = vmatpush1.bf16.msra.mxu0 %v137
  %150 = vmatprep.subr.bf16.mxu0 0
  %151 = vmatpush1.bf16.msra.mxu0 %v138
  %152 = vmatprep.subr.bf16.mxu0 0
  %153 = vmatpush1.bf16.msra.mxu0 %v139
  %154 = vmatprep.subr.bf16.mxu0 0
  %155 = vmatpush1.bf16.msra.mxu0 %v140
  %156 = vmatprep.subr.bf16.mxu0 0
  %157 = vmatpush1.bf16.msra.mxu0 %v141
  %158 = vmatprep.subr.bf16.mxu0 0
  %159 = vmatpush1.bf16.msra.mxu0 0
  %160 = vmatprep.subr.bf16.mxu0 0
  %161 = vmatpush1.bf16.msra.mxu0 0
  %162 = vmatprep.subr.bf16.mxu0 0
  %163 = vmatpush1.bf16.msra.mxu0 0
  %164 = vmatprep.subr.bf16.mxu0 0
  %165 = vmatpush1.bf16.msra.mxu0 0
  %166 = vmatprep.subr.bf16.mxu0 0
  %167 = vmatpush1.bf16.msra.mxu0 0
  %168 = vmatprep.subr.bf16.mxu0 0
  %169 = vmatpush1.bf16.msra.mxu0 0
  %170 = vmatprep.subr.bf16.mxu0 0
  %171 = vmatpush1.bf16.msra.mxu0 0
  %172 = vmatprep.subr.bf16.mxu0 0
  %173 = vmatpush1.bf16.msra.mxu0 0
  %174 = vmatprep.mubr.bf16.mxu0 0
  %175 = vmatmul.mubr.bf16.gmra.mrb[0].mxu0 %v110
  %v176 = vpop.f32.mrb[0].mxu0
  %v177 = vadd.f32 0.0, %v176
  %v178 = vpop.f32.mrb[0].mxu0
  %v179 = vpop.f32.mrb[0].mxu0
  %v180 = vadd.f32 0.0, %v179
  %v181 = vpop.f32.mrb[0].mxu0
  %182 = vmatprep.mubr.bf16.mxu0 0
  %183 = vmatmul.mubr.bf16.gmra.mrb[0].mxu0 %v111
  %v184 = vpop.f32.mrb[0].mxu0
  %v185 = vadd.f32 0.0, %v184
  %v186 = vpop.f32.mrb[0].mxu0
  %v187 = vpop.f32.mrb[0].mxu0
  %v188 = vadd.f32 0.0, %v187
  %v189 = vpop.f32.mrb[0].mxu0
  %190 = vmatprep.mubr.bf16.mxu0 0
  %191 = vmatmul.mubr.bf16.gmra.mrb[0].mxu0 %v112
  %v192 = vpop.f32.mrb[0].mxu0
  %v193 = vadd.f32 0.0, %v192
  %v194 = vpop.f32.mrb[0].mxu0
  %v195 = vpop.f32.mrb[0].mxu0
  %v196 = vadd.f32 0.0, %v195
  %v197 = vpop.f32.mrb[0].mxu0
  %198 = vmatprep.mubr.bf16.mxu0 0
  %199 = vmatmul.mubr.bf16.gmra.mrb[0].mxu0 %v113
  %v200 = vpop.f32.mrb[0].mxu0
  %v201 = vadd.f32 0.0, %v200
  %v202 = vpop.f32.mrb[0].mxu0
  %v203 = vpop.f32.mrb[0].mxu0
  %v204 = vadd.f32 0.0, %v203
  %v205 = vpop.f32.mrb[0].mxu0
  %206 = vmatprep.mubr.bf16.mxu0 0
  %207 = vmatmul.mubr.bf16.gmra.mrb[0].mxu0 %v114
  %v208 = vpop.f32.mrb[0].mxu0
  %v209 = vadd.f32 0.0, %v208
  %v210 = vpop.f32.mrb[0].mxu0
  %v211 = vpop.f32.mrb[0].mxu0
  %v212 = vadd.f32 0.0, %v211
  %v213 = vpop.f32.mrb[0].mxu0
  %214 = vmatprep.mubr.bf16.mxu0 0
  %215 = vmatmul.mubr.bf16.gmra.mrb[0].mxu0 %v115
  %v216 = vpop.f32.mrb[0].mxu0
  %v217 = vadd.f32 0.0, %v216
  %v218 = vpop.f32.mrb[0].mxu0
  %v219 = vpop.f32.mrb[0].mxu0
  %v220 = vadd.f32 0.0, %v219
  %v221 = vpop.f32.mrb[0].mxu0
  %222 = vmatprep.mubr.bf16.mxu0 0
  %223 = vmatmul.mubr.bf16.gmra.mrb[0].mxu0 %v116
  %v224 = vpop.f32.mrb[0].mxu0
  %v225 = vadd.f32 0.0, %v224
  %v226 = vpop.f32.mrb[0].mxu0
  %v227 = vpop.f32.mrb[0].mxu0
  %v228 = vadd.f32 0.0, %v227
  %v229 = vpop.f32.mrb[0].mxu0
  %230 = vmatprep.mubr.bf16.mxu0 0
  %231 = vmatmul.mubr.bf16.gmra.mrb[0].mxu0 %v117
  %v232 = vpop.f32.mrb[0].mxu0
  %v233 = vadd.f32 0.0, %v232
  %v234 = vpop.f32.mrb[0].mxu0
  %v235 = vpop.f32.mrb[0].mxu0
  %v236 = vadd.f32 0.0, %v235
  %v237 = vpop.f32.mrb[0].mxu0
  %238 = vdwg.mxu0
  %v239 = vld [vmem:[%s1] sm:$0xff]
  %v240 = vld [vmem:[%s1 + $0x8] sm:$0xff]
  %v241 = vld [vmem:[%s1 + $0x10] sm:$0xff]
  %v242 = vld [vmem:[%s1 + $0x18] sm:$0xff]
  %v243 = vld [vmem:[%s1 + $0x20] sm:$0xff]
  %v244 = vld [vmem:[%s1 + $0x28] sm:$0xff]
  %v245 = vld [vmem:[%s1 + $0x30] sm:$0xff]
  %v246 = vld [vmem:[%s1 + $0x38] sm:$0xff]
  %v247 = vld [vmem:[%s1 + $0x40] sm:$0xff]
  %v248 = vld [vmem:[%s1 + $0x48] sm:$0xff]
  %v249 = vld [vmem:[%s1 + $0x50] sm:$0xff]
  %v250 = vld [vmem:[%s1 + $0x58] sm:$0xff]
  %v251 = vld [vmem:[%s1 + $0x60] sm:$0xff]
  %v252 = vld [vmem:[%s1 + $0x68] sm:$0xff]
  %v253 = vld [vmem:[%s1 + $0x70] sm:$0xff]
  %v254 = vld [vmem:[%s1 + $0x78] sm:$0xff]
  %v255 = vadd.f32 %v239, %v177
  %v256 = vadd.f32 %v240, %v180
  %v257 = vadd.f32 %v241, %v185
  %v258 = vadd.f32 %v242, %v188
  %v259 = vadd.f32 %v243, %v193
  %v260 = vadd.f32 %v244, %v196
  %v261 = vadd.f32 %v245, %v201
  %v262 = vadd.f32 %v246, %v204
  %v263 = vadd.f32 %v247, %v209
  %v264 = vadd.f32 %v248, %v212
  %v265 = vadd.f32 %v249, %v217
  %v266 = vadd.f32 %v250, %v220
  %v267 = vadd.f32 %v251, %v225
  %v268 = vadd.f32 %v252, %v228
  %v269 = vadd.f32 %v253, %v233
  %v270 = vadd.f32 %v254, %v236
  %v271 = vpack.c.bf16 %v25, %v24
  %v272 = vpack.c.bf16 %v27, %v26
  %v273 = vpack.c.bf16 %v29, %v28
  %v274 = vpack.c.bf16 %v31, %v30
  %v275 = vpack.c.bf16 %v33, %v32
  %v276 = vpack.c.bf16 %v35, %v34
  %v277 = vpack.c.bf16 %v37, %v36
  %v278 = vpack.c.bf16 %v39, %v38
  %v279 = vld [vmem:[%s4] sm:$0xf]
  %v280 = vld [vmem:[%s4 + $0x4] sm:$0xf]
  %v281 = vld [vmem:[%s4 + $0x8] sm:$0xf]
  %v282 = vld [vmem:[%s4 + $0xc] sm:$0xf]
  %v283 = vld [vmem:[%s4 + $0x10] sm:$0xf]
  %v284 = vld [vmem:[%s4 + $0x14] sm:$0xf]
  %v285 = vld [vmem:[%s4 + $0x18] sm:$0xf]
  %v286 = vld [vmem:[%s4 + $0x1c] sm:$0xf]
  %v287 = vld [vmem:[%s4 + $0x20] sm:$0xf]
  %v288 = vld [vmem:[%s4 + $0x24] sm:$0xf]
  %v289 = vld [vmem:[%s4 + $0x28] sm:$0xf]
  %v290 = vld [vmem:[%s4 + $0x2c] sm:$0xf]
  %v291 = vld [vmem:[%s4 + $0x30] sm:$0xf]
  %v292 = vld [vmem:[%s4 + $0x34] sm:$0xf]
  %v293 = vld [vmem:[%s4 + $0x38] sm:$0xf]
  %v294 = vld [vmem:[%s4 + $0x3c] sm:$0xf]
  %v295 = vld [vmem:[%s5] sm:$0x1]
  %296 = vadd.xlane.f32.xlu0 %v24
  %v297 = vpop.xlane.xlu0 %296
  %298 = vadd.xlane.f32.xlu0 %v25
  %v299 = vpop.xlane.xlu0 %298
  %300 = vadd.xlane.f32.xlu0 %v26
  %v301 = vpop.xlane.xlu0 %300
  %302 = vadd.xlane.f32.xlu0 %v27
  %v303 = vpop.xlane.xlu0 %302
  %304 = vadd.xlane.f32.xlu0 %v28
  %v305 = vpop.xlane.xlu0 %304
  %306 = vadd.xlane.f32.xlu0 %v29
  %v307 = vpop.xlane.xlu0 %306
  %308 = vadd.xlane.f32.xlu0 %v30
  %v309 = vpop.xlane.xlu0 %308
  %310 = vadd.xlane.f32.xlu0 %v31
  %v311 = vpop.xlane.xlu0 %310
  %312 = vadd.xlane.f32.xlu0 %v32
  %v313 = vpop.xlane.xlu0 %312
  %314 = vadd.xlane.f32.xlu0 %v33
  %v315 = vpop.xlane.xlu0 %314
  %316 = vadd.xlane.f32.xlu0 %v34
  %v317 = vpop.xlane.xlu0 %316
  %318 = vadd.xlane.f32.xlu0 %v35
  %v319 = vpop.xlane.xlu0 %318
  %320 = vadd.xlane.f32.xlu0 %v36
  %v321 = vpop.xlane.xlu0 %320
  %322 = vadd.xlane.f32.xlu0 %v37
  %v323 = vpop.xlane.xlu0 %322
  %324 = vadd.xlane.f32.xlu0 %v38
  %v325 = vpop.xlane.xlu0 %324
  %326 = vadd.xlane.f32.xlu0 %v39
  %v327 = vpop.xlane.xlu0 %326
  %v328 = vadd.f32 %v297, 2.0
  %v329 = vadd.f32 %v299, 2.0
  %v330 = vadd.f32 %v301, 2.0
  %v331 = vadd.f32 %v303, 2.0
  %v332 = vadd.f32 %v305, 2.0
  %v333 = vadd.f32 %v307, 2.0
  %v334 = vadd.f32 %v309, 2.0
  %v335 = vadd.f32 %v311, 2.0
  %v336 = vadd.f32 %v313, 2.0
  %v337 = vadd.f32 %v315, 2.0
  %v338 = vadd.f32 %v317, 2.0
  %v339 = vadd.f32 %v319, 2.0
  %v340 = vadd.f32 %v321, 2.0
  %v341 = vadd.f32 %v323, 2.0
  %v342 = vadd.f32 %v325, 2.0
  %v343 = vadd.f32 %v327, 2.0
  %v344 = vrsqrt.pop %v328
  %v345 = vrsqrt.pop %v329
  %v346 = vrsqrt.pop %v330
  %v347 = vrsqrt.pop %v331
  %v348 = vrsqrt.pop %v332
  %v349 = vrsqrt.pop %v333
  %v350 = vrsqrt.pop %v334
  %v351 = vrsqrt.pop %v335
  %v352 = vrsqrt.pop %v336
  %v353 = vrsqrt.pop %v337
  %v354 = vrsqrt.pop %v338
  %v355 = vrsqrt.pop %v339
  %v356 = vrsqrt.pop %v340
  %v357 = vrsqrt.pop %v341
  %v358 = vrsqrt.pop %v342
  %v359 = vrsqrt.pop %v343
  %v360 = vpack.c.bf16 %v256, %v255
  %v361 = vpack.c.bf16 %v258, %v257
  %v362 = vpack.c.bf16 %v260, %v259
  %v363 = vpack.c.bf16 %v262, %v261
  %v364 = vpack.c.bf16 %v264, %v263
  %v365 = vpack.c.bf16 %v266, %v265
  %v366 = vpack.c.bf16 %v268, %v267
  %v367 = vpack.c.bf16 %v270, %v269
  %v384 = vunpack.c.l.b16 %v279
  %v385 = vunpack.c.l.b16 %v280
  %v386 = vunpack.c.l.b16 %v281
  %v387 = vunpack.c.l.b16 %v282
  %v388 = vunpack.c.l.b16 %v283
  %v389 = vunpack.c.l.b16 %v284
  %v390 = vunpack.c.l.b16 %v285
  %v391 = vunpack.c.l.b16 %v286
  %v392 = vunpack.c.l.b16 %v287
  %v393 = vunpack.c.l.b16 %v288
  %v394 = vunpack.c.l.b16 %v289
  %v395 = vunpack.c.l.b16 %v290
  %v396 = vunpack.c.l.b16 %v291
  %v397 = vunpack.c.l.b16 %v292
  %v398 = vunpack.c.l.b16 %v293
  %v399 = vunpack.c.l.b16 %v294
  %v400 = vpack.c.b16 %v385, %v384
  %v401 = vpack.c.b16 %v387, %v386
  %v402 = vpack.c.b16 %v389, %v388
  %v403 = vpack.c.b16 %v391, %v390
  %v404 = vpack.c.b16 %v393, %v392
  %v405 = vpack.c.b16 %v395, %v394
  %v406 = vpack.c.b16 %v397, %v396
  %v407 = vpack.c.b16 %v399, %v398
  %416 = vmatprep.subr.bf16.mxu0 0
  %417 = vmatpush1.bf16.msra.mxu0 %v400
  %418 = vmatprep.subr.bf16.mxu0 0
  %419 = vmatpush1.bf16.msra.mxu0 %v401
  %420 = vmatprep.subr.bf16.mxu0 0
  %421 = vmatpush1.bf16.msra.mxu0 %v402
  %422 = vmatprep.subr.bf16.mxu0 0
  %423 = vmatpush1.bf16.msra.mxu0 %v403
  %424 = vmatprep.subr.bf16.mxu0 0
  %425 = vmatpush1.bf16.msra.mxu0 %v404
  %426 = vmatprep.subr.bf16.mxu0 0
  %427 = vmatpush1.bf16.msra.mxu0 %v405
  %428 = vmatprep.subr.bf16.mxu0 0
  %429 = vmatpush1.bf16.msra.mxu0 %v406
  %430 = vmatprep.subr.bf16.mxu0 0
  %431 = vmatpush1.bf16.msra.mxu0 %v407
  %432 = vmatprep.subr.bf16.mxu0 0
  %433 = vmatpush1.bf16.msra.mxu0 0
  %434 = vmatprep.subr.bf16.mxu0 0
  %435 = vmatpush1.bf16.msra.mxu0 0
  %436 = vmatprep.subr.bf16.mxu0 0
  %437 = vmatpush1.bf16.msra.mxu0 0
  %438 = vmatprep.subr.bf16.mxu0 0
  %439 = vmatpush1.bf16.msra.mxu0 0
  %440 = vmatprep.subr.bf16.mxu0 0
  %441 = vmatpush1.bf16.msra.mxu0 0
  %442 = vmatprep.subr.bf16.mxu0 0
  %443 = vmatpush1.bf16.msra.mxu0 0
  %444 = vmatprep.subr.bf16.mxu0 0
  %445 = vmatpush1.bf16.msra.mxu0 0
  %446 = vmatprep.subr.bf16.mxu0 0
  %447 = vmatpush1.bf16.msra.mxu0 0
  %448 = vmatprep.mubr.bf16.mxu0 0
  %449 = vmatmul.mubr.bf16.gmra.mrb[0].mxu0 %v360
  %v450 = vpop.f32.mrb[0].mxu0
  %v451 = vadd.f32 0.0, %v450
  %v452 = vpop.f32.mrb[0].mxu0
  %v453 = vpop.f32.mrb[0].mxu0
  %v454 = vadd.f32 0.0, %v453
  %v455 = vpop.f32.mrb[0].mxu0
  %456 = vmatprep.mubr.bf16.mxu0 0
  %457 = vmatmul.mubr.bf16.gmra.mrb[0].mxu0 %v361
  %v458 = vpop.f32.mrb[0].mxu0
  %v459 = vadd.f32 0.0, %v458
  %v460 = vpop.f32.mrb[0].mxu0
  %v461 = vpop.f32.mrb[0].mxu0
  %v462 = vadd.f32 0.0, %v461
  %v463 = vpop.f32.mrb[0].mxu0
  %464 = vmatprep.mubr.bf16.mxu0 0
  %465 = vmatmul.mubr.bf16.gmra.mrb[0].mxu0 %v362
  %v466 = vpop.f32.mrb[0].mxu0
  %v467 = vadd.f32 0.0, %v466
  %v468 = vpop.f32.mrb[0].mxu0
  %v469 = vpop.f32.mrb[0].mxu0
  %v470 = vadd.f32 0.0, %v469
  %v471 = vpop.f32.mrb[0].mxu0
  %472 = vmatprep.mubr.bf16.mxu0 0
  %473 = vmatmul.mubr.bf16.gmra.mrb[0].mxu0 %v363
  %v474 = vpop.f32.mrb[0].mxu0
  %v475 = vadd.f32 0.0, %v474
  %v476 = vpop.f32.mrb[0].mxu0
  %v477 = vpop.f32.mrb[0].mxu0
  %v478 = vadd.f32 0.0, %v477
  %v479 = vpop.f32.mrb[0].mxu0
  %480 = vmatprep.mubr.bf16.mxu0 0
  %481 = vmatmul.mubr.bf16.gmra.mrb[0].mxu0 %v364
  %v482 = vpop.f32.mrb[0].mxu0
  %v483 = vadd.f32 0.0, %v482
  %v484 = vpop.f32.mrb[0].mxu0
  %v485 = vpop.f32.mrb[0].mxu0
  %v486 = vadd.f32 0.0, %v485
  %v487 = vpop.f32.mrb[0].mxu0
  %488 = vmatprep.mubr.bf16.mxu0 0
  %489 = vmatmul.mubr.bf16.gmra.mrb[0].mxu0 %v365
  %v490 = vpop.f32.mrb[0].mxu0
  %v491 = vadd.f32 0.0, %v490
  %v492 = vpop.f32.mrb[0].mxu0
  %v493 = vpop.f32.mrb[0].mxu0
  %v494 = vadd.f32 0.0, %v493
  %v495 = vpop.f32.mrb[0].mxu0
  %496 = vmatprep.mubr.bf16.mxu0 0
  %497 = vmatmul.mubr.bf16.gmra.mrb[0].mxu0 %v366
  %v498 = vpop.f32.mrb[0].mxu0
  %v499 = vadd.f32 0.0, %v498
  %v500 = vpop.f32.mrb[0].mxu0
  %v501 = vpop.f32.mrb[0].mxu0
  %v502 = vadd.f32 0.0, %v501
  %v503 = vpop.f32.mrb[0].mxu0
  %504 = vmatprep.mubr.bf16.mxu0 0
  %505 = vmatmul.mubr.bf16.gmra.mrb[0].mxu0 %v367
  %v506 = vpop.f32.mrb[0].mxu0
  %v507 = vadd.f32 0.0, %v506
  %v508 = vpop.f32.mrb[0].mxu0
  %v509 = vpop.f32.mrb[0].mxu0
  %v510 = vadd.f32 0.0, %v509
  %v511 = vpop.f32.mrb[0].mxu0
  %512 = vdwg.mxu0
  %v513 = vmul.f32 %v344, %v451
  %v514 = vmul.f32 %v345, %v454
  %v515 = vmul.f32 %v346, %v459
  %v516 = vmul.f32 %v347, %v462
  %v517 = vmul.f32 %v348, %v467
  %v518 = vmul.f32 %v349, %v470
  %v519 = vmul.f32 %v350, %v475
  %v520 = vmul.f32 %v351, %v478
  %v521 = vmul.f32 %v352, %v483
  %v522 = vmul.f32 %v353, %v486
  %v523 = vmul.f32 %v354, %v491
  %v524 = vmul.f32 %v355, %v494
  %v525 = vmul.f32 %v356, %v499
  %v526 = vmul.f32 %v357, %v502
  %v527 = vmul.f32 %v358, %v507
  %v528 = vmul.f32 %v359, %v510
  %v529 = vpack.c.bf16 %v514, %v513
  %v530 = vpack.c.bf16 %v516, %v515
  %v531 = vpack.c.bf16 %v518, %v517
  %v532 = vpack.c.bf16 %v520, %v519
  %v533 = vpack.c.bf16 %v522, %v521
  %v534 = vpack.c.bf16 %v524, %v523
  %v535 = vpack.c.bf16 %v526, %v525
  %v536 = vpack.c.bf16 %v528, %v527
  %537 = vmatprep.subr.bf16.mxu0 0
  %538 = vmatpush1.bf16.msra.mxu0 %v529
  %539 = vmatprep.subr.bf16.mxu0 0
  %540 = vmatpush1.bf16.msra.mxu0 %v530
  %541 = vmatprep.subr.bf16.mxu0 0
  %542 = vmatpush1.bf16.msra.mxu0 %v531
  %543 = vmatprep.subr.bf16.mxu0 0
  %544 = vmatpush1.bf16.msra.mxu0 %v532
  %545 = vmatprep.subr.bf16.mxu0 0
  %546 = vmatpush1.bf16.msra.mxu0 %v533
  %547 = vmatprep.subr.bf16.mxu0 0
  %548 = vmatpush1.bf16.msra.mxu0 %v534
  %549 = vmatprep.subr.bf16.mxu0 0
  %550 = vmatpush1.bf16.msra.mxu0 %v535
  %551 = vmatprep.subr.bf16.mxu0 0
  %552 = vmatpush1.bf16.msra.mxu0 %v536
  %553 = vmatprep.subr.bf16.mxu0 0
  %554 = vmatpush1.bf16.msra.mxu0 0
  %555 = vmatprep.subr.bf16.mxu0 0
  %556 = vmatpush1.bf16.msra.mxu0 0
  %557 = vmatprep.subr.bf16.mxu0 0
  %558 = vmatpush1.bf16.msra.mxu0 0
  %559 = vmatprep.subr.bf16.mxu0 0
  %560 = vmatpush1.bf16.msra.mxu0 0
  %561 = vmatprep.subr.bf16.mxu0 0
  %562 = vmatpush1.bf16.msra.mxu0 0
  %563 = vmatprep.subr.bf16.mxu0 0
  %564 = vmatpush1.bf16.msra.mxu0 0
  %565 = vmatprep.subr.bf16.mxu0 0
  %566 = vmatpush1.bf16.msra.mxu0 0
  %567 = vmatprep.subr.bf16.mxu0 0
  %568 = vmatpush1.bf16.msra.mxu0 0
  %569 = vmatprep.mubr.bf16.mxu0 0
  %570 = vmatmul.mubr.bf16.gmra.mrb[0].mxu0 %v271
  %v571 = vpop.f32.mrb[0].mxu0
  %v572 = vadd.f32 0.0, %v571
  %v573 = vpop.f32.mrb[0].mxu0
  %v574 = vpop.f32.mrb[0].mxu0
  %v575 = vadd.f32 0.0, %v574
  %v576 = vpop.f32.mrb[0].mxu0
  %577 = vmatprep.mubr.bf16.mxu0 0
  %578 = vmatmul.mubr.bf16.gmra.mrb[0].mxu0 %v272
  %v579 = vpop.f32.mrb[0].mxu0
  %v580 = vadd.f32 0.0, %v579
  %v581 = vpop.f32.mrb[0].mxu0
  %v582 = vpop.f32.mrb[0].mxu0
  %v583 = vadd.f32 0.0, %v582
  %v584 = vpop.f32.mrb[0].mxu0
  %585 = vmatprep.mubr.bf16.mxu0 0
  %586 = vmatmul.mubr.bf16.gmra.mrb[0].mxu0 %v273
  %v587 = vpop.f32.mrb[0].mxu0
  %v588 = vadd.f32 0.0, %v587
  %v589 = vpop.f32.mrb[0].mxu0
  %v590 = vpop.f32.mrb[0].mxu0
  %v591 = vadd.f32 0.0, %v590
  %v592 = vpop.f32.mrb[0].mxu0
  %593 = vmatprep.mubr.bf16.mxu0 0
  %594 = vmatmul.mubr.bf16.gmra.mrb[0].mxu0 %v274
  %v595 = vpop.f32.mrb[0].mxu0
  %v596 = vadd.f32 0.0, %v595
  %v597 = vpop.f32.mrb[0].mxu0
  %v598 = vpop.f32.mrb[0].mxu0
  %v599 = vadd.f32 0.0, %v598
  %v600 = vpop.f32.mrb[0].mxu0
  %601 = vmatprep.mubr.bf16.mxu0 0
  %602 = vmatmul.mubr.bf16.gmra.mrb[0].mxu0 %v275
  %v603 = vpop.f32.mrb[0].mxu0
  %v604 = vadd.f32 0.0, %v603
  %v605 = vpop.f32.mrb[0].mxu0
  %v606 = vpop.f32.mrb[0].mxu0
  %v607 = vadd.f32 0.0, %v606
  %v608 = vpop.f32.mrb[0].mxu0
  %609 = vmatprep.mubr.bf16.mxu0 0
  %610 = vmatmul.mubr.bf16.gmra.mrb[0].mxu0 %v276
  %v611 = vpop.f32.mrb[0].mxu0
  %v612 = vadd.f32 0.0, %v611
  %v613 = vpop.f32.mrb[0].mxu0
  %v614 = vpop.f32.mrb[0].mxu0
  %v615 = vadd.f32 0.0, %v614
  %v616 = vpop.f32.mrb[0].mxu0
  %617 = vmatprep.mubr.bf16.mxu0 0
  %618 = vmatmul.mubr.bf16.gmra.mrb[0].mxu0 %v277
  %v619 = vpop.f32.mrb[0].mxu0
  %v620 = vadd.f32 0.0, %v619
  %v621 = vpop.f32.mrb[0].mxu0
  %v622 = vpop.f32.mrb[0].mxu0
  %v623 = vadd.f32 0.0, %v622
  %v624 = vpop.f32.mrb[0].mxu0
  %625 = vmatprep.mubr.bf16.mxu0 0
  %626 = vmatmul.mubr.bf16.gmra.mrb[0].mxu0 %v278
  %v627 = vpop.f32.mrb[0].mxu0
  %v628 = vadd.f32 0.0, %v627
  %v629 = vpop.f32.mrb[0].mxu0
  %v630 = vpop.f32.mrb[0].mxu0
  %v631 = vadd.f32 0.0, %v630
  %v632 = vpop.f32.mrb[0].mxu0
  %633 = vdwg.mxu0
  %v634 = vmul.f32 %v344, %v572
  %v635 = vmul.f32 %v345, %v575
  %v636 = vmul.f32 %v346, %v580
  %v637 = vmul.f32 %v347, %v583
  %v638 = vmul.f32 %v348, %v588
  %v639 = vmul.f32 %v349, %v591
  %v640 = vmul.f32 %v350, %v596
  %v641 = vmul.f32 %v351, %v599
  %v642 = vmul.f32 %v352, %v604
  %v643 = vmul.f32 %v353, %v607
  %v644 = vmul.f32 %v354, %v612
  %v645 = vmul.f32 %v355, %v615
  %v646 = vmul.f32 %v356, %v620
  %v647 = vmul.f32 %v357, %v623
  %v648 = vmul.f32 %v358, %v628
  %v649 = vmul.f32 %v359, %v631
  %v650 = vmul.f32 %v344, %v513
  %v651 = vmul.f32 %v345, %v514
  %v652 = vmul.f32 %v346, %v515
  %v653 = vmul.f32 %v347, %v516
  %v654 = vmul.f32 %v348, %v517
  %v655 = vmul.f32 %v349, %v518
  %v656 = vmul.f32 %v350, %v519
  %v657 = vmul.f32 %v351, %v520
  %v658 = vmul.f32 %v352, %v521
  %v659 = vmul.f32 %v353, %v522
  %v660 = vmul.f32 %v354, %v523
  %v661 = vmul.f32 %v355, %v524
  %v662 = vmul.f32 %v356, %v525
  %v663 = vmul.f32 %v357, %v526
  %v664 = vmul.f32 %v358, %v527
  %v665 = vmul.f32 %v359, %v528
  %v666 = vmul.f32 %v650, 2.0
  %v667 = vmul.f32 %v651, 2.0
  %v668 = vmul.f32 %v652, 2.0
  %v669 = vmul.f32 %v653, 2.0
  %v670 = vmul.f32 %v654, 2.0
  %v671 = vmul.f32 %v655, 2.0
  %v672 = vmul.f32 %v656, 2.0
  %v673 = vmul.f32 %v657, 2.0
  %v674 = vmul.f32 %v658, 2.0
  %v675 = vmul.f32 %v659, 2.0
  %v676 = vmul.f32 %v660, 2.0
  %v677 = vmul.f32 %v661, 2.0
  %v678 = vmul.f32 %v662, 2.0
  %v679 = vmul.f32 %v663, 2.0
  %v680 = vmul.f32 %v664, 2.0
  %v681 = vmul.f32 %v665, 2.0
  %v682 = vadd.f32 %v634, %v666
  %v683 = vadd.f32 %v635, %v667
  %v684 = vadd.f32 %v636, %v668
  %v685 = vadd.f32 %v637, %v669
  %v686 = vadd.f32 %v638, %v670
  %v687 = vadd.f32 %v639, %v671
  %v688 = vadd.f32 %v640, %v672
  %v689 = vadd.f32 %v641, %v673
  %v690 = vadd.f32 %v642, %v674
  %v691 = vadd.f32 %v643, %v675
  %v692 = vadd.f32 %v644, %v676
  %v693 = vadd.f32 %v645, %v677
  %v694 = vadd.f32 %v646, %v678
  %v695 = vadd.f32 %v647, %v679
  %v696 = vadd.f32 %v648, %v680
  %v697 = vadd.f32 %v649, %v681
  %v699 = vlaneseq
  %v700 = vshrl.u32 %v699, 7
  %v701 = vsub.s32 0, %v700
  %v702 = vrot.slane %v295, %v701
  %v704 = vadd.f32 %v682, %v702
  %v705 = vadd.f32 %v683, %v702
  %v706 = vadd.f32 %v684, %v702
  %v707 = vadd.f32 %v685, %v702
  %v708 = vadd.f32 %v686, %v702
  %v709 = vadd.f32 %v687, %v702
  %v710 = vadd.f32 %v688, %v702
  %v711 = vadd.f32 %v689, %v702
  %v712 = vadd.f32 %v690, %v702
  %v713 = vadd.f32 %v691, %v702
  %v714 = vadd.f32 %v692, %v702
  %v715 = vadd.f32 %v693, %v702
  %v716 = vadd.f32 %v694, %v702
  %v717 = vadd.f32 %v695, %v702
  %v718 = vadd.f32 %v696, %v702
  %v719 = vadd.f32 %v697, %v702
  %v720 = vmax.f32 %v704, 0.0
  %v721 = vmax.f32 %v705, 0.0
  %v722 = vmax.f32 %v706, 0.0
  %v723 = vmax.f32 %v707, 0.0
  %v724 = vmax.f32 %v708, 0.0
  %v725 = vmax.f32 %v709, 0.0
  %v726 = vmax.f32 %v710, 0.0
  %v727 = vmax.f32 %v711, 0.0
  %v728 = vmax.f32 %v712, 0.0
  %v729 = vmax.f32 %v713, 0.0
  %v730 = vmax.f32 %v714, 0.0
  %v731 = vmax.f32 %v715, 0.0
  %v732 = vmax.f32 %v716, 0.0
  %v733 = vmax.f32 %v717, 0.0
  %v734 = vmax.f32 %v718, 0.0
  %v735 = vmax.f32 %v719, 0.0
  %736 = vst [vmem:[%s6] sm:$0xff] %v720
  %737 = vst [vmem:[%s6 + $0x8] sm:$0xff] %v721
  %738 = vst [vmem:[%s6 + $0x10] sm:$0xff] %v722
  %739 = vst [vmem:[%s6 + $0x18] sm:$0xff] %v723
  %740 = vst [vmem:[%s6 + $0x20] sm:$0xff] %v724
  %741 = vst [vmem:[%s6 + $0x28] sm:$0xff] %v725
  %742 = vst [vmem:[%s6 + $0x30] sm:$0xff] %v726
  %743 = vst [vmem:[%s6 + $0x38] sm:$0xff] %v727
  %744 = vst [vmem:[%s6 + $0x40] sm:$0xff] %v728
  %745 = vst [vmem:[%s6 + $0x48] sm:$0xff] %v729
  %746 = vst [vmem:[%s6 + $0x50] sm:$0xff] %v730
  %747 = vst [vmem:[%s6 + $0x58] sm:$0xff] %v731
  %748 = vst [vmem:[%s6 + $0x60] sm:$0xff] %v732
  %749 = vst [vmem:[%s6 + $0x68] sm:$0xff] %v733
  %750 = vst [vmem:[%s6 + $0x70] sm:$0xff] %v734
  %751 = vst [vmem:[%s6 + $0x78] sm:$0xff] %v735
  // Predicated region
  $region26: #{graph_unet_forward.8} parent=0 // pred_check
    _
  $region27: #{graph_unet_forward.8} parent=0 // pred_check_branch
    %753 = sbr.rel (0) target = $region29
  $region28: #{graph_unet_forward.8} parent=0 // pred_region
    _
  $region29: #{graph_unet_forward.8} parent=0 // pred_fallthru
    _
  // Predicated region
  $region30: #{graph_unet_forward.8} parent=0 // pred_check
    _
  $region31: #{graph_unet_forward.8} parent=0 // pred_check_branch
    %755 = sbr.rel (0) target = $region33
  $region32: #{graph_unet_forward.8} parent=0 // pred_region
    _
  $region33: #{graph_unet_forward.8} parent=0 // pred_fallthru
    _

// kernel: graph_unet_forward.9
$region0: #{graph_unet_forward.9}
  #allocation0 [shape = 'u32[]', space=smem, size = 0x4, offset = 0x4, fixed_abs, tag = 'smem constant byte address 0x4 - core index']
  #allocation1 [shape = 'u32[144,128]{1,0:T(1,128)}', space=vmem, size = 0x12000, scoped, tag = 'internal scratch']
  %s0 = inlined_call_operand.vmem [shape: f32[128,128], index: 0, kind: input, shape index: {}]
  %s1 = inlined_call_operand.vmem [shape: f32[128,128], index: 1, kind: input, shape index: {}]
  %s2 = inlined_call_operand.vmem [shape: f32[128,128], index: 2, kind: input, shape index: {}]
  %s3 = inlined_call_operand.vmem [shape: s32[1,128], index: 3, kind: input, shape index: {}]
  %s4 = inlined_call_operand.vmem [shape: bf16[128,128], index: 4, kind: input, shape index: {}]
  %s5 = inlined_call_operand.vmem [shape: f32[1,128], index: 5, kind: input, shape index: {}]
  %s6 = inlined_call_operand.vmem [shape: f32[128,128], index: 6, kind: output, shape index: {}]
  %s7 = sld [smem:[#allocation0]]
  $region34: #{graph_unet_forward.9} parent=0
    _
  %s9 = ssub.s32 1, %s7
  %s10 = scalar_select 0, %s9, %s7
  // Predicated region
  $region2: #{graph_unet_forward.9} parent=0 // pred_check
    _
  $region3: #{graph_unet_forward.9} parent=0 // pred_check_branch
    %12 = sbr.rel (0) target = $region5
  $region4: #{graph_unet_forward.9} parent=0 // pred_region
    _
  $region5: #{graph_unet_forward.9} parent=0 // pred_fallthru
    _
  // Predicated region
  $region6: #{graph_unet_forward.9} parent=0 // pred_check
    _
  $region7: #{graph_unet_forward.9} parent=0 // pred_check_branch
    %14 = sbr.rel (0) target = $region9
  $region8: #{graph_unet_forward.9} parent=0 // pred_region
    _
  $region9: #{graph_unet_forward.9} parent=0 // pred_fallthru
    _
  // Predicated region
  $region10: #{graph_unet_forward.9} parent=0 // pred_check
    _
  $region11: #{graph_unet_forward.9} parent=0 // pred_check_branch
    %16 = sbr.rel (0) target = $region13
  $region12: #{graph_unet_forward.9} parent=0 // pred_region
    _
  $region13: #{graph_unet_forward.9} parent=0 // pred_fallthru
    _
  // Predicated region
  $region14: #{graph_unet_forward.9} parent=0 // pred_check
    _
  $region15: #{graph_unet_forward.9} parent=0 // pred_check_branch
    %18 = sbr.rel (0) target = $region17
  $region16: #{graph_unet_forward.9} parent=0 // pred_region
    _
  $region17: #{graph_unet_forward.9} parent=0 // pred_fallthru
    _
  // Predicated region
  $region18: #{graph_unet_forward.9} parent=0 // pred_check
    _
  $region19: #{graph_unet_forward.9} parent=0 // pred_check_branch
    %20 = sbr.rel (0) target = $region21
  $region20: #{graph_unet_forward.9} parent=0 // pred_region
    _
  $region21: #{graph_unet_forward.9} parent=0 // pred_fallthru
    _
  // Predicated region
  $region22: #{graph_unet_forward.9} parent=0 // pred_check
    _
  $region23: #{graph_unet_forward.9} parent=0 // pred_check_branch
    %22 = sbr.rel (0) target = $region25
  $region24: #{graph_unet_forward.9} parent=0 // pred_region
    _
  $region25: #{graph_unet_forward.9} parent=0 // pred_fallthru
    _
  %v24 = vld [vmem:[%s0] sm:$0xff]
  %v25 = vld [vmem:[%s0 + $0x8] sm:$0xff]
  %v26 = vld [vmem:[%s0 + $0x10] sm:$0xff]
  %v27 = vld [vmem:[%s0 + $0x18] sm:$0xff]
  %v28 = vld [vmem:[%s0 + $0x20] sm:$0xff]
  %v29 = vld [vmem:[%s0 + $0x28] sm:$0xff]
  %v30 = vld [vmem:[%s0 + $0x30] sm:$0xff]
  %v31 = vld [vmem:[%s0 + $0x38] sm:$0xff]
  %v32 = vld [vmem:[%s0 + $0x40] sm:$0xff]
  %v33 = vld [vmem:[%s0 + $0x48] sm:$0xff]
  %v34 = vld [vmem:[%s0 + $0x50] sm:$0xff]
  %v35 = vld [vmem:[%s0 + $0x58] sm:$0xff]
  %v36 = vld [vmem:[%s0 + $0x60] sm:$0xff]
  %v37 = vld [vmem:[%s0 + $0x68] sm:$0xff]
  %v38 = vld [vmem:[%s0 + $0x70] sm:$0xff]
  %v39 = vld [vmem:[%s0 + $0x78] sm:$0xff]
  %v40 = vlaneseq
  %v41 = vshrl.u32 %v40, 7
  %v42 = vadd.s32 %v41, 8
  %v43 = vadd.s32 %v41, 16
  %v44 = vadd.s32 %v41, 24
  %v45 = vadd.s32 %v41, 32
  %v46 = vadd.s32 %v41, 40
  %v47 = vadd.s32 %v41, 48
  %v48 = vadd.s32 %v41, 56
  %v49 = vadd.s32 %v41, 64
  %v50 = vadd.s32 %v41, 72
  %v51 = vadd.s32 %v41, 80
  %v52 = vadd.s32 %v41, 88
  %v53 = vadd.s32 %v41, 96
  %v54 = vadd.s32 %v41, 104
  %v55 = vadd.s32 %v41, 112
  %v56 = vadd.s32 %v41, 120
  %v57 = vld [vmem:[%s3] sm:$0x1]
  %v58 = vlaneseq
  %v59 = vshrl.u32 %v58, 7
  %v60 = vsub.s32 0, %v59
  %v61 = vrot.slane %v57, %v60
  %vm62 = vcmp.eq.s32.totalorder %v41, %v61
  %vm63 = vcmp.eq.s32.totalorder %v42, %v61
  %vm64 = vcmp.eq.s32.totalorder %v43, %v61
  %vm65 = vcmp.eq.s32.totalorder %v44, %v61
  %vm66 = vcmp.eq.s32.totalorder %v45, %v61
  %vm67 = vcmp.eq.s32.totalorder %v46, %v61
  %vm68 = vcmp.eq.s32.totalorder %v47, %v61
  %vm69 = vcmp.eq.s32.totalorder %v48, %v61
  %vm70 = vcmp.eq.s32.totalorder %v49, %v61
  %vm71 = vcmp.eq.s32.totalorder %v50, %v61
  %vm72 = vcmp.eq.s32.totalorder %v51, %v61
  %vm73 = vcmp.eq.s32.totalorder %v52, %v61
  %vm74 = vcmp.eq.s32.totalorder %v53, %v61
  %vm75 = vcmp.eq.s32.totalorder %v54, %v61
  %vm76 = vcmp.eq.s32.totalorder %v55, %v61
  %vm77 = vcmp.eq.s32.totalorder %v56, %v61
  %v78 = vsel %vm62, 1, 0
  %v79 = vsel %vm63, 1, 0
  %v80 = vsel %vm64, 1, 0
  %v81 = vsel %vm65, 1, 0
  %v82 = vsel %vm66, 1, 0
  %v83 = vsel %vm67, 1, 0
  %v84 = vsel %vm68, 1, 0
  %v85 = vsel %vm69, 1, 0
  %v86 = vsel %vm70, 1, 0
  %v87 = vsel %vm71, 1, 0
  %v88 = vsel %vm72, 1, 0
  %v89 = vsel %vm73, 1, 0
  %v90 = vsel %vm74, 1, 0
  %v91 = vsel %vm75, 1, 0
  %v92 = vsel %vm76, 1, 0
  %v93 = vsel %vm77, 1, 0
  %v94 = vcvt.s32.f32 %v78
  %v95 = vcvt.s32.f32 %v79
  %v96 = vcvt.s32.f32 %v80
  %v97 = vcvt.s32.f32 %v81
  %v98 = vcvt.s32.f32 %v82
  %v99 = vcvt.s32.f32 %v83
  %v100 = vcvt.s32.f32 %v84
  %v101 = vcvt.s32.f32 %v85
  %v102 = vcvt.s32.f32 %v86
  %v103 = vcvt.s32.f32 %v87
  %v104 = vcvt.s32.f32 %v88
  %v105 = vcvt.s32.f32 %v89
  %v106 = vcvt.s32.f32 %v90
  %v107 = vcvt.s32.f32 %v91
  %v108 = vcvt.s32.f32 %v92
  %v109 = vcvt.s32.f32 %v93
  %v110 = vpack.c.bf16 %v95, %v94
  %v111 = vpack.c.bf16 %v97, %v96
  %v112 = vpack.c.bf16 %v99, %v98
  %v113 = vpack.c.bf16 %v101, %v100
  %v114 = vpack.c.bf16 %v103, %v102
  %v115 = vpack.c.bf16 %v105, %v104
  %v116 = vpack.c.bf16 %v107, %v106
  %v117 = vpack.c.bf16 %v109, %v108
  %v118 = vld [vmem:[%s2] sm:$0xff]
  %v119 = vld [vmem:[%s2 + $0x8] sm:$0xff]
  %v120 = vld [vmem:[%s2 + $0x10] sm:$0xff]
  %v121 = vld [vmem:[%s2 + $0x18] sm:$0xff]
  %v122 = vld [vmem:[%s2 + $0x20] sm:$0xff]
  %v123 = vld [vmem:[%s2 + $0x28] sm:$0xff]
  %v124 = vld [vmem:[%s2 + $0x30] sm:$0xff]
  %v125 = vld [vmem:[%s2 + $0x38] sm:$0xff]
  %v126 = vld [vmem:[%s2 + $0x40] sm:$0xff]
  %v127 = vld [vmem:[%s2 + $0x48] sm:$0xff]
  %v128 = vld [vmem:[%s2 + $0x50] sm:$0xff]
  %v129 = vld [vmem:[%s2 + $0x58] sm:$0xff]
  %v130 = vld [vmem:[%s2 + $0x60] sm:$0xff]
  %v131 = vld [vmem:[%s2 + $0x68] sm:$0xff]
  %v132 = vld [vmem:[%s2 + $0x70] sm:$0xff]
  %v133 = vld [vmem:[%s2 + $0x78] sm:$0xff]
  %v134 = vpack.c.bf16 %v119, %v118
  %v135 = vpack.c.bf16 %v121, %v120
  %v136 = vpack.c.bf16 %v123, %v122
  %v137 = vpack.c.bf16 %v125, %v124
  %v138 = vpack.c.bf16 %v127, %v126
  %v139 = vpack.c.bf16 %v129, %v128
  %v140 = vpack.c.bf16 %v131, %v130
  %v141 = vpack.c.bf16 %v133, %v132
  %142 = vmatprep.subr.bf16.mxu0 0
  %143 = vmatpush1.bf16.msra.mxu0 %v134
  %144 = vmatprep.subr.bf16.mxu0 0
  %145 = vmatpush1.bf16.msra.mxu0 %v135
  %146 = vmatprep.subr.bf16.mxu0 0
  %147 = vmatpush1.bf16.msra.mxu0 %v136
  %148 = vmatprep.subr.bf16.mxu0 0
  %149 = vmatpush1.bf16.msra.mxu0 %v137
  %150 = vmatprep.subr.bf16.mxu0 0
  %151 = vmatpush1.bf16.msra.mxu0 %v138
  %152 = vmatprep.subr.bf16.mxu0 0
  %153 = vmatpush1.bf16.msra.mxu0 %v139
  %154 = vmatprep.subr.bf16.mxu0 0
  %155 = vmatpush1.bf16.msra.mxu0 %v140
  %156 = vmatprep.subr.bf16.mxu0 0
  %157 = vmatpush1.bf16.msra.mxu0 %v141
  %158 = vmatprep.subr.bf16.mxu0 0
  %159 = vmatpush1.bf16.msra.mxu0 0
  %160 = vmatprep.subr.bf16.mxu0 0
  %161 = vmatpush1.bf16.msra.mxu0 0
  %162 = vmatprep.subr.bf16.mxu0 0
  %163 = vmatpush1.bf16.msra.mxu0 0
  %164 = vmatprep.subr.bf16.mxu0 0
  %165 = vmatpush1.bf16.msra.mxu0 0
  %166 = vmatprep.subr.bf16.mxu0 0
  %167 = vmatpush1.bf16.msra.mxu0 0
  %168 = vmatprep.subr.bf16.mxu0 0
  %169 = vmatpush1.bf16.msra.mxu0 0
  %170 = vmatprep.subr.bf16.mxu0 0
  %171 = vmatpush1.bf16.msra.mxu0 0
  %172 = vmatprep.subr.bf16.mxu0 0
  %173 = vmatpush1.bf16.msra.mxu0 0
  %174 = vmatprep.mubr.bf16.mxu0 0
  %175 = vmatmul.mubr.bf16.gmra.mrb[0].mxu0 %v110
  %v176 = vpop.f32.mrb[0].mxu0
  %v177 = vadd.f32 0.0, %v176
  %v178 = vpop.f32.mrb[0].mxu0
  %v179 = vpop.f32.mrb[0].mxu0
  %v180 = vadd.f32 0.0, %v179
  %v181 = vpop.f32.mrb[0].mxu0
  %182 = vmatprep.mubr.bf16.mxu0 0
  %183 = vmatmul.mubr.bf16.gmra.mrb[0].mxu0 %v111
  %v184 = vpop.f32.mrb[0].mxu0
  %v185 = vadd.f32 0.0, %v184
  %v186 = vpop.f32.mrb[0].mxu0
  %v187 = vpop.f32.mrb[0].mxu0
  %v188 = vadd.f32 0.0, %v187
  %v189 = vpop.f32.mrb[0].mxu0
  %190 = vmatprep.mubr.bf16.mxu0 0
  %191 = vmatmul.mubr.bf16.gmra.mrb[0].mxu0 %v112
  %v192 = vpop.f32.mrb[0].mxu0
  %v193 = vadd.f32 0.0, %v192
  %v194 = vpop.f32.mrb[0].mxu0
  %v195 = vpop.f32.mrb[0].mxu0
  %v196 = vadd.f32 0.0, %v195
  %v197 = vpop.f32.mrb[0].mxu0
  %198 = vmatprep.mubr.bf16.mxu0 0
  %199 = vmatmul.mubr.bf16.gmra.mrb[0].mxu0 %v113
  %v200 = vpop.f32.mrb[0].mxu0
  %v201 = vadd.f32 0.0, %v200
  %v202 = vpop.f32.mrb[0].mxu0
  %v203 = vpop.f32.mrb[0].mxu0
  %v204 = vadd.f32 0.0, %v203
  %v205 = vpop.f32.mrb[0].mxu0
  %206 = vmatprep.mubr.bf16.mxu0 0
  %207 = vmatmul.mubr.bf16.gmra.mrb[0].mxu0 %v114
  %v208 = vpop.f32.mrb[0].mxu0
  %v209 = vadd.f32 0.0, %v208
  %v210 = vpop.f32.mrb[0].mxu0
  %v211 = vpop.f32.mrb[0].mxu0
  %v212 = vadd.f32 0.0, %v211
  %v213 = vpop.f32.mrb[0].mxu0
  %214 = vmatprep.mubr.bf16.mxu0 0
  %215 = vmatmul.mubr.bf16.gmra.mrb[0].mxu0 %v115
  %v216 = vpop.f32.mrb[0].mxu0
  %v217 = vadd.f32 0.0, %v216
  %v218 = vpop.f32.mrb[0].mxu0
  %v219 = vpop.f32.mrb[0].mxu0
  %v220 = vadd.f32 0.0, %v219
  %v221 = vpop.f32.mrb[0].mxu0
  %222 = vmatprep.mubr.bf16.mxu0 0
  %223 = vmatmul.mubr.bf16.gmra.mrb[0].mxu0 %v116
  %v224 = vpop.f32.mrb[0].mxu0
  %v225 = vadd.f32 0.0, %v224
  %v226 = vpop.f32.mrb[0].mxu0
  %v227 = vpop.f32.mrb[0].mxu0
  %v228 = vadd.f32 0.0, %v227
  %v229 = vpop.f32.mrb[0].mxu0
  %230 = vmatprep.mubr.bf16.mxu0 0
  %231 = vmatmul.mubr.bf16.gmra.mrb[0].mxu0 %v117
  %v232 = vpop.f32.mrb[0].mxu0
  %v233 = vadd.f32 0.0, %v232
  %v234 = vpop.f32.mrb[0].mxu0
  %v235 = vpop.f32.mrb[0].mxu0
  %v236 = vadd.f32 0.0, %v235
  %v237 = vpop.f32.mrb[0].mxu0
  %238 = vdwg.mxu0
  %v239 = vld [vmem:[%s1] sm:$0xff]
  %v240 = vld [vmem:[%s1 + $0x8] sm:$0xff]
  %v241 = vld [vmem:[%s1 + $0x10] sm:$0xff]
  %v242 = vld [vmem:[%s1 + $0x18] sm:$0xff]
  %v243 = vld [vmem:[%s1 + $0x20] sm:$0xff]
  %v244 = vld [vmem:[%s1 + $0x28] sm:$0xff]
  %v245 = vld [vmem:[%s1 + $0x30] sm:$0xff]
  %v246 = vld [vmem:[%s1 + $0x38] sm:$0xff]
  %v247 = vld [vmem:[%s1 + $0x40] sm:$0xff]
  %v248 = vld [vmem:[%s1 + $0x48] sm:$0xff]
  %v249 = vld [vmem:[%s1 + $0x50] sm:$0xff]
  %v250 = vld [vmem:[%s1 + $0x58] sm:$0xff]
  %v251 = vld [vmem:[%s1 + $0x60] sm:$0xff]
  %v252 = vld [vmem:[%s1 + $0x68] sm:$0xff]
  %v253 = vld [vmem:[%s1 + $0x70] sm:$0xff]
  %v254 = vld [vmem:[%s1 + $0x78] sm:$0xff]
  %v255 = vadd.f32 %v239, %v177
  %v256 = vadd.f32 %v240, %v180
  %v257 = vadd.f32 %v241, %v185
  %v258 = vadd.f32 %v242, %v188
  %v259 = vadd.f32 %v243, %v193
  %v260 = vadd.f32 %v244, %v196
  %v261 = vadd.f32 %v245, %v201
  %v262 = vadd.f32 %v246, %v204
  %v263 = vadd.f32 %v247, %v209
  %v264 = vadd.f32 %v248, %v212
  %v265 = vadd.f32 %v249, %v217
  %v266 = vadd.f32 %v250, %v220
  %v267 = vadd.f32 %v251, %v225
  %v268 = vadd.f32 %v252, %v228
  %v269 = vadd.f32 %v253, %v233
  %v270 = vadd.f32 %v254, %v236
  %v271 = vpack.c.bf16 %v25, %v24
  %v272 = vpack.c.bf16 %v27, %v26
  %v273 = vpack.c.bf16 %v29, %v28
  %v274 = vpack.c.bf16 %v31, %v30
  %v275 = vpack.c.bf16 %v33, %v32
  %v276 = vpack.c.bf16 %v35, %v34
  %v277 = vpack.c.bf16 %v37, %v36
  %v278 = vpack.c.bf16 %v39, %v38
  %v279 = vld [vmem:[%s4] sm:$0xf]
  %v280 = vld [vmem:[%s4 + $0x4] sm:$0xf]
  %v281 = vld [vmem:[%s4 + $0x8] sm:$0xf]
  %v282 = vld [vmem:[%s4 + $0xc] sm:$0xf]
  %v283 = vld [vmem:[%s4 + $0x10] sm:$0xf]
  %v284 = vld [vmem:[%s4 + $0x14] sm:$0xf]
  %v285 = vld [vmem:[%s4 + $0x18] sm:$0xf]
  %v286 = vld [vmem:[%s4 + $0x1c] sm:$0xf]
  %v287 = vld [vmem:[%s4 + $0x20] sm:$0xf]
  %v288 = vld [vmem:[%s4 + $0x24] sm:$0xf]
  %v289 = vld [vmem:[%s4 + $0x28] sm:$0xf]
  %v290 = vld [vmem:[%s4 + $0x2c] sm:$0xf]
  %v291 = vld [vmem:[%s4 + $0x30] sm:$0xf]
  %v292 = vld [vmem:[%s4 + $0x34] sm:$0xf]
  %v293 = vld [vmem:[%s4 + $0x38] sm:$0xf]
  %v294 = vld [vmem:[%s4 + $0x3c] sm:$0xf]
  %v295 = vld [vmem:[%s5] sm:$0x1]
  %296 = vadd.xlane.f32.xlu0 %v24
  %v297 = vpop.xlane.xlu0 %296
  %298 = vadd.xlane.f32.xlu0 %v25
  %v299 = vpop.xlane.xlu0 %298
  %300 = vadd.xlane.f32.xlu0 %v26
  %v301 = vpop.xlane.xlu0 %300
  %302 = vadd.xlane.f32.xlu0 %v27
  %v303 = vpop.xlane.xlu0 %302
  %304 = vadd.xlane.f32.xlu0 %v28
  %v305 = vpop.xlane.xlu0 %304
  %306 = vadd.xlane.f32.xlu0 %v29
  %v307 = vpop.xlane.xlu0 %306
  %308 = vadd.xlane.f32.xlu0 %v30
  %v309 = vpop.xlane.xlu0 %308
  %310 = vadd.xlane.f32.xlu0 %v31
  %v311 = vpop.xlane.xlu0 %310
  %312 = vadd.xlane.f32.xlu0 %v32
  %v313 = vpop.xlane.xlu0 %312
  %314 = vadd.xlane.f32.xlu0 %v33
  %v315 = vpop.xlane.xlu0 %314
  %316 = vadd.xlane.f32.xlu0 %v34
  %v317 = vpop.xlane.xlu0 %316
  %318 = vadd.xlane.f32.xlu0 %v35
  %v319 = vpop.xlane.xlu0 %318
  %320 = vadd.xlane.f32.xlu0 %v36
  %v321 = vpop.xlane.xlu0 %320
  %322 = vadd.xlane.f32.xlu0 %v37
  %v323 = vpop.xlane.xlu0 %322
  %324 = vadd.xlane.f32.xlu0 %v38
  %v325 = vpop.xlane.xlu0 %324
  %326 = vadd.xlane.f32.xlu0 %v39
  %v327 = vpop.xlane.xlu0 %326
  %v328 = vadd.f32 %v297, 2.0
  %v329 = vadd.f32 %v299, 2.0
  %v330 = vadd.f32 %v301, 2.0
  %v331 = vadd.f32 %v303, 2.0
  %v332 = vadd.f32 %v305, 2.0
  %v333 = vadd.f32 %v307, 2.0
  %v334 = vadd.f32 %v309, 2.0
  %v335 = vadd.f32 %v311, 2.0
  %v336 = vadd.f32 %v313, 2.0
  %v337 = vadd.f32 %v315, 2.0
  %v338 = vadd.f32 %v317, 2.0
  %v339 = vadd.f32 %v319, 2.0
  %v340 = vadd.f32 %v321, 2.0
  %v341 = vadd.f32 %v323, 2.0
  %v342 = vadd.f32 %v325, 2.0
  %v343 = vadd.f32 %v327, 2.0
  %v344 = vrsqrt.pop %v328
  %v345 = vrsqrt.pop %v329
  %v346 = vrsqrt.pop %v330
  %v347 = vrsqrt.pop %v331
  %v348 = vrsqrt.pop %v332
  %v349 = vrsqrt.pop %v333
  %v350 = vrsqrt.pop %v334
  %v351 = vrsqrt.pop %v335
  %v352 = vrsqrt.pop %v336
  %v353 = vrsqrt.pop %v337
  %v354 = vrsqrt.pop %v338
  %v355 = vrsqrt.pop %v339
  %v356 = vrsqrt.pop %v340
  %v357 = vrsqrt.pop %v341
  %v358 = vrsqrt.pop %v342
  %v359 = vrsqrt.pop %v343
  %v360 = vpack.c.bf16 %v256, %v255
  %v361 = vpack.c.bf16 %v258, %v257
  %v362 = vpack.c.bf16 %v260, %v259
  %v363 = vpack.c.bf16 %v262, %v261
  %v364 = vpack.c.bf16 %v264, %v263
  %v365 = vpack.c.bf16 %v266, %v265
  %v366 = vpack.c.bf16 %v268, %v267
  %v367 = vpack.c.bf16 %v270, %v269
  %v384 = vunpack.c.l.b16 %v279
  %v385 = vunpack.c.l.b16 %v280
  %v386 = vunpack.c.l.b16 %v281
  %v387 = vunpack.c.l.b16 %v282
  %v388 = vunpack.c.l.b16 %v283
  %v389 = vunpack.c.l.b16 %v284
  %v390 = vunpack.c.l.b16 %v285
  %v391 = vunpack.c.l.b16 %v286
  %v392 = vunpack.c.l.b16 %v287
  %v393 = vunpack.c.l.b16 %v288
  %v394 = vunpack.c.l.b16 %v289
  %v395 = vunpack.c.l.b16 %v290
  %v396 = vunpack.c.l.b16 %v291
  %v397 = vunpack.c.l.b16 %v292
  %v398 = vunpack.c.l.b16 %v293
  %v399 = vunpack.c.l.b16 %v294
  %v400 = vpack.c.b16 %v385, %v384
  %v401 = vpack.c.b16 %v387, %v386
  %v402 = vpack.c.b16 %v389, %v388
  %v403 = vpack.c.b16 %v391, %v390
  %v404 = vpack.c.b16 %v393, %v392
  %v405 = vpack.c.b16 %v395, %v394
  %v406 = vpack.c.b16 %v397, %v396
  %v407 = vpack.c.b16 %v399, %v398
  %416 = vmatprep.subr.bf16.mxu0 0
  %417 = vmatpush1.bf16.msra.mxu0 %v400
  %418 = vmatprep.subr.bf16.mxu0 0
  %419 = vmatpush1.bf16.msra.mxu0 %v401
  %420 = vmatprep.subr.bf16.mxu0 0
  %421 = vmatpush1.bf16.msra.mxu0 %v402
  %422 = vmatprep.subr.bf16.mxu0 0
  %423 = vmatpush1.bf16.msra.mxu0 %v403
  %424 = vmatprep.subr.bf16.mxu0 0
  %425 = vmatpush1.bf16.msra.mxu0 %v404
  %426 = vmatprep.subr.bf16.mxu0 0
  %427 = vmatpush1.bf16.msra.mxu0 %v405
  %428 = vmatprep.subr.bf16.mxu0 0
  %429 = vmatpush1.bf16.msra.mxu0 %v406
  %430 = vmatprep.subr.bf16.mxu0 0
  %431 = vmatpush1.bf16.msra.mxu0 %v407
  %432 = vmatprep.subr.bf16.mxu0 0
  %433 = vmatpush1.bf16.msra.mxu0 0
  %434 = vmatprep.subr.bf16.mxu0 0
  %435 = vmatpush1.bf16.msra.mxu0 0
  %436 = vmatprep.subr.bf16.mxu0 0
  %437 = vmatpush1.bf16.msra.mxu0 0
  %438 = vmatprep.subr.bf16.mxu0 0
  %439 = vmatpush1.bf16.msra.mxu0 0
  %440 = vmatprep.subr.bf16.mxu0 0
  %441 = vmatpush1.bf16.msra.mxu0 0
  %442 = vmatprep.subr.bf16.mxu0 0
  %443 = vmatpush1.bf16.msra.mxu0 0
  %444 = vmatprep.subr.bf16.mxu0 0
  %445 = vmatpush1.bf16.msra.mxu0 0
  %446 = vmatprep.subr.bf16.mxu0 0
  %447 = vmatpush1.bf16.msra.mxu0 0
  %448 = vmatprep.mubr.bf16.mxu0 0
  %449 = vmatmul.mubr.bf16.gmra.mrb[0].mxu0 %v360
  %v450 = vpop.f32.mrb[0].mxu0
  %v451 = vadd.f32 0.0, %v450
  %v452 = vpop.f32.mrb[0].mxu0
  %v453 = vpop.f32.mrb[0].mxu0
  %v454 = vadd.f32 0.0, %v453
  %v455 = vpop.f32.mrb[0].mxu0
  %456 = vmatprep.mubr.bf16.mxu0 0
  %457 = vmatmul.mubr.bf16.gmra.mrb[0].mxu0 %v361
  %v458 = vpop.f32.mrb[0].mxu0
  %v459 = vadd.f32 0.0, %v458
  %v460 = vpop.f32.mrb[0].mxu0
  %v461 = vpop.f32.mrb[0].mxu0
  %v462 = vadd.f32 0.0, %v461
  %v463 = vpop.f32.mrb[0].mxu0
  %464 = vmatprep.mubr.bf16.mxu0 0
  %465 = vmatmul.mubr.bf16.gmra.mrb[0].mxu0 %v362
  %v466 = vpop.f32.mrb[0].mxu0
  %v467 = vadd.f32 0.0, %v466
  %v468 = vpop.f32.mrb[0].mxu0
  %v469 = vpop.f32.mrb[0].mxu0
  %v470 = vadd.f32 0.0, %v469
  %v471 = vpop.f32.mrb[0].mxu0
  %472 = vmatprep.mubr.bf16.mxu0 0
  %473 = vmatmul.mubr.bf16.gmra.mrb[0].mxu0 %v363
  %v474 = vpop.f32.mrb[0].mxu0
  %v475 = vadd.f32 0.0, %v474
  %v476 = vpop.f32.mrb[0].mxu0
  %v477 = vpop.f32.mrb[0].mxu0
  %v478 = vadd.f32 0.0, %v477
  %v479 = vpop.f32.mrb[0].mxu0
  %480 = vmatprep.mubr.bf16.mxu0 0
  %481 = vmatmul.mubr.bf16.gmra.mrb[0].mxu0 %v364
  %v482 = vpop.f32.mrb[0].mxu0
  %v483 = vadd.f32 0.0, %v482
  %v484 = vpop.f32.mrb[0].mxu0
  %v485 = vpop.f32.mrb[0].mxu0
  %v486 = vadd.f32 0.0, %v485
  %v487 = vpop.f32.mrb[0].mxu0
  %488 = vmatprep.mubr.bf16.mxu0 0
  %489 = vmatmul.mubr.bf16.gmra.mrb[0].mxu0 %v365
  %v490 = vpop.f32.mrb[0].mxu0
  %v491 = vadd.f32 0.0, %v490
  %v492 = vpop.f32.mrb[0].mxu0
  %v493 = vpop.f32.mrb[0].mxu0
  %v494 = vadd.f32 0.0, %v493
  %v495 = vpop.f32.mrb[0].mxu0
  %496 = vmatprep.mubr.bf16.mxu0 0
  %497 = vmatmul.mubr.bf16.gmra.mrb[0].mxu0 %v366
  %v498 = vpop.f32.mrb[0].mxu0
  %v499 = vadd.f32 0.0, %v498
  %v500 = vpop.f32.mrb[0].mxu0
  %v501 = vpop.f32.mrb[0].mxu0
  %v502 = vadd.f32 0.0, %v501
  %v503 = vpop.f32.mrb[0].mxu0
  %504 = vmatprep.mubr.bf16.mxu0 0
  %505 = vmatmul.mubr.bf16.gmra.mrb[0].mxu0 %v367
  %v506 = vpop.f32.mrb[0].mxu0
  %v507 = vadd.f32 0.0, %v506
  %v508 = vpop.f32.mrb[0].mxu0
  %v509 = vpop.f32.mrb[0].mxu0
  %v510 = vadd.f32 0.0, %v509
  %v511 = vpop.f32.mrb[0].mxu0
  %512 = vdwg.mxu0
  %v513 = vmul.f32 %v344, %v451
  %v514 = vmul.f32 %v345, %v454
  %v515 = vmul.f32 %v346, %v459
  %v516 = vmul.f32 %v347, %v462
  %v517 = vmul.f32 %v348, %v467
  %v518 = vmul.f32 %v349, %v470
  %v519 = vmul.f32 %v350, %v475
  %v520 = vmul.f32 %v351, %v478
  %v521 = vmul.f32 %v352, %v483
  %v522 = vmul.f32 %v353, %v486
  %v523 = vmul.f32 %v354, %v491
  %v524 = vmul.f32 %v355, %v494
  %v525 = vmul.f32 %v356, %v499
  %v526 = vmul.f32 %v357, %v502
  %v527 = vmul.f32 %v358, %v507
  %v528 = vmul.f32 %v359, %v510
  %v529 = vpack.c.bf16 %v514, %v513
  %v530 = vpack.c.bf16 %v516, %v515
  %v531 = vpack.c.bf16 %v518, %v517
  %v532 = vpack.c.bf16 %v520, %v519
  %v533 = vpack.c.bf16 %v522, %v521
  %v534 = vpack.c.bf16 %v524, %v523
  %v535 = vpack.c.bf16 %v526, %v525
  %v536 = vpack.c.bf16 %v528, %v527
  %537 = vmatprep.subr.bf16.mxu0 0
  %538 = vmatpush1.bf16.msra.mxu0 %v529
  %539 = vmatprep.subr.bf16.mxu0 0
  %540 = vmatpush1.bf16.msra.mxu0 %v530
  %541 = vmatprep.subr.bf16.mxu0 0
  %542 = vmatpush1.bf16.msra.mxu0 %v531
  %543 = vmatprep.subr.bf16.mxu0 0
  %544 = vmatpush1.bf16.msra.mxu0 %v532
  %545 = vmatprep.subr.bf16.mxu0 0
  %546 = vmatpush1.bf16.msra.mxu0 %v533
  %547 = vmatprep.subr.bf16.mxu0 0
  %548 = vmatpush1.bf16.msra.mxu0 %v534
  %549 = vmatprep.subr.bf16.mxu0 0
  %550 = vmatpush1.bf16.msra.mxu0 %v535
  %551 = vmatprep.subr.bf16.mxu0 0
  %552 = vmatpush1.bf16.msra.mxu0 %v536
  %553 = vmatprep.subr.bf16.mxu0 0
  %554 = vmatpush1.bf16.msra.mxu0 0
  %555 = vmatprep.subr.bf16.mxu0 0
  %556 = vmatpush1.bf16.msra.mxu0 0
  %557 = vmatprep.subr.bf16.mxu0 0
  %558 = vmatpush1.bf16.msra.mxu0 0
  %559 = vmatprep.subr.bf16.mxu0 0
  %560 = vmatpush1.bf16.msra.mxu0 0
  %561 = vmatprep.subr.bf16.mxu0 0
  %562 = vmatpush1.bf16.msra.mxu0 0
  %563 = vmatprep.subr.bf16.mxu0 0
  %564 = vmatpush1.bf16.msra.mxu0 0
  %565 = vmatprep.subr.bf16.mxu0 0
  %566 = vmatpush1.bf16.msra.mxu0 0
  %567 = vmatprep.subr.bf16.mxu0 0
  %568 = vmatpush1.bf16.msra.mxu0 0
  %569 = vmatprep.mubr.bf16.mxu0 0
  %570 = vmatmul.mubr.bf16.gmra.mrb[0].mxu0 %v271
  %v571 = vpop.f32.mrb[0].mxu0
  %v572 = vadd.f32 0.0, %v571
  %v573 = vpop.f32.mrb[0].mxu0
  %v574 = vpop.f32.mrb[0].mxu0
  %v575 = vadd.f32 0.0, %v574
  %v576 = vpop.f32.mrb[0].mxu0
  %577 = vmatprep.mubr.bf16.mxu0 0
  %578 = vmatmul.mubr.bf16.gmra.mrb[0].mxu0 %v272
  %v579 = vpop.f32.mrb[0].mxu0
  %v580 = vadd.f32 0.0, %v579
  %v581 = vpop.f32.mrb[0].mxu0
  %v582 = vpop.f32.mrb[0].mxu0
  %v583 = vadd.f32 0.0, %v582
  %v584 = vpop.f32.mrb[0].mxu0
  %585 = vmatprep.mubr.bf16.mxu0 0
  %586 = vmatmul.mubr.bf16.gmra.mrb[0].mxu0 %v273
  %v587 = vpop.f32.mrb[0].mxu0
  %v588 = vadd.f32 0.0, %v587
  %v589 = vpop.f32.mrb[0].mxu0
  %v590 = vpop.f32.mrb[0].mxu0
  %v591 = vadd.f32 0.0, %v590
  %v592 = vpop.f32.mrb[0].mxu0
  %593 = vmatprep.mubr.bf16.mxu0 0
  %594 = vmatmul.mubr.bf16.gmra.mrb[0].mxu0 %v274
  %v595 = vpop.f32.mrb[0].mxu0
  %v596 = vadd.f32 0.0, %v595
  %v597 = vpop.f32.mrb[0].mxu0
  %v598 = vpop.f32.mrb[0].mxu0
  %v599 = vadd.f32 0.0, %v598
  %v600 = vpop.f32.mrb[0].mxu0
  %601 = vmatprep.mubr.bf16.mxu0 0
  %602 = vmatmul.mubr.bf16.gmra.mrb[0].mxu0 %v275
  %v603 = vpop.f32.mrb[0].mxu0
  %v604 = vadd.f32 0.0, %v603
  %v605 = vpop.f32.mrb[0].mxu0
  %v606 = vpop.f32.mrb[0].mxu0
  %v607 = vadd.f32 0.0, %v606
  %v608 = vpop.f32.mrb[0].mxu0
  %609 = vmatprep.mubr.bf16.mxu0 0
  %610 = vmatmul.mubr.bf16.gmra.mrb[0].mxu0 %v276
  %v611 = vpop.f32.mrb[0].mxu0
  %v612 = vadd.f32 0.0, %v611
  %v613 = vpop.f32.mrb[0].mxu0
  %v614 = vpop.f32.mrb[0].mxu0
  %v615 = vadd.f32 0.0, %v614
  %v616 = vpop.f32.mrb[0].mxu0
  %617 = vmatprep.mubr.bf16.mxu0 0
  %618 = vmatmul.mubr.bf16.gmra.mrb[0].mxu0 %v277
  %v619 = vpop.f32.mrb[0].mxu0
  %v620 = vadd.f32 0.0, %v619
  %v621 = vpop.f32.mrb[0].mxu0
  %v622 = vpop.f32.mrb[0].mxu0
  %v623 = vadd.f32 0.0, %v622
  %v624 = vpop.f32.mrb[0].mxu0
  %625 = vmatprep.mubr.bf16.mxu0 0
  %626 = vmatmul.mubr.bf16.gmra.mrb[0].mxu0 %v278
  %v627 = vpop.f32.mrb[0].mxu0
  %v628 = vadd.f32 0.0, %v627
  %v629 = vpop.f32.mrb[0].mxu0
  %v630 = vpop.f32.mrb[0].mxu0
  %v631 = vadd.f32 0.0, %v630
  %v632 = vpop.f32.mrb[0].mxu0
  %633 = vdwg.mxu0
  %v634 = vmul.f32 %v344, %v572
  %v635 = vmul.f32 %v345, %v575
  %v636 = vmul.f32 %v346, %v580
  %v637 = vmul.f32 %v347, %v583
  %v638 = vmul.f32 %v348, %v588
  %v639 = vmul.f32 %v349, %v591
  %v640 = vmul.f32 %v350, %v596
  %v641 = vmul.f32 %v351, %v599
  %v642 = vmul.f32 %v352, %v604
  %v643 = vmul.f32 %v353, %v607
  %v644 = vmul.f32 %v354, %v612
  %v645 = vmul.f32 %v355, %v615
  %v646 = vmul.f32 %v356, %v620
  %v647 = vmul.f32 %v357, %v623
  %v648 = vmul.f32 %v358, %v628
  %v649 = vmul.f32 %v359, %v631
  %v650 = vmul.f32 %v344, %v513
  %v651 = vmul.f32 %v345, %v514
  %v652 = vmul.f32 %v346, %v515
  %v653 = vmul.f32 %v347, %v516
  %v654 = vmul.f32 %v348, %v517
  %v655 = vmul.f32 %v349, %v518
  %v656 = vmul.f32 %v350, %v519
  %v657 = vmul.f32 %v351, %v520
  %v658 = vmul.f32 %v352, %v521
  %v659 = vmul.f32 %v353, %v522
  %v660 = vmul.f32 %v354, %v523
  %v661 = vmul.f32 %v355, %v524
  %v662 = vmul.f32 %v356, %v525
  %v663 = vmul.f32 %v357, %v526
  %v664 = vmul.f32 %v358, %v527
  %v665 = vmul.f32 %v359, %v528
  %v666 = vmul.f32 %v650, 2.0
  %v667 = vmul.f32 %v651, 2.0
  %v668 = vmul.f32 %v652, 2.0
  %v669 = vmul.f32 %v653, 2.0
  %v670 = vmul.f32 %v654, 2.0
  %v671 = vmul.f32 %v655, 2.0
  %v672 = vmul.f32 %v656, 2.0
  %v673 = vmul.f32 %v657, 2.0
  %v674 = vmul.f32 %v658, 2.0
  %v675 = vmul.f32 %v659, 2.0
  %v676 = vmul.f32 %v660, 2.0
  %v677 = vmul.f32 %v661, 2.0
  %v678 = vmul.f32 %v662, 2.0
  %v679 = vmul.f32 %v663, 2.0
  %v680 = vmul.f32 %v664, 2.0
  %v681 = vmul.f32 %v665, 2.0
  %v682 = vadd.f32 %v634, %v666
  %v683 = vadd.f32 %v635, %v667
  %v684 = vadd.f32 %v636, %v668
  %v685 = vadd.f32 %v637, %v669
  %v686 = vadd.f32 %v638, %v670
  %v687 = vadd.f32 %v639, %v671
  %v688 = vadd.f32 %v640, %v672
  %v689 = vadd.f32 %v641, %v673
  %v690 = vadd.f32 %v642, %v674
  %v691 = vadd.f32 %v643, %v675
  %v692 = vadd.f32 %v644, %v676
  %v693 = vadd.f32 %v645, %v677
  %v694 = vadd.f32 %v646, %v678
  %v695 = vadd.f32 %v647, %v679
  %v696 = vadd.f32 %v648, %v680
  %v697 = vadd.f32 %v649, %v681
  %v699 = vlaneseq
  %v700 = vshrl.u32 %v699, 7
  %v701 = vsub.s32 0, %v700
  %v702 = vrot.slane %v295, %v701
  %v704 = vadd.f32 %v682, %v702
  %v705 = vadd.f32 %v683, %v702
  %v706 = vadd.f32 %v684, %v702
  %v707 = vadd.f32 %v685, %v702
  %v708 = vadd.f32 %v686, %v702
  %v709 = vadd.f32 %v687, %v702
  %v710 = vadd.f32 %v688, %v702
  %v711 = vadd.f32 %v689, %v702
  %v712 = vadd.f32 %v690, %v702
  %v713 = vadd.f32 %v691, %v702
  %v714 = vadd.f32 %v692, %v702
  %v715 = vadd.f32 %v693, %v702
  %v716 = vadd.f32 %v694, %v702
  %v717 = vadd.f32 %v695, %v702
  %v718 = vadd.f32 %v696, %v702
  %v719 = vadd.f32 %v697, %v702
  %720 = vst [vmem:[%s6] sm:$0xff] %v704
  %721 = vst [vmem:[%s6 + $0x8] sm:$0xff] %v705
  %722 = vst [vmem:[%s6 + $0x10] sm:$0xff] %v706
  %723 = vst [vmem:[%s6 + $0x18] sm:$0xff] %v707
  %724 = vst [vmem:[%s6 + $0x20] sm:$0xff] %v708
  %725 = vst [vmem:[%s6 + $0x28] sm:$0xff] %v709
  %726 = vst [vmem:[%s6 + $0x30] sm:$0xff] %v710
  %727 = vst [vmem:[%s6 + $0x38] sm:$0xff] %v711
  %728 = vst [vmem:[%s6 + $0x40] sm:$0xff] %v712
  %729 = vst [vmem:[%s6 + $0x48] sm:$0xff] %v713
  %730 = vst [vmem:[%s6 + $0x50] sm:$0xff] %v714
  %731 = vst [vmem:[%s6 + $0x58] sm:$0xff] %v715
  %732 = vst [vmem:[%s6 + $0x60] sm:$0xff] %v716
  %733 = vst [vmem:[%s6 + $0x68] sm:$0xff] %v717
  %734 = vst [vmem:[%s6 + $0x70] sm:$0xff] %v718
  %735 = vst [vmem:[%s6 + $0x78] sm:$0xff] %v719
  // Predicated region
  $region26: #{graph_unet_forward.9} parent=0 // pred_check
    _
  $region27: #{graph_unet_forward.9} parent=0 // pred_check_branch
    %737 = sbr.rel (0) target = $region29
  $region28: #{graph_unet_forward.9} parent=0 // pred_region
    _
  $region29: #{graph_unet_forward.9} parent=0 // pred_fallthru
    _
  // Predicated region
  $region30: #{graph_unet_forward.9} parent=0 // pred_check
    _
  $region31: #{graph_unet_forward.9} parent=0 // pred_check_branch
    %739 = sbr.rel (0) target = $region33
  $region32: #{graph_unet_forward.9} parent=0 // pred_region
    _
  $region33: #{graph_unet_forward.9} parent=0 // pred_fallthru
    _

</llo_original>
